<compile_context>
chip_gen: v5e
topology: v5e:2x2
jax: 0.10.0
libtpu: 0.0.40
codegen_flags: <defaults>
</compile_context>

<pallas_src>
import functools

import jax
import jax.numpy as jnp
from jax.experimental import pallas as pl
from jax.experimental.pallas import tpu as pltpu

LANE = 128  # TPU lane width; channel axes are padded up to a multiple of this.


# --------------------------------------------------------------------------
# In-kernel helpers
# --------------------------------------------------------------------------
def _replicate_pad_into(pad_ref, img, H, W):
    """Write replicate-padded img (H, W, C) into the halo scratch (H+2, W+2, C)."""
    pad_ref[1:H + 1, 1:W + 1, :] = img                    # interior
    pad_ref[0:1, 1:W + 1, :] = img[0:1]                   # top edge
    pad_ref[H + 1:H + 2, 1:W + 1, :] = img[H - 1:H]       # bottom edge
    # left / right columns (also fills the four corners)
    pad_ref[:, 0:1, :] = pad_ref[:, 1:2, :]
    pad_ref[:, W + 1:W + 2, :] = pad_ref[:, W:W + 1, :]


def _im2col(pad_ref, H, W, C):
    """(H+2, W+2, C) halo buffer -> (H*W, 9*C) patch matrix (ky-major, kx, c)."""
    xp = pad_ref[...]
    cols = [xp[ky:ky + H, kx:kx + W, :] for ky in range(3) for kx in range(3)]
    # lane-dim concat of 128-aligned pieces, then a trivial leading-dim collapse
    return jnp.concatenate(cols, axis=-1).reshape(H * W, 9 * C)


def fused_block_kernel(x_ref, w1_ref, b1_ref, w2_ref, b2_ref,
                       o_ref, pad_ref, *, H, W, neg_slope):
    C = o_ref.shape[-1]  # lane-padded channel count

    # ---- layer 1: conv3x3 (replicate pad, BN-scale folded in W) + bias + LReLU
    x = x_ref[0].astype(jnp.float32).reshape(H, W, C)
    _replicate_pad_into(pad_ref, x, H, W)
    p1 = _im2col(pad_ref, H, W, C)                               # (H*W, 9*C)
    y = jnp.dot(p1, w1_ref[...], preferred_element_type=jnp.float32)
    y = y + b1_ref[0]
    y = jnp.maximum(y, neg_slope * y)                            # LeakyReLU(0.2)

    # ---- layer 2: conv3x3 (replicate pad, BN-scale folded in W) + bias + LReLU
    _replicate_pad_into(pad_ref, y.reshape(H, W, C), H, W)
    p2 = _im2col(pad_ref, H, W, C)
    z = jnp.dot(p2, w2_ref[...], preferred_element_type=jnp.float32)
    z = z + b2_ref[0]
    z = jnp.maximum(z, neg_slope * z)

    # Dropout(p=0.5) is identity in eval mode.
    o_ref[0] = z.astype(o_ref.dtype)                             # lane-dense store


# --------------------------------------------------------------------------
# Wrapper: parameter packing + pallas_call
# --------------------------------------------------------------------------
def _round_up(x, m):
    return (x + m - 1) // m * m


def pack_weight(w_hwio, cin_pad, cout_pad):
    """HWIO conv weight, zero-padded on channels, reshaped to (9*cin_pad, cout_pad)."""
    kh, kw, cin, cout = w_hwio.shape
    w = jnp.zeros((kh, kw, cin_pad, cout_pad), jnp.float32)
    w = w.at[:, :, :cin, :cout].set(w_hwio)
    return w.reshape(kh * kw * cin_pad, cout_pad)


def pack_bias(bias, cpad):
    c = bias.shape[-1]
    return jnp.zeros((1, cpad), jnp.float32).at[:, :c].set(bias.reshape(1, -1))


def pack_params(w1, s1, b1, w2, s2, b2, cin, cout):
    """Fold BN scale into conv weight columns; zero-pad channel axes to LANE."""
    C = _round_up(max(cin, cout), LANE)
    w1s = w1 * s1.reshape(1, 1, 1, -1)     # HWIO, scale on output channels
    w2s = w2 * s2.reshape(1, 1, 1, -1)
    return (pack_weight(w1s, C, C), pack_bias(b1, C),
            pack_weight(w2s, C, C), pack_bias(b2, C)), C


def unet_conv_block(x_nchw, packed, *, cout):
    """UNetConvBlock forward (eval semantics: BN running stats, Dropout identity)."""
    w1m, b1, w2m, b2 = packed
    N, cin, H, W = x_nchw.shape
    C = w1m.shape[-1]
    assert W % 8 == 0, "kernel assumes W is a multiple of the 8-row sublane tile"

    # NCHW -> NHWC, zero-pad channels to the lane width, flatten spatial dims.
    x = jnp.transpose(x_nchw, (0, 2, 3, 1))
    x = jnp.zeros((N, H, W, C), x.dtype).at[..., :cin].set(x)
    x = x.reshape(N, H * W, C)

    kernel = functools.partial(fused_block_kernel, H=H, W=W, neg_slope=0.2)
    out = pl.pallas_call(
        kernel,
        out_shape=jax.ShapeDtypeStruct((N, H * W, C), x.dtype),
        grid_spec=pltpu.PrefetchScalarGridSpec(
            num_scalar_prefetch=0,
            grid=(N,),
            in_specs=[
                pl.BlockSpec((1, H * W, C), lambda n: (n, 0, 0)),
                pl.BlockSpec(w1m.shape, lambda n: (0, 0)),
                pl.BlockSpec(b1.shape, lambda n: (0, 0)),
                pl.BlockSpec(w2m.shape, lambda n: (0, 0)),
                pl.BlockSpec(b2.shape, lambda n: (0, 0)),
            ],
            out_specs=pl.BlockSpec((1, H * W, C), lambda n: (n, 0, 0)),
            scratch_shapes=[pltpu.VMEM((H + 2, W + 2, C), jnp.float32)],
        ),
        compiler_params=pltpu.CompilerParams(
            dimension_semantics=("parallel",)),
    )(x, w1m, b1, w2m, b2)

    out = out.reshape(N, H, W, C)[..., :cout]
    return jnp.transpose(out, (0, 3, 1, 2))  # back to NCHW


# --------------------------------------------------------------------------
# Parameter construction (deterministic; mirrors nn.Conv2d / BatchNorm2d init)
# --------------------------------------------------------------------------
def make_conv_params(key, cin, cout):
    k_w, k_b = jax.random.split(key)
    fan_in = cin * 3 * 3
    w_oihw = jax.random.normal(k_w, (cout, cin, 3, 3), jnp.float32) * jnp.sqrt(2.0 / fan_in)
    bound = 1.0 / jnp.sqrt(fan_in)
    b = jax.random.uniform(k_b, (cout,), jnp.float32, -bound, bound)
    w_hwio = jnp.transpose(w_oihw, (2, 3, 1, 0))  # OIHW -> HWIO
    return w_hwio, b


def make_bn_params(key, c):
    k1, k2, k3 = jax.random.split(key, 3)
    gamma = 1.0 + 0.1 * jax.random.normal(k1, (c,), jnp.float32)
    beta = 0.1 * jax.random.normal(k2, (c,), jnp.float32)
    running_mean = 0.1 * jax.random.normal(k3, (c,), jnp.float32)
    running_var = jnp.ones((c,), jnp.float32)
    return gamma, beta, running_mean, running_var


def fold_bn(conv_bias, gamma, beta, mean, var, eps=1e-5):
    scale = gamma / jnp.sqrt(var + eps)
    bias = beta + scale * (conv_bias - mean)
    return scale, bias


# --------------------------------------------------------------------------
# Pure-JAX reference (for correctness check; applies scale/bias unfused)
# --------------------------------------------------------------------------
def ref_conv_bn_lrelu(x_nhwc, w_hwio, scale, bias, neg_slope=0.2):
    x_pad = jnp.pad(x_nhwc, ((0, 0), (1, 1), (1, 1), (0, 0)), mode="edge")
    y = jax.lax.conv_general_dilated(
        x_pad, w_hwio, (1, 1), "VALID",
        dimension_numbers=("NHWC", "HWIO", "NHWC"))
    y = y * scale.reshape(1, 1, 1, -1) + bias.reshape(1, 1, 1, -1)
    return jnp.where(y > 0, y, neg_slope * y)


if __name__ == "__main__":
    N, Cin, Cout, H, W = 2, 4, 8, 16, 16

    root = jax.random.PRNGKey(0)
    kx, kc1, kc2, kb1, kb2 = jax.random.split(root, 5)

    x = jax.random.normal(kx, (N, Cin, H, W), jnp.float32)

    w1, cb1 = make_conv_params(kc1, Cin, Cout)
    w2, cb2 = make_conv_params(kc2, Cout, Cout)
    g1, be1, m1, v1 = make_bn_params(kb1, Cout)
    g2, be2, m2, v2 = make_bn_params(kb2, Cout)
    s1, b1 = fold_bn(cb1, g1, be1, m1, v1)
    s2, b2 = fold_bn(cb2, g2, be2, m2, v2)

    packed, C = pack_params(w1, s1, b1, w2, s2, b2, Cin, Cout)

    fwd = jax.jit(functools.partial(unet_conv_block, cout=Cout))
    out = jax.block_until_ready(fwd(x, packed))

    # reference check (unpadded params, XLA conv, unfused scale/bias)
    x_nhwc = jnp.transpose(x, (0, 2, 3, 1))
    r = ref_conv_bn_lrelu(x_nhwc, w1, s1, b1)
    r = ref_conv_bn_lrelu(r, w2, s2, b2)
    ref = jnp.transpose(r, (0, 3, 1, 2))

    assert out.shape == (N, Cout, H, W), out.shape
    err = float(jnp.max(jnp.abs(out - ref)))
    assert jnp.allclose(out, ref, atol=1e-4, rtol=1e-4), err

    print("KERNEL_OK")
</pallas_src>

<mosaic_0001>
module attributes {stable_mosaic.version = 11 : i64} {
  func.func @fused_block_kernel(%arg0: i32, %arg1: memref<1x256x128xf32, #tpu.memory_space<vmem>>, %arg2: memref<1152x128xf32, #tpu.memory_space<vmem>>, %arg3: memref<1x128xf32, #tpu.memory_space<vmem>>, %arg4: memref<1152x128xf32, #tpu.memory_space<vmem>>, %arg5: memref<1x128xf32, #tpu.memory_space<vmem>>, %arg6: memref<1x256x128xf32, #tpu.memory_space<vmem>>, %arg7: memref<18x18x128xf32, #tpu.memory_space<vmem>>) attributes {dimension_semantics = [#tpu.dimension_semantics<parallel>], iteration_bounds = array<i64: 2>, scalar_prefetch = 0 : i64, scratch_operands = 1 : i64, tpu.core_type = #tpu.core_type<tc>, window_params = [{transform_indices = @transform_0, window_bounds = array<i64: 1, 256, 128>}, {pipeline_mode = #tpu.pipeline_mode<synchronous>, transform_indices = @transform_1, window_bounds = array<i64: 1152, 128>}, {pipeline_mode = #tpu.pipeline_mode<synchronous>, transform_indices = @transform_2, window_bounds = array<i64: 1, 128>}, {pipeline_mode = #tpu.pipeline_mode<synchronous>, transform_indices = @transform_3, window_bounds = array<i64: 1152, 128>}, {pipeline_mode = #tpu.pipeline_mode<synchronous>, transform_indices = @transform_4, window_bounds = array<i64: 1, 128>}, {transform_indices = @transform_5, window_bounds = array<i64: 1, 256, 128>}]} {
    %c0 = arith.constant 0 : index
    %c0_0 = arith.constant 0 : index
    %c0_1 = arith.constant 0 : index
    %0 = vector.load %arg1[%c0, %c0_0, %c0_1] : memref<1x256x128xf32, #tpu.memory_space<vmem>>, vector<1x256x128xf32>
    %1 = vector.shape_cast %0 : vector<1x256x128xf32> to vector<256x128xf32>
    %2 = vector.shape_cast %1 : vector<256x128xf32> to vector<16x16x128xf32>
    %c1 = arith.constant 1 : index
    %c1_2 = arith.constant 1 : index
    %c0_3 = arith.constant 0 : index
    %3 = vector.load %arg7[%c1, %c1_2, %c0_3] : memref<18x18x128xf32, #tpu.memory_space<vmem>>, vector<16x16x128xf32>
    tpu.vector_store %arg7[%c1, %c1_2, %c0_3], %2 {strides = array<i32>} : memref<18x18x128xf32, #tpu.memory_space<vmem>>, vector<16x16x128xf32>,
    %4 = vector.extract_strided_slice %2 {offsets = [0, 0, 0], sizes = [1, 16, 128], strides = [1, 1, 1]} : vector<16x16x128xf32> to vector<1x16x128xf32>
    %c0_4 = arith.constant 0 : index
    %c1_5 = arith.constant 1 : index
    %c0_6 = arith.constant 0 : index
    %5 = vector.load %arg7[%c0_4, %c1_5, %c0_6] : memref<18x18x128xf32, #tpu.memory_space<vmem>>, vector<1x16x128xf32>
    tpu.vector_store %arg7[%c0_4, %c1_5, %c0_6], %4 {strides = array<i32>} : memref<18x18x128xf32, #tpu.memory_space<vmem>>, vector<1x16x128xf32>,
    %6 = vector.extract_strided_slice %2 {offsets = [15, 0, 0], sizes = [1, 16, 128], strides = [1, 1, 1]} : vector<16x16x128xf32> to vector<1x16x128xf32>
    %c17 = arith.constant 17 : index
    %c1_7 = arith.constant 1 : index
    %c0_8 = arith.constant 0 : index
    %7 = vector.load %arg7[%c17, %c1_7, %c0_8] : memref<18x18x128xf32, #tpu.memory_space<vmem>>, vector<1x16x128xf32>
    tpu.vector_store %arg7[%c17, %c1_7, %c0_8], %6 {strides = array<i32>} : memref<18x18x128xf32, #tpu.memory_space<vmem>>, vector<1x16x128xf32>,
    %c0_9 = arith.constant 0 : index
    %c1_10 = arith.constant 1 : index
    %c0_11 = arith.constant 0 : index
    %8 = vector.load %arg7[%c0_9, %c1_10, %c0_11] : memref<18x18x128xf32, #tpu.memory_space<vmem>>, vector<18x1x128xf32>
    %c0_12 = arith.constant 0 : index
    %c0_13 = arith.constant 0 : index
    %c0_14 = arith.constant 0 : index
    %9 = vector.load %arg7[%c0_12, %c0_13, %c0_14] : memref<18x18x128xf32, #tpu.memory_space<vmem>>, vector<18x1x128xf32>
    tpu.vector_store %arg7[%c0_12, %c0_13, %c0_14], %8 {strides = array<i32>} : memref<18x18x128xf32, #tpu.memory_space<vmem>>, vector<18x1x128xf32>,
    %c0_15 = arith.constant 0 : index
    %c16 = arith.constant 16 : index
    %c0_16 = arith.constant 0 : index
    %10 = vector.load %arg7[%c0_15, %c16, %c0_16] : memref<18x18x128xf32, #tpu.memory_space<vmem>>, vector<18x1x128xf32>
    %c0_17 = arith.constant 0 : index
    %c17_18 = arith.constant 17 : index
    %c0_19 = arith.constant 0 : index
    %11 = vector.load %arg7[%c0_17, %c17_18, %c0_19] : memref<18x18x128xf32, #tpu.memory_space<vmem>>, vector<18x1x128xf32>
    tpu.vector_store %arg7[%c0_17, %c17_18, %c0_19], %10 {strides = array<i32>} : memref<18x18x128xf32, #tpu.memory_space<vmem>>, vector<18x1x128xf32>,
    %c0_20 = arith.constant 0 : index
    %c0_21 = arith.constant 0 : index
    %c0_22 = arith.constant 0 : index
    %12 = vector.load %arg7[%c0_20, %c0_21, %c0_22] : memref<18x18x128xf32, #tpu.memory_space<vmem>>, vector<18x18x128xf32>
    %13 = vector.extract_strided_slice %12 {offsets = [0, 0, 0], sizes = [16, 16, 128], strides = [1, 1, 1]} : vector<18x18x128xf32> to vector<16x16x128xf32>
    %14 = vector.extract_strided_slice %12 {offsets = [0, 1, 0], sizes = [16, 16, 128], strides = [1, 1, 1]} : vector<18x18x128xf32> to vector<16x16x128xf32>
    %15 = vector.extract_strided_slice %12 {offsets = [0, 2, 0], sizes = [16, 16, 128], strides = [1, 1, 1]} : vector<18x18x128xf32> to vector<16x16x128xf32>
    %16 = vector.extract_strided_slice %12 {offsets = [1, 0, 0], sizes = [16, 16, 128], strides = [1, 1, 1]} : vector<18x18x128xf32> to vector<16x16x128xf32>
    %17 = vector.extract_strided_slice %12 {offsets = [1, 1, 0], sizes = [16, 16, 128], strides = [1, 1, 1]} : vector<18x18x128xf32> to vector<16x16x128xf32>
    %18 = vector.extract_strided_slice %12 {offsets = [1, 2, 0], sizes = [16, 16, 128], strides = [1, 1, 1]} : vector<18x18x128xf32> to vector<16x16x128xf32>
    %19 = vector.extract_strided_slice %12 {offsets = [2, 0, 0], sizes = [16, 16, 128], strides = [1, 1, 1]} : vector<18x18x128xf32> to vector<16x16x128xf32>
    %20 = vector.extract_strided_slice %12 {offsets = [2, 1, 0], sizes = [16, 16, 128], strides = [1, 1, 1]} : vector<18x18x128xf32> to vector<16x16x128xf32>
    %21 = vector.extract_strided_slice %12 {offsets = [2, 2, 0], sizes = [16, 16, 128], strides = [1, 1, 1]} : vector<18x18x128xf32> to vector<16x16x128xf32>
    %22 = tpu.concatenate %13, %14, %15, %16, %17, %18, %19, %20, %21 in 2 : vector<16x16x128xf32>, vector<16x16x128xf32>, vector<16x16x128xf32>, vector<16x16x128xf32>, vector<16x16x128xf32>, vector<16x16x128xf32>, vector<16x16x128xf32>, vector<16x16x128xf32>, vector<16x16x128xf32> -> vector<16x16x1152xf32>
    %23 = vector.shape_cast %22 : vector<16x16x1152xf32> to vector<256x1152xf32>
    %c0_23 = arith.constant 0 : index
    %c0_24 = arith.constant 0 : index
    %24 = vector.load %arg2[%c0_23, %c0_24] : memref<1152x128xf32, #tpu.memory_space<vmem>>, vector<1152x128xf32>
    %cst = arith.constant dense<0.000000e+00> : vector<256x128xf32>
    %25 = tpu.matmul %23, %24, %cst {dimension_numbers = #tpu.dot_dimension_numbers<[1], [0], [0], [1], [0, 0, 1, 1], [], []>} : vector<256x1152xf32>, vector<1152x128xf32>, vector<256x128xf32> -> vector<256x128xf32>
    %c0_25 = arith.constant 0 : index
    %c0_26 = arith.constant 0 : index
    %26 = vector.load %arg3[%c0_25, %c0_26] : memref<1x128xf32, #tpu.memory_space<vmem>>, vector<1x128xf32>
    %27 = vector.shape_cast %26 : vector<1x128xf32> to vector<128xf32>
    %28 = vector.shape_cast %27 : vector<128xf32> to vector<1x128xf32>
    %29 = vector.broadcast %28 : vector<1x128xf32> to vector<256x128xf32>
    %30 = arith.addf %25, %29 : vector<256x128xf32>
    %cst_27 = arith.constant 2.000000e-01 : f32
    %31 = vector.broadcast %cst_27 : f32 to vector<256x128xf32>
    %32 = arith.mulf %31, %30 : vector<256x128xf32>
    %33 = arith.maximumf %30, %32 : vector<256x128xf32>
    %34 = vector.shape_cast %33 : vector<256x128xf32> to vector<16x16x128xf32>
    %c1_28 = arith.constant 1 : index
    %c1_29 = arith.constant 1 : index
    %c0_30 = arith.constant 0 : index
    %35 = vector.load %arg7[%c1_28, %c1_29, %c0_30] : memref<18x18x128xf32, #tpu.memory_space<vmem>>, vector<16x16x128xf32>
    tpu.vector_store %arg7[%c1_28, %c1_29, %c0_30], %34 {strides = array<i32>} : memref<18x18x128xf32, #tpu.memory_space<vmem>>, vector<16x16x128xf32>,
    %36 = vector.extract_strided_slice %34 {offsets = [0, 0, 0], sizes = [1, 16, 128], strides = [1, 1, 1]} : vector<16x16x128xf32> to vector<1x16x128xf32>
    %c0_31 = arith.constant 0 : index
    %c1_32 = arith.constant 1 : index
    %c0_33 = arith.constant 0 : index
    %37 = vector.load %arg7[%c0_31, %c1_32, %c0_33] : memref<18x18x128xf32, #tpu.memory_space<vmem>>, vector<1x16x128xf32>
    tpu.vector_store %arg7[%c0_31, %c1_32, %c0_33], %36 {strides = array<i32>} : memref<18x18x128xf32, #tpu.memory_space<vmem>>, vector<1x16x128xf32>,
    %38 = vector.extract_strided_slice %34 {offsets = [15, 0, 0], sizes = [1, 16, 128], strides = [1, 1, 1]} : vector<16x16x128xf32> to vector<1x16x128xf32>
    %c17_34 = arith.constant 17 : index
    %c1_35 = arith.constant 1 : index
    %c0_36 = arith.constant 0 : index
    %39 = vector.load %arg7[%c17_34, %c1_35, %c0_36] : memref<18x18x128xf32, #tpu.memory_space<vmem>>, vector<1x16x128xf32>
    tpu.vector_store %arg7[%c17_34, %c1_35, %c0_36], %38 {strides = array<i32>} : memref<18x18x128xf32, #tpu.memory_space<vmem>>, vector<1x16x128xf32>,
    %c0_37 = arith.constant 0 : index
    %c1_38 = arith.constant 1 : index
    %c0_39 = arith.constant 0 : index
    %40 = vector.load %arg7[%c0_37, %c1_38, %c0_39] : memref<18x18x128xf32, #tpu.memory_space<vmem>>, vector<18x1x128xf32>
    %c0_40 = arith.constant 0 : index
    %c0_41 = arith.constant 0 : index
    %c0_42 = arith.constant 0 : index
    %41 = vector.load %arg7[%c0_40, %c0_41, %c0_42] : memref<18x18x128xf32, #tpu.memory_space<vmem>>, vector<18x1x128xf32>
    tpu.vector_store %arg7[%c0_40, %c0_41, %c0_42], %40 {strides = array<i32>} : memref<18x18x128xf32, #tpu.memory_space<vmem>>, vector<18x1x128xf32>,
    %c0_43 = arith.constant 0 : index
    %c16_44 = arith.constant 16 : index
    %c0_45 = arith.constant 0 : index
    %42 = vector.load %arg7[%c0_43, %c16_44, %c0_45] : memref<18x18x128xf32, #tpu.memory_space<vmem>>, vector<18x1x128xf32>
    %c0_46 = arith.constant 0 : index
    %c17_47 = arith.constant 17 : index
    %c0_48 = arith.constant 0 : index
    %43 = vector.load %arg7[%c0_46, %c17_47, %c0_48] : memref<18x18x128xf32, #tpu.memory_space<vmem>>, vector<18x1x128xf32>
    tpu.vector_store %arg7[%c0_46, %c17_47, %c0_48], %42 {strides = array<i32>} : memref<18x18x128xf32, #tpu.memory_space<vmem>>, vector<18x1x128xf32>,
    %c0_49 = arith.constant 0 : index
    %c0_50 = arith.constant 0 : index
    %c0_51 = arith.constant 0 : index
    %44 = vector.load %arg7[%c0_49, %c0_50, %c0_51] : memref<18x18x128xf32, #tpu.memory_space<vmem>>, vector<18x18x128xf32>
    %45 = vector.extract_strided_slice %44 {offsets = [0, 0, 0], sizes = [16, 16, 128], strides = [1, 1, 1]} : vector<18x18x128xf32> to vector<16x16x128xf32>
    %46 = vector.extract_strided_slice %44 {offsets = [0, 1, 0], sizes = [16, 16, 128], strides = [1, 1, 1]} : vector<18x18x128xf32> to vector<16x16x128xf32>
    %47 = vector.extract_strided_slice %44 {offsets = [0, 2, 0], sizes = [16, 16, 128], strides = [1, 1, 1]} : vector<18x18x128xf32> to vector<16x16x128xf32>
    %48 = vector.extract_strided_slice %44 {offsets = [1, 0, 0], sizes = [16, 16, 128], strides = [1, 1, 1]} : vector<18x18x128xf32> to vector<16x16x128xf32>
    %49 = vector.extract_strided_slice %44 {offsets = [1, 1, 0], sizes = [16, 16, 128], strides = [1, 1, 1]} : vector<18x18x128xf32> to vector<16x16x128xf32>
    %50 = vector.extract_strided_slice %44 {offsets = [1, 2, 0], sizes = [16, 16, 128], strides = [1, 1, 1]} : vector<18x18x128xf32> to vector<16x16x128xf32>
    %51 = vector.extract_strided_slice %44 {offsets = [2, 0, 0], sizes = [16, 16, 128], strides = [1, 1, 1]} : vector<18x18x128xf32> to vector<16x16x128xf32>
    %52 = vector.extract_strided_slice %44 {offsets = [2, 1, 0], sizes = [16, 16, 128], strides = [1, 1, 1]} : vector<18x18x128xf32> to vector<16x16x128xf32>
    %53 = vector.extract_strided_slice %44 {offsets = [2, 2, 0], sizes = [16, 16, 128], strides = [1, 1, 1]} : vector<18x18x128xf32> to vector<16x16x128xf32>
    %54 = tpu.concatenate %45, %46, %47, %48, %49, %50, %51, %52, %53 in 2 : vector<16x16x128xf32>, vector<16x16x128xf32>, vector<16x16x128xf32>, vector<16x16x128xf32>, vector<16x16x128xf32>, vector<16x16x128xf32>, vector<16x16x128xf32>, vector<16x16x128xf32>, vector<16x16x128xf32> -> vector<16x16x1152xf32>
    %55 = vector.shape_cast %54 : vector<16x16x1152xf32> to vector<256x1152xf32>
    %c0_52 = arith.constant 0 : index
    %c0_53 = arith.constant 0 : index
    %56 = vector.load %arg4[%c0_52, %c0_53] : memref<1152x128xf32, #tpu.memory_space<vmem>>, vector<1152x128xf32>
    %cst_54 = arith.constant dense<0.000000e+00> : vector<256x128xf32>
    %57 = tpu.matmul %55, %56, %cst_54 {dimension_numbers = #tpu.dot_dimension_numbers<[1], [0], [0], [1], [0, 0, 1, 1], [], []>} : vector<256x1152xf32>, vector<1152x128xf32>, vector<256x128xf32> -> vector<256x128xf32>
    %c0_55 = arith.constant 0 : index
    %c0_56 = arith.constant 0 : index
    %58 = vector.load %arg5[%c0_55, %c0_56] : memref<1x128xf32, #tpu.memory_space<vmem>>, vector<1x128xf32>
    %59 = vector.shape_cast %58 : vector<1x128xf32> to vector<128xf32>
    %60 = vector.shape_cast %59 : vector<128xf32> to vector<1x128xf32>
    %61 = vector.broadcast %60 : vector<1x128xf32> to vector<256x128xf32>
    %62 = arith.addf %57, %61 : vector<256x128xf32>
    %cst_57 = arith.constant 2.000000e-01 : f32
    %63 = vector.broadcast %cst_57 : f32 to vector<256x128xf32>
    %64 = arith.mulf %63, %62 : vector<256x128xf32>
    %65 = arith.maximumf %62, %64 : vector<256x128xf32>
    %c0_58 = arith.constant 0 : index
    %c0_59 = arith.constant 0 : index
    %c0_60 = arith.constant 0 : index
    %66 = vector.load %arg6[%c0_58, %c0_59, %c0_60] : memref<1x256x128xf32, #tpu.memory_space<vmem>>, vector<1x256x128xf32>
    %67 = vector.shape_cast %66 : vector<1x256x128xf32> to vector<256x128xf32>
    %68 = vector.shape_cast %65 : vector<256x128xf32> to vector<1x256x128xf32>
    tpu.vector_store %arg6[%c0_58, %c0_59, %c0_60], %68 {strides = array<i32>} : memref<1x256x128xf32, #tpu.memory_space<vmem>>, vector<1x256x128xf32>,
    return
  }
  func.func @transform_0(%arg0: i32) -> (i32, i32, i32) {
    %c0_i32 = arith.constant 0 : i32
    %c0_i32_0 = arith.constant 0 : i32
    %c0_i32_1 = arith.constant 0 : i32
    return %arg0, %c0_i32, %c0_i32_0 : i32, i32, i32
  }
  func.func @transform_1(%arg0: i32) -> (i32, i32) {
    %c0_i32 = arith.constant 0 : i32
    %c0_i32_0 = arith.constant 0 : i32
    %c0_i32_1 = arith.constant 0 : i32
    return %c0_i32, %c0_i32_0 : i32, i32
  }
  func.func @transform_2(%arg0: i32) -> (i32, i32) {
    %c0_i32 = arith.constant 0 : i32
    %c0_i32_0 = arith.constant 0 : i32
    %c0_i32_1 = arith.constant 0 : i32
    return %c0_i32, %c0_i32_0 : i32, i32
  }
  func.func @transform_3(%arg0: i32) -> (i32, i32) {
    %c0_i32 = arith.constant 0 : i32
    %c0_i32_0 = arith.constant 0 : i32
    %c0_i32_1 = arith.constant 0 : i32
    return %c0_i32, %c0_i32_0 : i32, i32
  }
  func.func @transform_4(%arg0: i32) -> (i32, i32) {
    %c0_i32 = arith.constant 0 : i32
    %c0_i32_0 = arith.constant 0 : i32
    %c0_i32_1 = arith.constant 0 : i32
    return %c0_i32, %c0_i32_0 : i32, i32
  }
  func.func @transform_5(%arg0: i32) -> (i32, i32, i32) {
    %c0_i32 = arith.constant 0 : i32
    %c0_i32_0 = arith.constant 0 : i32
    %c0_i32_1 = arith.constant 0 : i32
    return %arg0, %c0_i32, %c0_i32_0 : i32, i32, i32
  }
}

</mosaic_0001>

<llo_original>
// kernel: unet_conv_block.1
$region0: #{unet_conv_block.1}
  #allocation0 [shape = 'u32[]', space=smem, size = 0x4, offset = 0x4, fixed_abs, tag = 'smem constant byte address 0x4 - core index']
  #allocation1 [shape = 'u32[72,128]{1,0:T(1,128)}', space=vmem, size = 0x9000, scoped, tag = 'internal scratch']
  #allocation2 [shape = 'f32[18,18,128]{2,1,0:T(8,128)}', space=vmem, size = 0x36000, scoped, tag = 'scratch operand']
  %s0 = inlined_call_operand.vmem [shape: f32[2,256,128], index: 0, kind: input, shape index: {}]
  %s1 = inlined_call_operand.vmem [shape: f32[1152,128], index: 1, kind: input, shape index: {}]
  %s2 = inlined_call_operand.vmem [shape: f32[1,128], index: 2, kind: input, shape index: {}]
  %s3 = inlined_call_operand.hbm [shape: f32[1152,128], index: 3, kind: input, shape index: {}]
  %s4 = inlined_call_operand.vmem [shape: f32[1,128], index: 4, kind: input, shape index: {}]
  %s5 = inlined_call_operand.vmem [shape: f32[2,256,128], index: 5, kind: output, shape index: {}]
  %s6 = sld [smem:[#allocation0]]
  $region57: #{unet_conv_block.1} parent=0
    _
  %s8 = ssub.s32 1, %s6
  %s9 = scalar_select 0, %s8, %s6
  $region1: #{unet_conv_block.1} parent=0
    #allocation3 [shape = 'u8[589824]{0}', space=vmem, size = 0x90000, scoped, tag = 'input window, operand 3, single buffered']
    #allocation4 [shape = 's32[2]{0}', space=sflag, size = 0x8, scoped, tag = 'scoped memory for unet_conv_block.1']
    %10 = vsyncpa [#allocation4], 0
    loop: start=0, step=1, limit=4
    $region2: #{unet_conv_block.1} parent=1 // loop_pre_header
      _
    $region3: #{unet_conv_block.1} parent=1 // loop_header
      %s12 = sphi 0, %s16
      %p13 = scmp.ge.s32.totalorder %s12, 4
      %s22 = sphi 0, %s24
      %s25 = sphi 0, %s22
      %s26 = sphi 0, %s25
      %s42 = sphi 0, %s26
      %s46 = sphi 0, %s46
      %s48 = sphi 0, %s46
      %s49 = sphi 0, %s48
      %s63 = sphi 0, %s49
      %s67 = sphi 0, %s67
      %s69 = sphi 0, %s67
      %s70 = sphi 0, %s69
      %s84 = sphi 0, %s70
      %s88 = sphi 0, %s88
      %s90 = sphi 0, %s88
      %s91 = sphi 0, %s90
      %s105 = sphi 0, %s91
      %s109 = sphi 0, %s109
      %s111 = sphi 0, %s109
      %s112 = sphi 0, %s111
      %s126 = sphi 0, %s112
      %s132 = sphi 0, %s134
      %s135 = sphi 0, %s132
      %s136 = sphi 0, %s135
      %s152 = sphi 0, %s136
    $region4: #{unet_conv_block.1} parent=1 // loop_header_branch
      %15 = sbr.rel (%p13) target = $region8
    $region5: #{unet_conv_block.1} parent=1 // loop_body
      %s17 = ssub.s32 %s12, 1
      %s18 = ssub.s32 %s12, 2
      %s19 = sadd.s32 %s12, 1
      %s20 = ssub.s32 %s12, %s19
      %p21 = scmp.eq.s32.totalorder %s20, 0
      %s23 = sadd.s32 %s22, 1
      %s24 = scalar_select %p21, %s22, %s23
      %p27 = pneg %p21
      %p28 = scmp.eq.s32.totalorder %s12, 1
      %p29 = por %p27, %p28
      %p30 = scmp.ne.s32.totalorder %s22, %s25
      %p31 = scmp.eq.s32.totalorder %s12, 0
      %p32 = por %p30, %p31
      %p33 = scmp.ne.s32.totalorder %s22, %s25
      %p34 = scmp.eq.s32.totalorder %s17, 1
      %p35 = por %p33, %p34
      %p36 = scmp.ne.s32.totalorder %s25, %s26
      %p37 = scmp.eq.s32.totalorder %s17, 0
      %p38 = por %p36, %p37
      %p39 = scmp.ne.s32.totalorder %s25, %s26
      %p40 = scmp.eq.s32.totalorder %s18, 1
      %p41 = por %p39, %p40
      %p43 = scmp.ne.s32.totalorder %s26, %s42
      %p44 = scmp.eq.s32.totalorder %s18, 0
      %p45 = por %p43, %p44
      %s47 = sadd.s32 %s46, 1
      %p50 = scmp.eq.s32.totalorder %s12, 1
      %p51 = scmp.ne.s32.totalorder %s46, %s48
      %p52 = scmp.eq.s32.totalorder %s12, 0
      %p53 = por %p51, %p52
      %p54 = scmp.ne.s32.totalorder %s46, %s48
      %p55 = scmp.eq.s32.totalorder %s17, 1
      %p56 = por %p54, %p55
      %p57 = scmp.ne.s32.totalorder %s48, %s49
      %p58 = scmp.eq.s32.totalorder %s17, 0
      %p59 = por %p57, %p58
      %p60 = scmp.ne.s32.totalorder %s48, %s49
      %p61 = scmp.eq.s32.totalorder %s18, 1
      %p62 = por %p60, %p61
      %p64 = scmp.ne.s32.totalorder %s49, %s63
      %p65 = scmp.eq.s32.totalorder %s18, 0
      %p66 = por %p64, %p65
      %s68 = sadd.s32 %s67, 1
      %p71 = scmp.eq.s32.totalorder %s12, 1
      %p72 = scmp.ne.s32.totalorder %s67, %s69
      %p73 = scmp.eq.s32.totalorder %s12, 0
      %p74 = por %p72, %p73
      %p75 = scmp.ne.s32.totalorder %s67, %s69
      %p76 = scmp.eq.s32.totalorder %s17, 1
      %p77 = por %p75, %p76
      %p78 = scmp.ne.s32.totalorder %s69, %s70
      %p79 = scmp.eq.s32.totalorder %s17, 0
      %p80 = por %p78, %p79
      %p81 = scmp.ne.s32.totalorder %s69, %s70
      %p82 = scmp.eq.s32.totalorder %s18, 1
      %p83 = por %p81, %p82
      %p85 = scmp.ne.s32.totalorder %s70, %s84
      %p86 = scmp.eq.s32.totalorder %s18, 0
      %p87 = por %p85, %p86
      %s89 = sadd.s32 %s88, 1
      %p92 = scmp.eq.s32.totalorder %s12, 1
      %p93 = scmp.ne.s32.totalorder %s88, %s90
      %p94 = scmp.eq.s32.totalorder %s12, 0
      %p95 = por %p93, %p94
      %p96 = scmp.ne.s32.totalorder %s88, %s90
      %p97 = scmp.eq.s32.totalorder %s17, 1
      %p98 = por %p96, %p97
      %p99 = scmp.ne.s32.totalorder %s90, %s91
      %p100 = scmp.eq.s32.totalorder %s17, 0
      %p101 = por %p99, %p100
      %p102 = scmp.ne.s32.totalorder %s90, %s91
      %p103 = scmp.eq.s32.totalorder %s18, 1
      %p104 = por %p102, %p103
      %p106 = scmp.ne.s32.totalorder %s91, %s105
      %p107 = scmp.eq.s32.totalorder %s18, 0
      %p108 = por %p106, %p107
      %s110 = sadd.s32 %s109, 1
      %p113 = scmp.eq.s32.totalorder %s12, 1
      %p114 = scmp.ne.s32.totalorder %s109, %s111
      %p115 = scmp.eq.s32.totalorder %s12, 0
      %p116 = por %p114, %p115
      %p117 = scmp.ne.s32.totalorder %s109, %s111
      %p118 = scmp.eq.s32.totalorder %s17, 1
      %p119 = por %p117, %p118
      %p120 = scmp.ne.s32.totalorder %s111, %s112
      %p121 = scmp.eq.s32.totalorder %s17, 0
      %p122 = por %p120, %p121
      %p123 = scmp.ne.s32.totalorder %s111, %s112
      %p124 = scmp.eq.s32.totalorder %s18, 1
      %p125 = por %p123, %p124
      %p127 = scmp.ne.s32.totalorder %s112, %s126
      %p128 = scmp.eq.s32.totalorder %s18, 0
      %p129 = por %p127, %p128
      %s130 = ssub.s32 %s12, %s19
      %p131 = scmp.eq.s32.totalorder %s130, 0
      %s133 = sadd.s32 %s132, 1
      %s134 = scalar_select %p131, %s132, %s133
      %p137 = pneg %p131
      %p138 = scmp.eq.s32.totalorder %s12, 1
      %p139 = por %p137, %p138
      %p140 = scmp.ne.s32.totalorder %s132, %s135
      %p141 = scmp.eq.s32.totalorder %s12, 0
      %p142 = por %p140, %p141
      %p143 = scmp.ne.s32.totalorder %s132, %s135
      %p144 = scmp.eq.s32.totalorder %s17, 1
      %p145 = por %p143, %p144
      %p146 = scmp.ne.s32.totalorder %s135, %s136
      %p147 = scmp.eq.s32.totalorder %s17, 0
      %p148 = por %p146, %p147
      %p149 = scmp.ne.s32.totalorder %s135, %s136
      %p150 = scmp.eq.s32.totalorder %s18, 1
      %p151 = por %p149, %p150
      %p153 = scmp.ne.s32.totalorder %s136, %s152
      %p154 = scmp.eq.s32.totalorder %s18, 0
      %p155 = por %p153, %p154
      %p156 = scmp.le.s32.totalorder 1, %s12
      %p157 = scmp.lt.s32.totalorder %s12, 3
      %p158 = pnand %p156, %p157
      %p159 = pneg %p158
      // Predicated region
      $region9: #{unet_conv_block.1} parent=5 // pred_check
        _
      $region10: #{unet_conv_block.1} parent=5 // pred_check_branch
        %161 = sbr.rel (%p158) target = $region12
      $region11: #{unet_conv_block.1} parent=5 // pred_region
        %s162 = ssub.s32 %s12, 1
        // Predicated region
        $region13: #{unet_conv_block.1} parent=11 // pred_check
          %p163 = pneg %p59
        $region14: #{unet_conv_block.1} parent=11 // pred_check_branch
          %165 = sbr.rel (%p163) target = $region16
        $region15: #{unet_conv_block.1} parent=11 // pred_region
          _
        $region16: #{unet_conv_block.1} parent=11 // pred_fallthru
          _
        // Predicated region
        $region17: #{unet_conv_block.1} parent=11 // pred_check
          %p166 = pneg %p80
        $region18: #{unet_conv_block.1} parent=11 // pred_check_branch
          %168 = sbr.rel (%p166) target = $region20
        $region19: #{unet_conv_block.1} parent=11 // pred_region
          _
        $region20: #{unet_conv_block.1} parent=11 // pred_fallthru
          _
        // Predicated region
        $region21: #{unet_conv_block.1} parent=11 // pred_check
          %p169 = pneg %p101
        $region22: #{unet_conv_block.1} parent=11 // pred_check_branch
          %171 = sbr.rel (%p169) target = $region24
        $region23: #{unet_conv_block.1} parent=11 // pred_region
          %173 = vsyncadd [#allocation4], 0
          %s174 = sshll.u32 %s3, 4
          %s175 = int_to_ptr.hbm [resolvable:$true] %s174
          %s176 = sshll.u32 [#allocation3], 4
          %s177 = int_to_ptr.vmem [resolvable:$true] %s176
          %182 = dma.hbm_to_vmem [thread:$0]  %s175, 18432, %s177, [#allocation4], 128, 128, 8
        $region24: #{unet_conv_block.1} parent=11 // pred_fallthru
          _
        // Predicated region
        $region25: #{unet_conv_block.1} parent=11 // pred_check
          %p183 = pneg %p122
        $region26: #{unet_conv_block.1} parent=11 // pred_check_branch
          %185 = sbr.rel (%p183) target = $region28
        $region27: #{unet_conv_block.1} parent=11 // pred_region
          _
        $region28: #{unet_conv_block.1} parent=11 // pred_fallthru
          _
      $region12: #{unet_conv_block.1} parent=5 // pred_fallthru
        _
      %p186 = scmp.lt.s32.totalorder %s12, 2
      // Predicated region
      $region29: #{unet_conv_block.1} parent=5 // pred_check
        %p187 = pneg %p186
      $region30: #{unet_conv_block.1} parent=5 // pred_check_branch
        %189 = sbr.rel (%p187) target = $region32
      $region31: #{unet_conv_block.1} parent=5 // pred_region
        // Predicated region
        $region33: #{unet_conv_block.1} parent=31 // pred_check
          %p190 = pneg %p32
        $region34: #{unet_conv_block.1} parent=31 // pred_check_branch
          %192 = sbr.rel (%p190) target = $region36
        $region35: #{unet_conv_block.1} parent=31 // pred_region
          %p193 = scmp.lt.s32.totalorder %s12, 1
          %s194 = scalar_select %p193, %s12, 1
          %s195 = smul.addr %s194, 32
          %s196 = smul.addr %s195, 8
          %s197 = scalar_lea.vmem %s0, %s196
        $region36: #{unet_conv_block.1} parent=31 // pred_fallthru
          _
      $region32: #{unet_conv_block.1} parent=5 // pred_fallthru
        _
      %p198 = scmp.le.s32.totalorder 1, %s12
      %p199 = scmp.lt.s32.totalorder %s12, 3
      %p200 = pnand %p198, %p199
      %p201 = pneg %p200
      // Predicated region
      $region37: #{unet_conv_block.1} parent=5 // pred_check
        _
      $region38: #{unet_conv_block.1} parent=5 // pred_check_branch
        %203 = sbr.rel (%p200) target = $region40
      $region39: #{unet_conv_block.1} parent=5 // pred_region
        %s204 = ssub.s32 %s12, 1
        // Predicated region
        $region41: #{unet_conv_block.1} parent=39 // pred_check
          %p205 = pneg %p101
        $region42: #{unet_conv_block.1} parent=39 // pred_check_branch
          %207 = sbr.rel (%p205) target = $region44
        $region43: #{unet_conv_block.1} parent=39 // pred_region
          %209 = dma.done [#allocation4], 18432
        $region44: #{unet_conv_block.1} parent=39 // pred_fallthru
          _
        %p210 = scmp.lt.s32.totalorder %s17, 1
        %s211 = scalar_select %p210, %s17, 1
        %s212 = smul.addr %s211, 32
        %s213 = smul.addr %s212, 8
        %s214 = scalar_lea.vmem %s0, %s213
        %p215 = pneg %p38
        %p216 = pneg %p35
        %p217 = pneg %p59
        %p218 = pneg %p56
        %p219 = pneg %p80
        %p220 = pneg %p77
        %p221 = pneg %p101
        %p222 = pneg %p98
        %p223 = pneg %p122
        %p224 = pneg %p119
        %p225 = pneg %p148
        %p226 = pneg %p145
        %p227 = scmp.lt.s32.totalorder %s17, 1
        %s228 = scalar_select %p227, %s17, 1
        %s229 = smul.addr %s228, 32
        %s230 = smul.addr %s229, 8
        %s231 = scalar_lea.vmem %s5, %s230
        %p232 = scmp.lt.s32.totalorder %s17, 1
        %s233 = scalar_select %p232, %s17, 1
        %s234 = smul.addr %s233, 32
        %s235 = smul.addr %s234, 8
        %s236 = scalar_lea.vmem %s0, %s235
        %p237 = scmp.lt.s32.totalorder %s17, 1
        %s238 = scalar_select %p237, %s17, 1
        %s239 = smul.addr %s238, 32
        %s240 = smul.addr %s239, 8
        %s241 = scalar_lea.vmem %s5, %s240
        %v242 = vld [vmem:[%s236] sm:$0xff]
        %v243 = vld [vmem:[%s236 + $0x8] sm:$0xff]
        %v244 = vld [vmem:[%s236 + $0x10] sm:$0xff]
        %v245 = vld [vmem:[%s236 + $0x18] sm:$0xff]
        %v246 = vld [vmem:[%s236 + $0x20] sm:$0xff]
        %v247 = vld [vmem:[%s236 + $0x28] sm:$0xff]
        %v248 = vld [vmem:[%s236 + $0x30] sm:$0xff]
        %v249 = vld [vmem:[%s236 + $0x38] sm:$0xff]
        %v250 = vld [vmem:[%s236 + $0x40] sm:$0xff]
        %v251 = vld [vmem:[%s236 + $0x48] sm:$0xff]
        %v252 = vld [vmem:[%s236 + $0x50] sm:$0xff]
        %v253 = vld [vmem:[%s236 + $0x58] sm:$0xff]
        %v254 = vld [vmem:[%s236 + $0x60] sm:$0xff]
        %v255 = vld [vmem:[%s236 + $0x68] sm:$0xff]
        %v256 = vld [vmem:[%s236 + $0x70] sm:$0xff]
        %v257 = vld [vmem:[%s236 + $0x78] sm:$0xff]
        %v258 = vld [vmem:[%s236 + $0x80] sm:$0xff]
        %v259 = vld [vmem:[%s236 + $0x88] sm:$0xff]
        %v260 = vld [vmem:[%s236 + $0x90] sm:$0xff]
        %v261 = vld [vmem:[%s236 + $0x98] sm:$0xff]
        %v262 = vld [vmem:[%s236 + $0xa0] sm:$0xff]
        %v263 = vld [vmem:[%s236 + $0xa8] sm:$0xff]
        %v264 = vld [vmem:[%s236 + $0xb0] sm:$0xff]
        %v265 = vld [vmem:[%s236 + $0xb8] sm:$0xff]
        %v266 = vld [vmem:[%s236 + $0xc0] sm:$0xff]
        %v267 = vld [vmem:[%s236 + $0xc8] sm:$0xff]
        %v268 = vld [vmem:[%s236 + $0xd0] sm:$0xff]
        %v269 = vld [vmem:[%s236 + $0xd8] sm:$0xff]
        %v270 = vld [vmem:[%s236 + $0xe0] sm:$0xff]
        %v271 = vld [vmem:[%s236 + $0xe8] sm:$0xff]
        %v272 = vld [vmem:[%s236 + $0xf0] sm:$0xff]
        %v273 = vld [vmem:[%s236 + $0xf8] sm:$0xff]
        %s274 = scalar_lea.vmem [#allocation2], 24
        %275 = vst [vmem:[%s274 + $0x1] sm:$0xff] %v242
        %276 = vst [vmem:[%s274 + $0x9] sm:$0xff] %v243
        %277 = vst [vmem:[%s274 + $0x19] sm:$0xff] %v244
        %278 = vst [vmem:[%s274 + $0x21] sm:$0xff] %v245
        %279 = vst [vmem:[%s274 + $0x31] sm:$0xff] %v246
        %280 = vst [vmem:[%s274 + $0x39] sm:$0xff] %v247
        %281 = vst [vmem:[%s274 + $0x49] sm:$0xff] %v248
        %282 = vst [vmem:[%s274 + $0x51] sm:$0xff] %v249
        %283 = vst [vmem:[%s274 + $0x61] sm:$0xff] %v250
        %284 = vst [vmem:[%s274 + $0x69] sm:$0xff] %v251
        %285 = vst [vmem:[%s274 + $0x79] sm:$0xff] %v252
        %286 = vst [vmem:[%s274 + $0x81] sm:$0xff] %v253
        %287 = vst [vmem:[%s274 + $0x91] sm:$0xff] %v254
        %288 = vst [vmem:[%s274 + $0x99] sm:$0xff] %v255
        %289 = vst [vmem:[%s274 + $0xa9] sm:$0xff] %v256
        %290 = vst [vmem:[%s274 + $0xb1] sm:$0xff] %v257
        %291 = vst [vmem:[%s274 + $0xc1] sm:$0xff] %v258
        %292 = vst [vmem:[%s274 + $0xc9] sm:$0xff] %v259
        %293 = vst [vmem:[%s274 + $0xd9] sm:$0xff] %v260
        %294 = vst [vmem:[%s274 + $0xe1] sm:$0xff] %v261
        %295 = vst [vmem:[%s274 + $0xf1] sm:$0xff] %v262
        %296 = vst [vmem:[%s274 + $0xf9] sm:$0xff] %v263
        %297 = vst [vmem:[%s274 + $0x109] sm:$0xff] %v264
        %298 = vst [vmem:[%s274 + $0x111] sm:$0xff] %v265
        %299 = vst [vmem:[%s274 + $0x121] sm:$0xff] %v266
        %300 = vst [vmem:[%s274 + $0x129] sm:$0xff] %v267
        %301 = vst [vmem:[%s274 + $0x139] sm:$0xff] %v268
        %302 = vst [vmem:[%s274 + $0x141] sm:$0xff] %v269
        %303 = vst [vmem:[%s274 + $0x151] sm:$0xff] %v270
        %304 = vst [vmem:[%s274 + $0x159] sm:$0xff] %v271
        %305 = vst [vmem:[%s274 + $0x169] sm:$0xff] %v272
        %306 = vst [vmem:[%s274 + $0x171] sm:$0xff] %v273
        %307 = vst [vmem:[#allocation2 + $0x1] sm:$0xff] %v242
        %308 = vst [vmem:[#allocation2 + $0x9] sm:$0xff] %v243
        %s309 = scalar_lea.vmem [#allocation2], 408
        %310 = vst [vmem:[%s309 + $0x1] sm:$0xff] %v272
        %311 = vst [vmem:[%s309 + $0x9] sm:$0xff] %v273
        %v312 = vld [vmem:[#allocation2 + $0x1] sm:$0x1]
        %v313 = vld [vmem:[#allocation2 + $0x19] sm:$0x1]
        %v314 = vld [vmem:[#allocation2 + $0x31] sm:$0x1]
        %v315 = vld [vmem:[#allocation2 + $0x49] sm:$0x1]
        %v316 = vld [vmem:[#allocation2 + $0x61] sm:$0x1]
        %v317 = vld [vmem:[#allocation2 + $0x79] sm:$0x1]
        %v318 = vld [vmem:[#allocation2 + $0x91] sm:$0x1]
        %v319 = vld [vmem:[#allocation2 + $0xa9] sm:$0x1]
        %v320 = vld [vmem:[#allocation2 + $0xc1] sm:$0x1]
        %v321 = vld [vmem:[#allocation2 + $0xd9] sm:$0x1]
        %v322 = vld [vmem:[#allocation2 + $0xf1] sm:$0x1]
        %v323 = vld [vmem:[#allocation2 + $0x109] sm:$0x1]
        %v324 = vld [vmem:[#allocation2 + $0x121] sm:$0x1]
        %v325 = vld [vmem:[#allocation2 + $0x139] sm:$0x1]
        %v326 = vld [vmem:[#allocation2 + $0x151] sm:$0x1]
        %v327 = vld [vmem:[#allocation2 + $0x169] sm:$0x1]
        %v328 = vld [vmem:[#allocation2 + $0x181] sm:$0x1]
        %v329 = vld [vmem:[#allocation2 + $0x199] sm:$0x1]
        %330 = vst [vmem:[#allocation2] sm:$0x1] %v312
        %331 = vst [vmem:[#allocation2 + $0x18] sm:$0x1] %v313
        %332 = vst [vmem:[#allocation2 + $0x30] sm:$0x1] %v314
        %333 = vst [vmem:[#allocation2 + $0x48] sm:$0x1] %v315
        %334 = vst [vmem:[#allocation2 + $0x60] sm:$0x1] %v316
        %335 = vst [vmem:[#allocation2 + $0x78] sm:$0x1] %v317
        %336 = vst [vmem:[#allocation2 + $0x90] sm:$0x1] %v318
        %337 = vst [vmem:[#allocation2 + $0xa8] sm:$0x1] %v319
        %338 = vst [vmem:[#allocation2 + $0xc0] sm:$0x1] %v320
        %339 = vst [vmem:[#allocation2 + $0xd8] sm:$0x1] %v321
        %340 = vst [vmem:[#allocation2 + $0xf0] sm:$0x1] %v322
        %341 = vst [vmem:[#allocation2 + $0x108] sm:$0x1] %v323
        %342 = vst [vmem:[#allocation2 + $0x120] sm:$0x1] %v324
        %343 = vst [vmem:[#allocation2 + $0x138] sm:$0x1] %v325
        %344 = vst [vmem:[#allocation2 + $0x150] sm:$0x1] %v326
        %345 = vst [vmem:[#allocation2 + $0x168] sm:$0x1] %v327
        %346 = vst [vmem:[#allocation2 + $0x180] sm:$0x1] %v328
        %347 = vst [vmem:[#allocation2 + $0x198] sm:$0x1] %v329
        %v348 = vld [vmem:[#allocation2 + $0x10] sm:$0x1]
        %v349 = vld [vmem:[#allocation2 + $0x28] sm:$0x1]
        %v350 = vld [vmem:[#allocation2 + $0x40] sm:$0x1]
        %v351 = vld [vmem:[#allocation2 + $0x58] sm:$0x1]
        %v352 = vld [vmem:[#allocation2 + $0x70] sm:$0x1]
        %v353 = vld [vmem:[#allocation2 + $0x88] sm:$0x1]
        %v354 = vld [vmem:[#allocation2 + $0xa0] sm:$0x1]
        %v355 = vld [vmem:[#allocation2 + $0xb8] sm:$0x1]
        %v356 = vld [vmem:[#allocation2 + $0xd0] sm:$0x1]
        %v357 = vld [vmem:[#allocation2 + $0xe8] sm:$0x1]
        %v358 = vld [vmem:[#allocation2 + $0x100] sm:$0x1]
        %v359 = vld [vmem:[#allocation2 + $0x118] sm:$0x1]
        %v360 = vld [vmem:[#allocation2 + $0x130] sm:$0x1]
        %v361 = vld [vmem:[#allocation2 + $0x148] sm:$0x1]
        %v362 = vld [vmem:[#allocation2 + $0x160] sm:$0x1]
        %v363 = vld [vmem:[#allocation2 + $0x178] sm:$0x1]
        %v364 = vld [vmem:[#allocation2 + $0x190] sm:$0x1]
        %v365 = vld [vmem:[#allocation2 + $0x1a8] sm:$0x1]
        %366 = vst [vmem:[#allocation2 + $0x11] sm:$0x1] %v348
        %367 = vst [vmem:[#allocation2 + $0x29] sm:$0x1] %v349
        %368 = vst [vmem:[#allocation2 + $0x41] sm:$0x1] %v350
        %369 = vst [vmem:[#allocation2 + $0x59] sm:$0x1] %v351
        %370 = vst [vmem:[#allocation2 + $0x71] sm:$0x1] %v352
        %371 = vst [vmem:[#allocation2 + $0x89] sm:$0x1] %v353
        %372 = vst [vmem:[#allocation2 + $0xa1] sm:$0x1] %v354
        %373 = vst [vmem:[#allocation2 + $0xb9] sm:$0x1] %v355
        %374 = vst [vmem:[#allocation2 + $0xd1] sm:$0x1] %v356
        %375 = vst [vmem:[#allocation2 + $0xe9] sm:$0x1] %v357
        %376 = vst [vmem:[#allocation2 + $0x101] sm:$0x1] %v358
        %377 = vst [vmem:[#allocation2 + $0x119] sm:$0x1] %v359
        %378 = vst [vmem:[#allocation2 + $0x131] sm:$0x1] %v360
        %379 = vst [vmem:[#allocation2 + $0x149] sm:$0x1] %v361
        %380 = vst [vmem:[#allocation2 + $0x161] sm:$0x1] %v362
        %381 = vst [vmem:[#allocation2 + $0x179] sm:$0x1] %v363
        %382 = vst [vmem:[#allocation2 + $0x191] sm:$0x1] %v364
        %383 = vst [vmem:[#allocation2 + $0x1a9] sm:$0x1] %v365
        %v384 = vld [vmem:[#allocation2] sm:$0xff]
        %v385 = vld [vmem:[#allocation2 + $0x8] sm:$0xff]
        %v386 = vld [vmem:[#allocation2 + $0x10] sm:$0x3]
        %v387 = vld [vmem:[#allocation2 + $0x18] sm:$0xff]
        %v388 = vld [vmem:[#allocation2 + $0x20] sm:$0xff]
        %v389 = vld [vmem:[#allocation2 + $0x28] sm:$0x3]
        %v390 = vld [vmem:[#allocation2 + $0x30] sm:$0xff]
        %v391 = vld [vmem:[#allocation2 + $0x38] sm:$0xff]
        %v392 = vld [vmem:[#allocation2 + $0x40] sm:$0x3]
        %v393 = vld [vmem:[#allocation2 + $0x48] sm:$0xff]
        %v394 = vld [vmem:[#allocation2 + $0x50] sm:$0xff]
        %v395 = vld [vmem:[#allocation2 + $0x58] sm:$0x3]
        %v396 = vld [vmem:[#allocation2 + $0x60] sm:$0xff]
        %v397 = vld [vmem:[#allocation2 + $0x68] sm:$0xff]
        %v398 = vld [vmem:[#allocation2 + $0x70] sm:$0x3]
        %v399 = vld [vmem:[#allocation2 + $0x78] sm:$0xff]
        %v400 = vld [vmem:[#allocation2 + $0x80] sm:$0xff]
        %v401 = vld [vmem:[#allocation2 + $0x88] sm:$0x3]
        %v402 = vld [vmem:[#allocation2 + $0x90] sm:$0xff]
        %v403 = vld [vmem:[#allocation2 + $0x98] sm:$0xff]
        %v404 = vld [vmem:[#allocation2 + $0xa0] sm:$0x3]
        %v405 = vld [vmem:[#allocation2 + $0xa8] sm:$0xff]
        %v406 = vld [vmem:[#allocation2 + $0xb0] sm:$0xff]
        %v407 = vld [vmem:[#allocation2 + $0xb8] sm:$0x3]
        %v408 = vld [vmem:[#allocation2 + $0xc0] sm:$0xff]
        %v409 = vld [vmem:[#allocation2 + $0xc8] sm:$0xff]
        %v410 = vld [vmem:[#allocation2 + $0xd0] sm:$0x3]
        %v411 = vld [vmem:[#allocation2 + $0xd8] sm:$0xff]
        %v412 = vld [vmem:[#allocation2 + $0xe0] sm:$0xff]
        %v413 = vld [vmem:[#allocation2 + $0xe8] sm:$0x3]
        %v414 = vld [vmem:[#allocation2 + $0xf0] sm:$0xff]
        %v415 = vld [vmem:[#allocation2 + $0xf8] sm:$0xff]
        %v416 = vld [vmem:[#allocation2 + $0x100] sm:$0x3]
        %v417 = vld [vmem:[#allocation2 + $0x108] sm:$0xff]
        %v418 = vld [vmem:[#allocation2 + $0x110] sm:$0xff]
        %v419 = vld [vmem:[#allocation2 + $0x118] sm:$0x3]
        %v420 = vld [vmem:[#allocation2 + $0x120] sm:$0xff]
        %v421 = vld [vmem:[#allocation2 + $0x128] sm:$0xff]
        %v422 = vld [vmem:[#allocation2 + $0x130] sm:$0x3]
        %v423 = vld [vmem:[#allocation2 + $0x138] sm:$0xff]
        %v424 = vld [vmem:[#allocation2 + $0x140] sm:$0xff]
        %v425 = vld [vmem:[#allocation2 + $0x148] sm:$0x3]
        %v426 = vld [vmem:[#allocation2 + $0x150] sm:$0xff]
        %v427 = vld [vmem:[#allocation2 + $0x158] sm:$0xff]
        %v428 = vld [vmem:[#allocation2 + $0x160] sm:$0x3]
        %v429 = vld [vmem:[#allocation2 + $0x168] sm:$0xff]
        %v430 = vld [vmem:[#allocation2 + $0x170] sm:$0xff]
        %v431 = vld [vmem:[#allocation2 + $0x178] sm:$0x3]
        %v432 = vld [vmem:[#allocation2 + $0x180] sm:$0xff]
        %v433 = vld [vmem:[#allocation2 + $0x188] sm:$0xff]
        %v434 = vld [vmem:[#allocation2 + $0x190] sm:$0x3]
        %v435 = vld [vmem:[#allocation2 + $0x198] sm:$0xff]
        %v436 = vld [vmem:[#allocation2 + $0x1a0] sm:$0xff]
        %v437 = vld [vmem:[#allocation2 + $0x1a8] sm:$0x3]
        %vm486 = vcmask 1046528
        %v487 = vrot.slane %v384, 1
        %v488 = vrot.slane %v385, 1
        %v489 = vsel %vm486, %v487, %v488
        %v490 = vrot.slane %v386, 1
        %v491 = vsel %vm486, %v488, %v490
        %v492 = vrot.slane %v387, 1
        %v493 = vrot.slane %v388, 1
        %v494 = vsel %vm486, %v492, %v493
        %v495 = vrot.slane %v389, 1
        %v496 = vsel %vm486, %v493, %v495
        %v497 = vrot.slane %v390, 1
        %v498 = vrot.slane %v391, 1
        %v499 = vsel %vm486, %v497, %v498
        %v500 = vrot.slane %v392, 1
        %v501 = vsel %vm486, %v498, %v500
        %v502 = vrot.slane %v393, 1
        %v503 = vrot.slane %v394, 1
        %v504 = vsel %vm486, %v502, %v503
        %v505 = vrot.slane %v395, 1
        %v506 = vsel %vm486, %v503, %v505
        %v507 = vrot.slane %v396, 1
        %v508 = vrot.slane %v397, 1
        %v509 = vsel %vm486, %v507, %v508
        %v510 = vrot.slane %v398, 1
        %v511 = vsel %vm486, %v508, %v510
        %v512 = vrot.slane %v399, 1
        %v513 = vrot.slane %v400, 1
        %v514 = vsel %vm486, %v512, %v513
        %v515 = vrot.slane %v401, 1
        %v516 = vsel %vm486, %v513, %v515
        %v517 = vrot.slane %v402, 1
        %v518 = vrot.slane %v403, 1
        %v519 = vsel %vm486, %v517, %v518
        %v520 = vrot.slane %v404, 1
        %v521 = vsel %vm486, %v518, %v520
        %v522 = vrot.slane %v405, 1
        %v523 = vrot.slane %v406, 1
        %v524 = vsel %vm486, %v522, %v523
        %v525 = vrot.slane %v407, 1
        %v526 = vsel %vm486, %v523, %v525
        %v527 = vrot.slane %v408, 1
        %v528 = vrot.slane %v409, 1
        %v529 = vsel %vm486, %v527, %v528
        %v530 = vrot.slane %v410, 1
        %v531 = vsel %vm486, %v528, %v530
        %v532 = vrot.slane %v411, 1
        %v533 = vrot.slane %v412, 1
        %v534 = vsel %vm486, %v532, %v533
        %v535 = vrot.slane %v413, 1
        %v536 = vsel %vm486, %v533, %v535
        %v537 = vrot.slane %v414, 1
        %v538 = vrot.slane %v415, 1
        %v539 = vsel %vm486, %v537, %v538
        %v540 = vrot.slane %v416, 1
        %v541 = vsel %vm486, %v538, %v540
        %v542 = vrot.slane %v417, 1
        %v543 = vrot.slane %v418, 1
        %v544 = vsel %vm486, %v542, %v543
        %v545 = vrot.slane %v419, 1
        %v546 = vsel %vm486, %v543, %v545
        %v547 = vrot.slane %v420, 1
        %v548 = vrot.slane %v421, 1
        %v549 = vsel %vm486, %v547, %v548
        %v550 = vrot.slane %v422, 1
        %v551 = vsel %vm486, %v548, %v550
        %v552 = vrot.slane %v423, 1
        %v553 = vrot.slane %v424, 1
        %v554 = vsel %vm486, %v552, %v553
        %v555 = vrot.slane %v425, 1
        %v556 = vsel %vm486, %v553, %v555
        %v557 = vrot.slane %v426, 1
        %v558 = vrot.slane %v427, 1
        %v559 = vsel %vm486, %v557, %v558
        %v560 = vrot.slane %v428, 1
        %v561 = vsel %vm486, %v558, %v560
        %v562 = vrot.slane %v429, 1
        %v563 = vrot.slane %v430, 1
        %v564 = vsel %vm486, %v562, %v563
        %v565 = vrot.slane %v431, 1
        %v566 = vsel %vm486, %v563, %v565
        %vm599 = vcmask 1045504
        %v600 = vrot.slane %v384, 2
        %v601 = vrot.slane %v385, 2
        %v602 = vsel %vm599, %v600, %v601
        %v603 = vrot.slane %v386, 2
        %v604 = vsel %vm599, %v601, %v603
        %v605 = vrot.slane %v387, 2
        %v606 = vrot.slane %v388, 2
        %v607 = vsel %vm599, %v605, %v606
        %v608 = vrot.slane %v389, 2
        %v609 = vsel %vm599, %v606, %v608
        %v610 = vrot.slane %v390, 2
        %v611 = vrot.slane %v391, 2
        %v612 = vsel %vm599, %v610, %v611
        %v613 = vrot.slane %v392, 2
        %v614 = vsel %vm599, %v611, %v613
        %v615 = vrot.slane %v393, 2
        %v616 = vrot.slane %v394, 2
        %v617 = vsel %vm599, %v615, %v616
        %v618 = vrot.slane %v395, 2
        %v619 = vsel %vm599, %v616, %v618
        %v620 = vrot.slane %v396, 2
        %v621 = vrot.slane %v397, 2
        %v622 = vsel %vm599, %v620, %v621
        %v623 = vrot.slane %v398, 2
        %v624 = vsel %vm599, %v621, %v623
        %v625 = vrot.slane %v399, 2
        %v626 = vrot.slane %v400, 2
        %v627 = vsel %vm599, %v625, %v626
        %v628 = vrot.slane %v401, 2
        %v629 = vsel %vm599, %v626, %v628
        %v630 = vrot.slane %v402, 2
        %v631 = vrot.slane %v403, 2
        %v632 = vsel %vm599, %v630, %v631
        %v633 = vrot.slane %v404, 2
        %v634 = vsel %vm599, %v631, %v633
        %v635 = vrot.slane %v405, 2
        %v636 = vrot.slane %v406, 2
        %v637 = vsel %vm599, %v635, %v636
        %v638 = vrot.slane %v407, 2
        %v639 = vsel %vm599, %v636, %v638
        %v640 = vrot.slane %v408, 2
        %v641 = vrot.slane %v409, 2
        %v642 = vsel %vm599, %v640, %v641
        %v643 = vrot.slane %v410, 2
        %v644 = vsel %vm599, %v641, %v643
        %v645 = vrot.slane %v411, 2
        %v646 = vrot.slane %v412, 2
        %v647 = vsel %vm599, %v645, %v646
        %v648 = vrot.slane %v413, 2
        %v649 = vsel %vm599, %v646, %v648
        %v650 = vrot.slane %v414, 2
        %v651 = vrot.slane %v415, 2
        %v652 = vsel %vm599, %v650, %v651
        %v653 = vrot.slane %v416, 2
        %v654 = vsel %vm599, %v651, %v653
        %v655 = vrot.slane %v417, 2
        %v656 = vrot.slane %v418, 2
        %v657 = vsel %vm599, %v655, %v656
        %v658 = vrot.slane %v419, 2
        %v659 = vsel %vm599, %v656, %v658
        %v660 = vrot.slane %v420, 2
        %v661 = vrot.slane %v421, 2
        %v662 = vsel %vm599, %v660, %v661
        %v663 = vrot.slane %v422, 2
        %v664 = vsel %vm599, %v661, %v663
        %v665 = vrot.slane %v423, 2
        %v666 = vrot.slane %v424, 2
        %v667 = vsel %vm599, %v665, %v666
        %v668 = vrot.slane %v425, 2
        %v669 = vsel %vm599, %v666, %v668
        %v670 = vrot.slane %v426, 2
        %v671 = vrot.slane %v427, 2
        %v672 = vsel %vm599, %v670, %v671
        %v673 = vrot.slane %v428, 2
        %v674 = vsel %vm599, %v671, %v673
        %v675 = vrot.slane %v429, 2
        %v676 = vrot.slane %v430, 2
        %v677 = vsel %vm599, %v675, %v676
        %v678 = vrot.slane %v431, 2
        %v679 = vsel %vm599, %v676, %v678
        %v715 = vrot.slane %v432, 1
        %v716 = vrot.slane %v433, 1
        %v717 = vsel %vm486, %v715, %v716
        %v718 = vrot.slane %v434, 1
        %v719 = vsel %vm486, %v716, %v718
        %v722 = vrot.slane %v432, 2
        %v723 = vrot.slane %v433, 2
        %v724 = vsel %vm599, %v722, %v723
        %v725 = vrot.slane %v434, 2
        %v726 = vsel %vm599, %v723, %v725
        %v732 = vrot.slane %v435, 1
        %v733 = vrot.slane %v436, 1
        %v734 = vsel %vm486, %v732, %v733
        %v735 = vrot.slane %v437, 1
        %v736 = vsel %vm486, %v733, %v735
        %v739 = vrot.slane %v435, 2
        %v740 = vrot.slane %v436, 2
        %v741 = vsel %vm599, %v739, %v740
        %v742 = vrot.slane %v437, 2
        %v743 = vsel %vm599, %v740, %v742
        %v746 = vld [vmem:[%s1] sm:$0xff]
        %v747 = vld [vmem:[%s1 + $0x8] sm:$0xff]
        %v748 = vld [vmem:[%s1 + $0x10] sm:$0xff]
        %v749 = vld [vmem:[%s1 + $0x18] sm:$0xff]
        %v750 = vld [vmem:[%s1 + $0x20] sm:$0xff]
        %v751 = vld [vmem:[%s1 + $0x28] sm:$0xff]
        %v752 = vld [vmem:[%s1 + $0x30] sm:$0xff]
        %v753 = vld [vmem:[%s1 + $0x38] sm:$0xff]
        %v754 = vld [vmem:[%s1 + $0x40] sm:$0xff]
        %v755 = vld [vmem:[%s1 + $0x48] sm:$0xff]
        %v756 = vld [vmem:[%s1 + $0x50] sm:$0xff]
        %v757 = vld [vmem:[%s1 + $0x58] sm:$0xff]
        %v758 = vld [vmem:[%s1 + $0x60] sm:$0xff]
        %v759 = vld [vmem:[%s1 + $0x68] sm:$0xff]
        %v760 = vld [vmem:[%s1 + $0x70] sm:$0xff]
        %v761 = vld [vmem:[%s1 + $0x78] sm:$0xff]
        %v762 = vld [vmem:[%s1 + $0x80] sm:$0xff]
        %v763 = vld [vmem:[%s1 + $0x88] sm:$0xff]
        %v764 = vld [vmem:[%s1 + $0x90] sm:$0xff]
        %v765 = vld [vmem:[%s1 + $0x98] sm:$0xff]
        %v766 = vld [vmem:[%s1 + $0xa0] sm:$0xff]
        %v767 = vld [vmem:[%s1 + $0xa8] sm:$0xff]
        %v768 = vld [vmem:[%s1 + $0xb0] sm:$0xff]
        %v769 = vld [vmem:[%s1 + $0xb8] sm:$0xff]
        %v770 = vld [vmem:[%s1 + $0xc0] sm:$0xff]
        %v771 = vld [vmem:[%s1 + $0xc8] sm:$0xff]
        %v772 = vld [vmem:[%s1 + $0xd0] sm:$0xff]
        %v773 = vld [vmem:[%s1 + $0xd8] sm:$0xff]
        %v774 = vld [vmem:[%s1 + $0xe0] sm:$0xff]
        %v775 = vld [vmem:[%s1 + $0xe8] sm:$0xff]
        %v776 = vld [vmem:[%s1 + $0xf0] sm:$0xff]
        %v777 = vld [vmem:[%s1 + $0xf8] sm:$0xff]
        %v778 = vld [vmem:[%s1 + $0x100] sm:$0xff]
        %v779 = vld [vmem:[%s1 + $0x108] sm:$0xff]
        %v780 = vld [vmem:[%s1 + $0x110] sm:$0xff]
        %v781 = vld [vmem:[%s1 + $0x118] sm:$0xff]
        %v782 = vld [vmem:[%s1 + $0x120] sm:$0xff]
        %v783 = vld [vmem:[%s1 + $0x128] sm:$0xff]
        %v784 = vld [vmem:[%s1 + $0x130] sm:$0xff]
        %v785 = vld [vmem:[%s1 + $0x138] sm:$0xff]
        %v786 = vld [vmem:[%s1 + $0x140] sm:$0xff]
        %v787 = vld [vmem:[%s1 + $0x148] sm:$0xff]
        %v788 = vld [vmem:[%s1 + $0x150] sm:$0xff]
        %v789 = vld [vmem:[%s1 + $0x158] sm:$0xff]
        %v790 = vld [vmem:[%s1 + $0x160] sm:$0xff]
        %v791 = vld [vmem:[%s1 + $0x168] sm:$0xff]
        %v792 = vld [vmem:[%s1 + $0x170] sm:$0xff]
        %v793 = vld [vmem:[%s1 + $0x178] sm:$0xff]
        %v794 = vld [vmem:[%s1 + $0x180] sm:$0xff]
        %v795 = vld [vmem:[%s1 + $0x188] sm:$0xff]
        %v796 = vld [vmem:[%s1 + $0x190] sm:$0xff]
        %v797 = vld [vmem:[%s1 + $0x198] sm:$0xff]
        %v798 = vld [vmem:[%s1 + $0x1a0] sm:$0xff]
        %v799 = vld [vmem:[%s1 + $0x1a8] sm:$0xff]
        %v800 = vld [vmem:[%s1 + $0x1b0] sm:$0xff]
        %v801 = vld [vmem:[%s1 + $0x1b8] sm:$0xff]
        %v802 = vld [vmem:[%s1 + $0x1c0] sm:$0xff]
        %v803 = vld [vmem:[%s1 + $0x1c8] sm:$0xff]
        %v804 = vld [vmem:[%s1 + $0x1d0] sm:$0xff]
        %v805 = vld [vmem:[%s1 + $0x1d8] sm:$0xff]
        %v806 = vld [vmem:[%s1 + $0x1e0] sm:$0xff]
        %v807 = vld [vmem:[%s1 + $0x1e8] sm:$0xff]
        %v808 = vld [vmem:[%s1 + $0x1f0] sm:$0xff]
        %v809 = vld [vmem:[%s1 + $0x1f8] sm:$0xff]
        %v810 = vld [vmem:[%s1 + $0x200] sm:$0xff]
        %v811 = vld [vmem:[%s1 + $0x208] sm:$0xff]
        %v812 = vld [vmem:[%s1 + $0x210] sm:$0xff]
        %v813 = vld [vmem:[%s1 + $0x218] sm:$0xff]
        %v814 = vld [vmem:[%s1 + $0x220] sm:$0xff]
        %v815 = vld [vmem:[%s1 + $0x228] sm:$0xff]
        %v816 = vld [vmem:[%s1 + $0x230] sm:$0xff]
        %v817 = vld [vmem:[%s1 + $0x238] sm:$0xff]
        %v818 = vld [vmem:[%s1 + $0x240] sm:$0xff]
        %v819 = vld [vmem:[%s1 + $0x248] sm:$0xff]
        %v820 = vld [vmem:[%s1 + $0x250] sm:$0xff]
        %v821 = vld [vmem:[%s1 + $0x258] sm:$0xff]
        %v822 = vld [vmem:[%s1 + $0x260] sm:$0xff]
        %v823 = vld [vmem:[%s1 + $0x268] sm:$0xff]
        %v824 = vld [vmem:[%s1 + $0x270] sm:$0xff]
        %v825 = vld [vmem:[%s1 + $0x278] sm:$0xff]
        %v826 = vld [vmem:[%s1 + $0x280] sm:$0xff]
        %v827 = vld [vmem:[%s1 + $0x288] sm:$0xff]
        %v828 = vld [vmem:[%s1 + $0x290] sm:$0xff]
        %v829 = vld [vmem:[%s1 + $0x298] sm:$0xff]
        %v830 = vld [vmem:[%s1 + $0x2a0] sm:$0xff]
        %v831 = vld [vmem:[%s1 + $0x2a8] sm:$0xff]
        %v832 = vld [vmem:[%s1 + $0x2b0] sm:$0xff]
        %v833 = vld [vmem:[%s1 + $0x2b8] sm:$0xff]
        %v834 = vld [vmem:[%s1 + $0x2c0] sm:$0xff]
        %v835 = vld [vmem:[%s1 + $0x2c8] sm:$0xff]
        %v836 = vld [vmem:[%s1 + $0x2d0] sm:$0xff]
        %v837 = vld [vmem:[%s1 + $0x2d8] sm:$0xff]
        %v838 = vld [vmem:[%s1 + $0x2e0] sm:$0xff]
        %v839 = vld [vmem:[%s1 + $0x2e8] sm:$0xff]
        %v840 = vld [vmem:[%s1 + $0x2f0] sm:$0xff]
        %v841 = vld [vmem:[%s1 + $0x2f8] sm:$0xff]
        %v842 = vld [vmem:[%s1 + $0x300] sm:$0xff]
        %v843 = vld [vmem:[%s1 + $0x308] sm:$0xff]
        %v844 = vld [vmem:[%s1 + $0x310] sm:$0xff]
        %v845 = vld [vmem:[%s1 + $0x318] sm:$0xff]
        %v846 = vld [vmem:[%s1 + $0x320] sm:$0xff]
        %v847 = vld [vmem:[%s1 + $0x328] sm:$0xff]
        %v848 = vld [vmem:[%s1 + $0x330] sm:$0xff]
        %v849 = vld [vmem:[%s1 + $0x338] sm:$0xff]
        %v850 = vld [vmem:[%s1 + $0x340] sm:$0xff]
        %v851 = vld [vmem:[%s1 + $0x348] sm:$0xff]
        %v852 = vld [vmem:[%s1 + $0x350] sm:$0xff]
        %v853 = vld [vmem:[%s1 + $0x358] sm:$0xff]
        %v854 = vld [vmem:[%s1 + $0x360] sm:$0xff]
        %v855 = vld [vmem:[%s1 + $0x368] sm:$0xff]
        %v856 = vld [vmem:[%s1 + $0x370] sm:$0xff]
        %v857 = vld [vmem:[%s1 + $0x378] sm:$0xff]
        %v858 = vld [vmem:[%s1 + $0x380] sm:$0xff]
        %v859 = vld [vmem:[%s1 + $0x388] sm:$0xff]
        %v860 = vld [vmem:[%s1 + $0x390] sm:$0xff]
        %v861 = vld [vmem:[%s1 + $0x398] sm:$0xff]
        %v862 = vld [vmem:[%s1 + $0x3a0] sm:$0xff]
        %v863 = vld [vmem:[%s1 + $0x3a8] sm:$0xff]
        %v864 = vld [vmem:[%s1 + $0x3b0] sm:$0xff]
        %v865 = vld [vmem:[%s1 + $0x3b8] sm:$0xff]
        %v866 = vld [vmem:[%s1 + $0x3c0] sm:$0xff]
        %v867 = vld [vmem:[%s1 + $0x3c8] sm:$0xff]
        %v868 = vld [vmem:[%s1 + $0x3d0] sm:$0xff]
        %v869 = vld [vmem:[%s1 + $0x3d8] sm:$0xff]
        %v870 = vld [vmem:[%s1 + $0x3e0] sm:$0xff]
        %v871 = vld [vmem:[%s1 + $0x3e8] sm:$0xff]
        %v872 = vld [vmem:[%s1 + $0x3f0] sm:$0xff]
        %v873 = vld [vmem:[%s1 + $0x3f8] sm:$0xff]
        %v874 = vld [vmem:[%s1 + $0x400] sm:$0xff]
        %v875 = vld [vmem:[%s1 + $0x408] sm:$0xff]
        %v876 = vld [vmem:[%s1 + $0x410] sm:$0xff]
        %v877 = vld [vmem:[%s1 + $0x418] sm:$0xff]
        %v878 = vld [vmem:[%s1 + $0x420] sm:$0xff]
        %v879 = vld [vmem:[%s1 + $0x428] sm:$0xff]
        %v880 = vld [vmem:[%s1 + $0x430] sm:$0xff]
        %v881 = vld [vmem:[%s1 + $0x438] sm:$0xff]
        %v882 = vld [vmem:[%s1 + $0x440] sm:$0xff]
        %v883 = vld [vmem:[%s1 + $0x448] sm:$0xff]
        %v884 = vld [vmem:[%s1 + $0x450] sm:$0xff]
        %v885 = vld [vmem:[%s1 + $0x458] sm:$0xff]
        %v886 = vld [vmem:[%s1 + $0x460] sm:$0xff]
        %v887 = vld [vmem:[%s1 + $0x468] sm:$0xff]
        %v888 = vld [vmem:[%s1 + $0x470] sm:$0xff]
        %v889 = vld [vmem:[%s1 + $0x478] sm:$0xff]
        %v890 = vld [vmem:[%s2] sm:$0x1]
        %v892 = vperm.slane %v890, 0
        %894 = vmatpush.msra.mxu0 %v761
        %895 = vmatpush.msra.mxu0 %v760
        %896 = vmatpush.msra.mxu0 %v759
        %897 = vmatpush.msra.mxu0 %v758
        %898 = vmatpush.msra.mxu0 %v757
        %899 = vmatpush.msra.mxu0 %v756
        %900 = vmatpush.msra.mxu0 %v755
        %901 = vmatpush.msra.mxu0 %v754
        %902 = vmatpush.msra.mxu0 %v753
        %903 = vmatpush.msra.mxu0 %v752
        %904 = vmatpush.msra.mxu0 %v751
        %905 = vmatpush.msra.mxu0 %v750
        %906 = vmatpush.msra.mxu0 %v749
        %907 = vmatpush.msra.mxu0 %v748
        %908 = vmatpush.msra.mxu0 %v747
        %909 = vmatpush.msra.mxu0 %v746
        %910 = vmatmul.f32.gmra.mxu0 %v384
        %v911 = vpop.f32.mrf.mxu0
        %v912 = vadd.f32 %v892, %v911
        %913 = vmatmul.f32.gmra.mxu0 %v385
        %v914 = vpop.f32.mrf.mxu0
        %v915 = vadd.f32 %v892, %v914
        %916 = vmatmul.f32.gmra.mxu0 %v387
        %v917 = vpop.f32.mrf.mxu0
        %v918 = vadd.f32 %v892, %v917
        %919 = vmatmul.f32.gmra.mxu0 %v388
        %v920 = vpop.f32.mrf.mxu0
        %v921 = vadd.f32 %v892, %v920
        %922 = vmatmul.f32.gmra.mxu0 %v390
        %v923 = vpop.f32.mrf.mxu0
        %v924 = vadd.f32 %v892, %v923
        %925 = vmatmul.f32.gmra.mxu0 %v391
        %v926 = vpop.f32.mrf.mxu0
        %v927 = vadd.f32 %v892, %v926
        %928 = vmatmul.f32.gmra.mxu0 %v393
        %v929 = vpop.f32.mrf.mxu0
        %v930 = vadd.f32 %v892, %v929
        %931 = vmatmul.f32.gmra.mxu0 %v394
        %v932 = vpop.f32.mrf.mxu0
        %v933 = vadd.f32 %v892, %v932
        %934 = vmatmul.f32.gmra.mxu0 %v396
        %v935 = vpop.f32.mrf.mxu0
        %v936 = vadd.f32 %v892, %v935
        %937 = vmatmul.f32.gmra.mxu0 %v397
        %v938 = vpop.f32.mrf.mxu0
        %v939 = vadd.f32 %v892, %v938
        %940 = vmatmul.f32.gmra.mxu0 %v399
        %v941 = vpop.f32.mrf.mxu0
        %v942 = vadd.f32 %v892, %v941
        %943 = vmatmul.f32.gmra.mxu0 %v400
        %v944 = vpop.f32.mrf.mxu0
        %v945 = vadd.f32 %v892, %v944
        %946 = vmatmul.f32.gmra.mxu0 %v402
        %v947 = vpop.f32.mrf.mxu0
        %v948 = vadd.f32 %v892, %v947
        %949 = vmatmul.f32.gmra.mxu0 %v403
        %v950 = vpop.f32.mrf.mxu0
        %v951 = vadd.f32 %v892, %v950
        %952 = vmatmul.f32.gmra.mxu0 %v405
        %v953 = vpop.f32.mrf.mxu0
        %v954 = vadd.f32 %v892, %v953
        %955 = vmatmul.f32.gmra.mxu0 %v406
        %v956 = vpop.f32.mrf.mxu0
        %v957 = vadd.f32 %v892, %v956
        %958 = vmatmul.f32.gmra.mxu0 %v408
        %v959 = vpop.f32.mrf.mxu0
        %v960 = vadd.f32 %v892, %v959
        %961 = vmatmul.f32.gmra.mxu0 %v409
        %v962 = vpop.f32.mrf.mxu0
        %v963 = vadd.f32 %v892, %v962
        %964 = vmatmul.f32.gmra.mxu0 %v411
        %v965 = vpop.f32.mrf.mxu0
        %v966 = vadd.f32 %v892, %v965
        %967 = vmatmul.f32.gmra.mxu0 %v412
        %v968 = vpop.f32.mrf.mxu0
        %v969 = vadd.f32 %v892, %v968
        %970 = vmatmul.f32.gmra.mxu0 %v414
        %v971 = vpop.f32.mrf.mxu0
        %v972 = vadd.f32 %v892, %v971
        %973 = vmatmul.f32.gmra.mxu0 %v415
        %v974 = vpop.f32.mrf.mxu0
        %v975 = vadd.f32 %v892, %v974
        %976 = vmatmul.f32.gmra.mxu0 %v417
        %v977 = vpop.f32.mrf.mxu0
        %v978 = vadd.f32 %v892, %v977
        %979 = vmatmul.f32.gmra.mxu0 %v418
        %v980 = vpop.f32.mrf.mxu0
        %v981 = vadd.f32 %v892, %v980
        %982 = vmatmul.f32.gmra.mxu0 %v420
        %v983 = vpop.f32.mrf.mxu0
        %v984 = vadd.f32 %v892, %v983
        %985 = vmatmul.f32.gmra.mxu0 %v421
        %v986 = vpop.f32.mrf.mxu0
        %v987 = vadd.f32 %v892, %v986
        %988 = vmatmul.f32.gmra.mxu0 %v423
        %v989 = vpop.f32.mrf.mxu0
        %v990 = vadd.f32 %v892, %v989
        %991 = vmatmul.f32.gmra.mxu0 %v424
        %v992 = vpop.f32.mrf.mxu0
        %v993 = vadd.f32 %v892, %v992
        %994 = vmatmul.f32.gmra.mxu0 %v426
        %v995 = vpop.f32.mrf.mxu0
        %v996 = vadd.f32 %v892, %v995
        %997 = vmatmul.f32.gmra.mxu0 %v427
        %v998 = vpop.f32.mrf.mxu0
        %v999 = vadd.f32 %v892, %v998
        %1000 = vmatmul.f32.gmra.mxu0 %v429
        %v1001 = vpop.f32.mrf.mxu0
        %v1002 = vadd.f32 %v892, %v1001
        %1003 = vmatmul.f32.gmra.mxu0 %v430
        %v1004 = vpop.f32.mrf.mxu0
        %v1005 = vadd.f32 %v892, %v1004
        %1006 = vdwg.mxu0
        %1007 = vmatpush.msra.mxu0 %v777
        %1008 = vmatpush.msra.mxu0 %v776
        %1009 = vmatpush.msra.mxu0 %v775
        %1010 = vmatpush.msra.mxu0 %v774
        %1011 = vmatpush.msra.mxu0 %v773
        %1012 = vmatpush.msra.mxu0 %v772
        %1013 = vmatpush.msra.mxu0 %v771
        %1014 = vmatpush.msra.mxu0 %v770
        %1015 = vmatpush.msra.mxu0 %v769
        %1016 = vmatpush.msra.mxu0 %v768
        %1017 = vmatpush.msra.mxu0 %v767
        %1018 = vmatpush.msra.mxu0 %v766
        %1019 = vmatpush.msra.mxu0 %v765
        %1020 = vmatpush.msra.mxu0 %v764
        %1021 = vmatpush.msra.mxu0 %v763
        %1022 = vmatpush.msra.mxu0 %v762
        %1023 = vmatmul.f32.gmra.mxu0 %v489
        %v1024 = vpop.f32.mrf.mxu0
        %v1025 = vadd.f32 %v912, %v1024
        %1026 = vmatmul.f32.gmra.mxu0 %v491
        %v1027 = vpop.f32.mrf.mxu0
        %v1028 = vadd.f32 %v915, %v1027
        %1029 = vmatmul.f32.gmra.mxu0 %v494
        %v1030 = vpop.f32.mrf.mxu0
        %v1031 = vadd.f32 %v918, %v1030
        %1032 = vmatmul.f32.gmra.mxu0 %v496
        %v1033 = vpop.f32.mrf.mxu0
        %v1034 = vadd.f32 %v921, %v1033
        %1035 = vmatmul.f32.gmra.mxu0 %v499
        %v1036 = vpop.f32.mrf.mxu0
        %v1037 = vadd.f32 %v924, %v1036
        %1038 = vmatmul.f32.gmra.mxu0 %v501
        %v1039 = vpop.f32.mrf.mxu0
        %v1040 = vadd.f32 %v927, %v1039
        %1041 = vmatmul.f32.gmra.mxu0 %v504
        %v1042 = vpop.f32.mrf.mxu0
        %v1043 = vadd.f32 %v930, %v1042
        %1044 = vmatmul.f32.gmra.mxu0 %v506
        %v1045 = vpop.f32.mrf.mxu0
        %v1046 = vadd.f32 %v933, %v1045
        %1047 = vmatmul.f32.gmra.mxu0 %v509
        %v1048 = vpop.f32.mrf.mxu0
        %v1049 = vadd.f32 %v936, %v1048
        %1050 = vmatmul.f32.gmra.mxu0 %v511
        %v1051 = vpop.f32.mrf.mxu0
        %v1052 = vadd.f32 %v939, %v1051
        %1053 = vmatmul.f32.gmra.mxu0 %v514
        %v1054 = vpop.f32.mrf.mxu0
        %v1055 = vadd.f32 %v942, %v1054
        %1056 = vmatmul.f32.gmra.mxu0 %v516
        %v1057 = vpop.f32.mrf.mxu0
        %v1058 = vadd.f32 %v945, %v1057
        %1059 = vmatmul.f32.gmra.mxu0 %v519
        %v1060 = vpop.f32.mrf.mxu0
        %v1061 = vadd.f32 %v948, %v1060
        %1062 = vmatmul.f32.gmra.mxu0 %v521
        %v1063 = vpop.f32.mrf.mxu0
        %v1064 = vadd.f32 %v951, %v1063
        %1065 = vmatmul.f32.gmra.mxu0 %v524
        %v1066 = vpop.f32.mrf.mxu0
        %v1067 = vadd.f32 %v954, %v1066
        %1068 = vmatmul.f32.gmra.mxu0 %v526
        %v1069 = vpop.f32.mrf.mxu0
        %v1070 = vadd.f32 %v957, %v1069
        %1071 = vmatmul.f32.gmra.mxu0 %v529
        %v1072 = vpop.f32.mrf.mxu0
        %v1073 = vadd.f32 %v960, %v1072
        %1074 = vmatmul.f32.gmra.mxu0 %v531
        %v1075 = vpop.f32.mrf.mxu0
        %v1076 = vadd.f32 %v963, %v1075
        %1077 = vmatmul.f32.gmra.mxu0 %v534
        %v1078 = vpop.f32.mrf.mxu0
        %v1079 = vadd.f32 %v966, %v1078
        %1080 = vmatmul.f32.gmra.mxu0 %v536
        %v1081 = vpop.f32.mrf.mxu0
        %v1082 = vadd.f32 %v969, %v1081
        %1083 = vmatmul.f32.gmra.mxu0 %v539
        %v1084 = vpop.f32.mrf.mxu0
        %v1085 = vadd.f32 %v972, %v1084
        %1086 = vmatmul.f32.gmra.mxu0 %v541
        %v1087 = vpop.f32.mrf.mxu0
        %v1088 = vadd.f32 %v975, %v1087
        %1089 = vmatmul.f32.gmra.mxu0 %v544
        %v1090 = vpop.f32.mrf.mxu0
        %v1091 = vadd.f32 %v978, %v1090
        %1092 = vmatmul.f32.gmra.mxu0 %v546
        %v1093 = vpop.f32.mrf.mxu0
        %v1094 = vadd.f32 %v981, %v1093
        %1095 = vmatmul.f32.gmra.mxu0 %v549
        %v1096 = vpop.f32.mrf.mxu0
        %v1097 = vadd.f32 %v984, %v1096
        %1098 = vmatmul.f32.gmra.mxu0 %v551
        %v1099 = vpop.f32.mrf.mxu0
        %v1100 = vadd.f32 %v987, %v1099
        %1101 = vmatmul.f32.gmra.mxu0 %v554
        %v1102 = vpop.f32.mrf.mxu0
        %v1103 = vadd.f32 %v990, %v1102
        %1104 = vmatmul.f32.gmra.mxu0 %v556
        %v1105 = vpop.f32.mrf.mxu0
        %v1106 = vadd.f32 %v993, %v1105
        %1107 = vmatmul.f32.gmra.mxu0 %v559
        %v1108 = vpop.f32.mrf.mxu0
        %v1109 = vadd.f32 %v996, %v1108
        %1110 = vmatmul.f32.gmra.mxu0 %v561
        %v1111 = vpop.f32.mrf.mxu0
        %v1112 = vadd.f32 %v999, %v1111
        %1113 = vmatmul.f32.gmra.mxu0 %v564
        %v1114 = vpop.f32.mrf.mxu0
        %v1115 = vadd.f32 %v1002, %v1114
        %1116 = vmatmul.f32.gmra.mxu0 %v566
        %v1117 = vpop.f32.mrf.mxu0
        %v1118 = vadd.f32 %v1005, %v1117
        %1119 = vdwg.mxu0
        %1120 = vmatpush.msra.mxu0 %v793
        %1121 = vmatpush.msra.mxu0 %v792
        %1122 = vmatpush.msra.mxu0 %v791
        %1123 = vmatpush.msra.mxu0 %v790
        %1124 = vmatpush.msra.mxu0 %v789
        %1125 = vmatpush.msra.mxu0 %v788
        %1126 = vmatpush.msra.mxu0 %v787
        %1127 = vmatpush.msra.mxu0 %v786
        %1128 = vmatpush.msra.mxu0 %v785
        %1129 = vmatpush.msra.mxu0 %v784
        %1130 = vmatpush.msra.mxu0 %v783
        %1131 = vmatpush.msra.mxu0 %v782
        %1132 = vmatpush.msra.mxu0 %v781
        %1133 = vmatpush.msra.mxu0 %v780
        %1134 = vmatpush.msra.mxu0 %v779
        %1135 = vmatpush.msra.mxu0 %v778
        %1136 = vmatmul.f32.gmra.mxu0 %v602
        %v1137 = vpop.f32.mrf.mxu0
        %v1138 = vadd.f32 %v1025, %v1137
        %1139 = vmatmul.f32.gmra.mxu0 %v604
        %v1140 = vpop.f32.mrf.mxu0
        %v1141 = vadd.f32 %v1028, %v1140
        %1142 = vmatmul.f32.gmra.mxu0 %v607
        %v1143 = vpop.f32.mrf.mxu0
        %v1144 = vadd.f32 %v1031, %v1143
        %1145 = vmatmul.f32.gmra.mxu0 %v609
        %v1146 = vpop.f32.mrf.mxu0
        %v1147 = vadd.f32 %v1034, %v1146
        %1148 = vmatmul.f32.gmra.mxu0 %v612
        %v1149 = vpop.f32.mrf.mxu0
        %v1150 = vadd.f32 %v1037, %v1149
        %1151 = vmatmul.f32.gmra.mxu0 %v614
        %v1152 = vpop.f32.mrf.mxu0
        %v1153 = vadd.f32 %v1040, %v1152
        %1154 = vmatmul.f32.gmra.mxu0 %v617
        %v1155 = vpop.f32.mrf.mxu0
        %v1156 = vadd.f32 %v1043, %v1155
        %1157 = vmatmul.f32.gmra.mxu0 %v619
        %v1158 = vpop.f32.mrf.mxu0
        %v1159 = vadd.f32 %v1046, %v1158
        %1160 = vmatmul.f32.gmra.mxu0 %v622
        %v1161 = vpop.f32.mrf.mxu0
        %v1162 = vadd.f32 %v1049, %v1161
        %1163 = vmatmul.f32.gmra.mxu0 %v624
        %v1164 = vpop.f32.mrf.mxu0
        %v1165 = vadd.f32 %v1052, %v1164
        %1166 = vmatmul.f32.gmra.mxu0 %v627
        %v1167 = vpop.f32.mrf.mxu0
        %v1168 = vadd.f32 %v1055, %v1167
        %1169 = vmatmul.f32.gmra.mxu0 %v629
        %v1170 = vpop.f32.mrf.mxu0
        %v1171 = vadd.f32 %v1058, %v1170
        %1172 = vmatmul.f32.gmra.mxu0 %v632
        %v1173 = vpop.f32.mrf.mxu0
        %v1174 = vadd.f32 %v1061, %v1173
        %1175 = vmatmul.f32.gmra.mxu0 %v634
        %v1176 = vpop.f32.mrf.mxu0
        %v1177 = vadd.f32 %v1064, %v1176
        %1178 = vmatmul.f32.gmra.mxu0 %v637
        %v1179 = vpop.f32.mrf.mxu0
        %v1180 = vadd.f32 %v1067, %v1179
        %1181 = vmatmul.f32.gmra.mxu0 %v639
        %v1182 = vpop.f32.mrf.mxu0
        %v1183 = vadd.f32 %v1070, %v1182
        %1184 = vmatmul.f32.gmra.mxu0 %v642
        %v1185 = vpop.f32.mrf.mxu0
        %v1186 = vadd.f32 %v1073, %v1185
        %1187 = vmatmul.f32.gmra.mxu0 %v644
        %v1188 = vpop.f32.mrf.mxu0
        %v1189 = vadd.f32 %v1076, %v1188
        %1190 = vmatmul.f32.gmra.mxu0 %v647
        %v1191 = vpop.f32.mrf.mxu0
        %v1192 = vadd.f32 %v1079, %v1191
        %1193 = vmatmul.f32.gmra.mxu0 %v649
        %v1194 = vpop.f32.mrf.mxu0
        %v1195 = vadd.f32 %v1082, %v1194
        %1196 = vmatmul.f32.gmra.mxu0 %v652
        %v1197 = vpop.f32.mrf.mxu0
        %v1198 = vadd.f32 %v1085, %v1197
        %1199 = vmatmul.f32.gmra.mxu0 %v654
        %v1200 = vpop.f32.mrf.mxu0
        %v1201 = vadd.f32 %v1088, %v1200
        %1202 = vmatmul.f32.gmra.mxu0 %v657
        %v1203 = vpop.f32.mrf.mxu0
        %v1204 = vadd.f32 %v1091, %v1203
        %1205 = vmatmul.f32.gmra.mxu0 %v659
        %v1206 = vpop.f32.mrf.mxu0
        %v1207 = vadd.f32 %v1094, %v1206
        %1208 = vmatmul.f32.gmra.mxu0 %v662
        %v1209 = vpop.f32.mrf.mxu0
        %v1210 = vadd.f32 %v1097, %v1209
        %1211 = vmatmul.f32.gmra.mxu0 %v664
        %v1212 = vpop.f32.mrf.mxu0
        %v1213 = vadd.f32 %v1100, %v1212
        %1214 = vmatmul.f32.gmra.mxu0 %v667
        %v1215 = vpop.f32.mrf.mxu0
        %v1216 = vadd.f32 %v1103, %v1215
        %1217 = vmatmul.f32.gmra.mxu0 %v669
        %v1218 = vpop.f32.mrf.mxu0
        %v1219 = vadd.f32 %v1106, %v1218
        %1220 = vmatmul.f32.gmra.mxu0 %v672
        %v1221 = vpop.f32.mrf.mxu0
        %v1222 = vadd.f32 %v1109, %v1221
        %1223 = vmatmul.f32.gmra.mxu0 %v674
        %v1224 = vpop.f32.mrf.mxu0
        %v1225 = vadd.f32 %v1112, %v1224
        %1226 = vmatmul.f32.gmra.mxu0 %v677
        %v1227 = vpop.f32.mrf.mxu0
        %v1228 = vadd.f32 %v1115, %v1227
        %1229 = vmatmul.f32.gmra.mxu0 %v679
        %v1230 = vpop.f32.mrf.mxu0
        %v1231 = vadd.f32 %v1118, %v1230
        %1232 = vdwg.mxu0
        %1233 = vmatpush.msra.mxu0 %v809
        %1234 = vmatpush.msra.mxu0 %v808
        %1235 = vmatpush.msra.mxu0 %v807
        %1236 = vmatpush.msra.mxu0 %v806
        %1237 = vmatpush.msra.mxu0 %v805
        %1238 = vmatpush.msra.mxu0 %v804
        %1239 = vmatpush.msra.mxu0 %v803
        %1240 = vmatpush.msra.mxu0 %v802
        %1241 = vmatpush.msra.mxu0 %v801
        %1242 = vmatpush.msra.mxu0 %v800
        %1243 = vmatpush.msra.mxu0 %v799
        %1244 = vmatpush.msra.mxu0 %v798
        %1245 = vmatpush.msra.mxu0 %v797
        %1246 = vmatpush.msra.mxu0 %v796
        %1247 = vmatpush.msra.mxu0 %v795
        %1248 = vmatpush.msra.mxu0 %v794
        %1249 = vmatmul.f32.gmra.mxu0 %v387
        %v1250 = vpop.f32.mrf.mxu0
        %v1251 = vadd.f32 %v1138, %v1250
        %1252 = vmatmul.f32.gmra.mxu0 %v388
        %v1253 = vpop.f32.mrf.mxu0
        %v1254 = vadd.f32 %v1141, %v1253
        %1255 = vmatmul.f32.gmra.mxu0 %v390
        %v1256 = vpop.f32.mrf.mxu0
        %v1257 = vadd.f32 %v1144, %v1256
        %1258 = vmatmul.f32.gmra.mxu0 %v391
        %v1259 = vpop.f32.mrf.mxu0
        %v1260 = vadd.f32 %v1147, %v1259
        %1261 = vmatmul.f32.gmra.mxu0 %v393
        %v1262 = vpop.f32.mrf.mxu0
        %v1263 = vadd.f32 %v1150, %v1262
        %1264 = vmatmul.f32.gmra.mxu0 %v394
        %v1265 = vpop.f32.mrf.mxu0
        %v1266 = vadd.f32 %v1153, %v1265
        %1267 = vmatmul.f32.gmra.mxu0 %v396
        %v1268 = vpop.f32.mrf.mxu0
        %v1269 = vadd.f32 %v1156, %v1268
        %1270 = vmatmul.f32.gmra.mxu0 %v397
        %v1271 = vpop.f32.mrf.mxu0
        %v1272 = vadd.f32 %v1159, %v1271
        %1273 = vmatmul.f32.gmra.mxu0 %v399
        %v1274 = vpop.f32.mrf.mxu0
        %v1275 = vadd.f32 %v1162, %v1274
        %1276 = vmatmul.f32.gmra.mxu0 %v400
        %v1277 = vpop.f32.mrf.mxu0
        %v1278 = vadd.f32 %v1165, %v1277
        %1279 = vmatmul.f32.gmra.mxu0 %v402
        %v1280 = vpop.f32.mrf.mxu0
        %v1281 = vadd.f32 %v1168, %v1280
        %1282 = vmatmul.f32.gmra.mxu0 %v403
        %v1283 = vpop.f32.mrf.mxu0
        %v1284 = vadd.f32 %v1171, %v1283
        %1285 = vmatmul.f32.gmra.mxu0 %v405
        %v1286 = vpop.f32.mrf.mxu0
        %v1287 = vadd.f32 %v1174, %v1286
        %1288 = vmatmul.f32.gmra.mxu0 %v406
        %v1289 = vpop.f32.mrf.mxu0
        %v1290 = vadd.f32 %v1177, %v1289
        %1291 = vmatmul.f32.gmra.mxu0 %v408
        %v1292 = vpop.f32.mrf.mxu0
        %v1293 = vadd.f32 %v1180, %v1292
        %1294 = vmatmul.f32.gmra.mxu0 %v409
        %v1295 = vpop.f32.mrf.mxu0
        %v1296 = vadd.f32 %v1183, %v1295
        %1297 = vmatmul.f32.gmra.mxu0 %v411
        %v1298 = vpop.f32.mrf.mxu0
        %v1299 = vadd.f32 %v1186, %v1298
        %1300 = vmatmul.f32.gmra.mxu0 %v412
        %v1301 = vpop.f32.mrf.mxu0
        %v1302 = vadd.f32 %v1189, %v1301
        %1303 = vmatmul.f32.gmra.mxu0 %v414
        %v1304 = vpop.f32.mrf.mxu0
        %v1305 = vadd.f32 %v1192, %v1304
        %1306 = vmatmul.f32.gmra.mxu0 %v415
        %v1307 = vpop.f32.mrf.mxu0
        %v1308 = vadd.f32 %v1195, %v1307
        %1309 = vmatmul.f32.gmra.mxu0 %v417
        %v1310 = vpop.f32.mrf.mxu0
        %v1311 = vadd.f32 %v1198, %v1310
        %1312 = vmatmul.f32.gmra.mxu0 %v418
        %v1313 = vpop.f32.mrf.mxu0
        %v1314 = vadd.f32 %v1201, %v1313
        %1315 = vmatmul.f32.gmra.mxu0 %v420
        %v1316 = vpop.f32.mrf.mxu0
        %v1317 = vadd.f32 %v1204, %v1316
        %1318 = vmatmul.f32.gmra.mxu0 %v421
        %v1319 = vpop.f32.mrf.mxu0
        %v1320 = vadd.f32 %v1207, %v1319
        %1321 = vmatmul.f32.gmra.mxu0 %v423
        %v1322 = vpop.f32.mrf.mxu0
        %v1323 = vadd.f32 %v1210, %v1322
        %1324 = vmatmul.f32.gmra.mxu0 %v424
        %v1325 = vpop.f32.mrf.mxu0
        %v1326 = vadd.f32 %v1213, %v1325
        %1327 = vmatmul.f32.gmra.mxu0 %v426
        %v1328 = vpop.f32.mrf.mxu0
        %v1329 = vadd.f32 %v1216, %v1328
        %1330 = vmatmul.f32.gmra.mxu0 %v427
        %v1331 = vpop.f32.mrf.mxu0
        %v1332 = vadd.f32 %v1219, %v1331
        %1333 = vmatmul.f32.gmra.mxu0 %v429
        %v1334 = vpop.f32.mrf.mxu0
        %v1335 = vadd.f32 %v1222, %v1334
        %1336 = vmatmul.f32.gmra.mxu0 %v430
        %v1337 = vpop.f32.mrf.mxu0
        %v1338 = vadd.f32 %v1225, %v1337
        %1339 = vmatmul.f32.gmra.mxu0 %v432
        %v1340 = vpop.f32.mrf.mxu0
        %v1341 = vadd.f32 %v1228, %v1340
        %1342 = vmatmul.f32.gmra.mxu0 %v433
        %v1343 = vpop.f32.mrf.mxu0
        %v1344 = vadd.f32 %v1231, %v1343
        %1345 = vdwg.mxu0
        %1346 = vmatpush.msra.mxu0 %v825
        %1347 = vmatpush.msra.mxu0 %v824
        %1348 = vmatpush.msra.mxu0 %v823
        %1349 = vmatpush.msra.mxu0 %v822
        %1350 = vmatpush.msra.mxu0 %v821
        %1351 = vmatpush.msra.mxu0 %v820
        %1352 = vmatpush.msra.mxu0 %v819
        %1353 = vmatpush.msra.mxu0 %v818
        %1354 = vmatpush.msra.mxu0 %v817
        %1355 = vmatpush.msra.mxu0 %v816
        %1356 = vmatpush.msra.mxu0 %v815
        %1357 = vmatpush.msra.mxu0 %v814
        %1358 = vmatpush.msra.mxu0 %v813
        %1359 = vmatpush.msra.mxu0 %v812
        %1360 = vmatpush.msra.mxu0 %v811
        %1361 = vmatpush.msra.mxu0 %v810
        %1362 = vmatmul.f32.gmra.mxu0 %v494
        %v1363 = vpop.f32.mrf.mxu0
        %v1364 = vadd.f32 %v1251, %v1363
        %1365 = vmatmul.f32.gmra.mxu0 %v496
        %v1366 = vpop.f32.mrf.mxu0
        %v1367 = vadd.f32 %v1254, %v1366
        %1368 = vmatmul.f32.gmra.mxu0 %v499
        %v1369 = vpop.f32.mrf.mxu0
        %v1370 = vadd.f32 %v1257, %v1369
        %1371 = vmatmul.f32.gmra.mxu0 %v501
        %v1372 = vpop.f32.mrf.mxu0
        %v1373 = vadd.f32 %v1260, %v1372
        %1374 = vmatmul.f32.gmra.mxu0 %v504
        %v1375 = vpop.f32.mrf.mxu0
        %v1376 = vadd.f32 %v1263, %v1375
        %1377 = vmatmul.f32.gmra.mxu0 %v506
        %v1378 = vpop.f32.mrf.mxu0
        %v1379 = vadd.f32 %v1266, %v1378
        %1380 = vmatmul.f32.gmra.mxu0 %v509
        %v1381 = vpop.f32.mrf.mxu0
        %v1382 = vadd.f32 %v1269, %v1381
        %1383 = vmatmul.f32.gmra.mxu0 %v511
        %v1384 = vpop.f32.mrf.mxu0
        %v1385 = vadd.f32 %v1272, %v1384
        %1386 = vmatmul.f32.gmra.mxu0 %v514
        %v1387 = vpop.f32.mrf.mxu0
        %v1388 = vadd.f32 %v1275, %v1387
        %1389 = vmatmul.f32.gmra.mxu0 %v516
        %v1390 = vpop.f32.mrf.mxu0
        %v1391 = vadd.f32 %v1278, %v1390
        %1392 = vmatmul.f32.gmra.mxu0 %v519
        %v1393 = vpop.f32.mrf.mxu0
        %v1394 = vadd.f32 %v1281, %v1393
        %1395 = vmatmul.f32.gmra.mxu0 %v521
        %v1396 = vpop.f32.mrf.mxu0
        %v1397 = vadd.f32 %v1284, %v1396
        %1398 = vmatmul.f32.gmra.mxu0 %v524
        %v1399 = vpop.f32.mrf.mxu0
        %v1400 = vadd.f32 %v1287, %v1399
        %1401 = vmatmul.f32.gmra.mxu0 %v526
        %v1402 = vpop.f32.mrf.mxu0
        %v1403 = vadd.f32 %v1290, %v1402
        %1404 = vmatmul.f32.gmra.mxu0 %v529
        %v1405 = vpop.f32.mrf.mxu0
        %v1406 = vadd.f32 %v1293, %v1405
        %1407 = vmatmul.f32.gmra.mxu0 %v531
        %v1408 = vpop.f32.mrf.mxu0
        %v1409 = vadd.f32 %v1296, %v1408
        %1410 = vmatmul.f32.gmra.mxu0 %v534
        %v1411 = vpop.f32.mrf.mxu0
        %v1412 = vadd.f32 %v1299, %v1411
        %1413 = vmatmul.f32.gmra.mxu0 %v536
        %v1414 = vpop.f32.mrf.mxu0
        %v1415 = vadd.f32 %v1302, %v1414
        %1416 = vmatmul.f32.gmra.mxu0 %v539
        %v1417 = vpop.f32.mrf.mxu0
        %v1418 = vadd.f32 %v1305, %v1417
        %1419 = vmatmul.f32.gmra.mxu0 %v541
        %v1420 = vpop.f32.mrf.mxu0
        %v1421 = vadd.f32 %v1308, %v1420
        %1422 = vmatmul.f32.gmra.mxu0 %v544
        %v1423 = vpop.f32.mrf.mxu0
        %v1424 = vadd.f32 %v1311, %v1423
        %1425 = vmatmul.f32.gmra.mxu0 %v546
        %v1426 = vpop.f32.mrf.mxu0
        %v1427 = vadd.f32 %v1314, %v1426
        %1428 = vmatmul.f32.gmra.mxu0 %v549
        %v1429 = vpop.f32.mrf.mxu0
        %v1430 = vadd.f32 %v1317, %v1429
        %1431 = vmatmul.f32.gmra.mxu0 %v551
        %v1432 = vpop.f32.mrf.mxu0
        %v1433 = vadd.f32 %v1320, %v1432
        %1434 = vmatmul.f32.gmra.mxu0 %v554
        %v1435 = vpop.f32.mrf.mxu0
        %v1436 = vadd.f32 %v1323, %v1435
        %1437 = vmatmul.f32.gmra.mxu0 %v556
        %v1438 = vpop.f32.mrf.mxu0
        %v1439 = vadd.f32 %v1326, %v1438
        %1440 = vmatmul.f32.gmra.mxu0 %v559
        %v1441 = vpop.f32.mrf.mxu0
        %v1442 = vadd.f32 %v1329, %v1441
        %1443 = vmatmul.f32.gmra.mxu0 %v561
        %v1444 = vpop.f32.mrf.mxu0
        %v1445 = vadd.f32 %v1332, %v1444
        %1446 = vmatmul.f32.gmra.mxu0 %v564
        %v1447 = vpop.f32.mrf.mxu0
        %v1448 = vadd.f32 %v1335, %v1447
        %1449 = vmatmul.f32.gmra.mxu0 %v566
        %v1450 = vpop.f32.mrf.mxu0
        %v1451 = vadd.f32 %v1338, %v1450
        %1452 = vmatmul.f32.gmra.mxu0 %v717
        %v1453 = vpop.f32.mrf.mxu0
        %v1454 = vadd.f32 %v1341, %v1453
        %1455 = vmatmul.f32.gmra.mxu0 %v719
        %v1456 = vpop.f32.mrf.mxu0
        %v1457 = vadd.f32 %v1344, %v1456
        %1458 = vdwg.mxu0
        %1459 = vmatpush.msra.mxu0 %v841
        %1460 = vmatpush.msra.mxu0 %v840
        %1461 = vmatpush.msra.mxu0 %v839
        %1462 = vmatpush.msra.mxu0 %v838
        %1463 = vmatpush.msra.mxu0 %v837
        %1464 = vmatpush.msra.mxu0 %v836
        %1465 = vmatpush.msra.mxu0 %v835
        %1466 = vmatpush.msra.mxu0 %v834
        %1467 = vmatpush.msra.mxu0 %v833
        %1468 = vmatpush.msra.mxu0 %v832
        %1469 = vmatpush.msra.mxu0 %v831
        %1470 = vmatpush.msra.mxu0 %v830
        %1471 = vmatpush.msra.mxu0 %v829
        %1472 = vmatpush.msra.mxu0 %v828
        %1473 = vmatpush.msra.mxu0 %v827
        %1474 = vmatpush.msra.mxu0 %v826
        %1475 = vmatmul.f32.gmra.mxu0 %v607
        %v1476 = vpop.f32.mrf.mxu0
        %v1477 = vadd.f32 %v1364, %v1476
        %1478 = vmatmul.f32.gmra.mxu0 %v609
        %v1479 = vpop.f32.mrf.mxu0
        %v1480 = vadd.f32 %v1367, %v1479
        %1481 = vmatmul.f32.gmra.mxu0 %v612
        %v1482 = vpop.f32.mrf.mxu0
        %v1483 = vadd.f32 %v1370, %v1482
        %1484 = vmatmul.f32.gmra.mxu0 %v614
        %v1485 = vpop.f32.mrf.mxu0
        %v1486 = vadd.f32 %v1373, %v1485
        %1487 = vmatmul.f32.gmra.mxu0 %v617
        %v1488 = vpop.f32.mrf.mxu0
        %v1489 = vadd.f32 %v1376, %v1488
        %1490 = vmatmul.f32.gmra.mxu0 %v619
        %v1491 = vpop.f32.mrf.mxu0
        %v1492 = vadd.f32 %v1379, %v1491
        %1493 = vmatmul.f32.gmra.mxu0 %v622
        %v1494 = vpop.f32.mrf.mxu0
        %v1495 = vadd.f32 %v1382, %v1494
        %1496 = vmatmul.f32.gmra.mxu0 %v624
        %v1497 = vpop.f32.mrf.mxu0
        %v1498 = vadd.f32 %v1385, %v1497
        %1499 = vmatmul.f32.gmra.mxu0 %v627
        %v1500 = vpop.f32.mrf.mxu0
        %v1501 = vadd.f32 %v1388, %v1500
        %1502 = vmatmul.f32.gmra.mxu0 %v629
        %v1503 = vpop.f32.mrf.mxu0
        %v1504 = vadd.f32 %v1391, %v1503
        %1505 = vmatmul.f32.gmra.mxu0 %v632
        %v1506 = vpop.f32.mrf.mxu0
        %v1507 = vadd.f32 %v1394, %v1506
        %1508 = vmatmul.f32.gmra.mxu0 %v634
        %v1509 = vpop.f32.mrf.mxu0
        %v1510 = vadd.f32 %v1397, %v1509
        %1511 = vmatmul.f32.gmra.mxu0 %v637
        %v1512 = vpop.f32.mrf.mxu0
        %v1513 = vadd.f32 %v1400, %v1512
        %1514 = vmatmul.f32.gmra.mxu0 %v639
        %v1515 = vpop.f32.mrf.mxu0
        %v1516 = vadd.f32 %v1403, %v1515
        %1517 = vmatmul.f32.gmra.mxu0 %v642
        %v1518 = vpop.f32.mrf.mxu0
        %v1519 = vadd.f32 %v1406, %v1518
        %1520 = vmatmul.f32.gmra.mxu0 %v644
        %v1521 = vpop.f32.mrf.mxu0
        %v1522 = vadd.f32 %v1409, %v1521
        %1523 = vmatmul.f32.gmra.mxu0 %v647
        %v1524 = vpop.f32.mrf.mxu0
        %v1525 = vadd.f32 %v1412, %v1524
        %1526 = vmatmul.f32.gmra.mxu0 %v649
        %v1527 = vpop.f32.mrf.mxu0
        %v1528 = vadd.f32 %v1415, %v1527
        %1529 = vmatmul.f32.gmra.mxu0 %v652
        %v1530 = vpop.f32.mrf.mxu0
        %v1531 = vadd.f32 %v1418, %v1530
        %1532 = vmatmul.f32.gmra.mxu0 %v654
        %v1533 = vpop.f32.mrf.mxu0
        %v1534 = vadd.f32 %v1421, %v1533
        %1535 = vmatmul.f32.gmra.mxu0 %v657
        %v1536 = vpop.f32.mrf.mxu0
        %v1537 = vadd.f32 %v1424, %v1536
        %1538 = vmatmul.f32.gmra.mxu0 %v659
        %v1539 = vpop.f32.mrf.mxu0
        %v1540 = vadd.f32 %v1427, %v1539
        %1541 = vmatmul.f32.gmra.mxu0 %v662
        %v1542 = vpop.f32.mrf.mxu0
        %v1543 = vadd.f32 %v1430, %v1542
        %1544 = vmatmul.f32.gmra.mxu0 %v664
        %v1545 = vpop.f32.mrf.mxu0
        %v1546 = vadd.f32 %v1433, %v1545
        %1547 = vmatmul.f32.gmra.mxu0 %v667
        %v1548 = vpop.f32.mrf.mxu0
        %v1549 = vadd.f32 %v1436, %v1548
        %1550 = vmatmul.f32.gmra.mxu0 %v669
        %v1551 = vpop.f32.mrf.mxu0
        %v1552 = vadd.f32 %v1439, %v1551
        %1553 = vmatmul.f32.gmra.mxu0 %v672
        %v1554 = vpop.f32.mrf.mxu0
        %v1555 = vadd.f32 %v1442, %v1554
        %1556 = vmatmul.f32.gmra.mxu0 %v674
        %v1557 = vpop.f32.mrf.mxu0
        %v1558 = vadd.f32 %v1445, %v1557
        %1559 = vmatmul.f32.gmra.mxu0 %v677
        %v1560 = vpop.f32.mrf.mxu0
        %v1561 = vadd.f32 %v1448, %v1560
        %1562 = vmatmul.f32.gmra.mxu0 %v679
        %v1563 = vpop.f32.mrf.mxu0
        %v1564 = vadd.f32 %v1451, %v1563
        %1565 = vmatmul.f32.gmra.mxu0 %v724
        %v1566 = vpop.f32.mrf.mxu0
        %v1567 = vadd.f32 %v1454, %v1566
        %1568 = vmatmul.f32.gmra.mxu0 %v726
        %v1569 = vpop.f32.mrf.mxu0
        %v1570 = vadd.f32 %v1457, %v1569
        %1571 = vdwg.mxu0
        %1572 = vmatpush.msra.mxu0 %v857
        %1573 = vmatpush.msra.mxu0 %v856
        %1574 = vmatpush.msra.mxu0 %v855
        %1575 = vmatpush.msra.mxu0 %v854
        %1576 = vmatpush.msra.mxu0 %v853
        %1577 = vmatpush.msra.mxu0 %v852
        %1578 = vmatpush.msra.mxu0 %v851
        %1579 = vmatpush.msra.mxu0 %v850
        %1580 = vmatpush.msra.mxu0 %v849
        %1581 = vmatpush.msra.mxu0 %v848
        %1582 = vmatpush.msra.mxu0 %v847
        %1583 = vmatpush.msra.mxu0 %v846
        %1584 = vmatpush.msra.mxu0 %v845
        %1585 = vmatpush.msra.mxu0 %v844
        %1586 = vmatpush.msra.mxu0 %v843
        %1587 = vmatpush.msra.mxu0 %v842
        %1588 = vmatmul.f32.gmra.mxu0 %v390
        %v1589 = vpop.f32.mrf.mxu0
        %v1590 = vadd.f32 %v1477, %v1589
        %1591 = vmatmul.f32.gmra.mxu0 %v391
        %v1592 = vpop.f32.mrf.mxu0
        %v1593 = vadd.f32 %v1480, %v1592
        %1594 = vmatmul.f32.gmra.mxu0 %v393
        %v1595 = vpop.f32.mrf.mxu0
        %v1596 = vadd.f32 %v1483, %v1595
        %1597 = vmatmul.f32.gmra.mxu0 %v394
        %v1598 = vpop.f32.mrf.mxu0
        %v1599 = vadd.f32 %v1486, %v1598
        %1600 = vmatmul.f32.gmra.mxu0 %v396
        %v1601 = vpop.f32.mrf.mxu0
        %v1602 = vadd.f32 %v1489, %v1601
        %1603 = vmatmul.f32.gmra.mxu0 %v397
        %v1604 = vpop.f32.mrf.mxu0
        %v1605 = vadd.f32 %v1492, %v1604
        %1606 = vmatmul.f32.gmra.mxu0 %v399
        %v1607 = vpop.f32.mrf.mxu0
        %v1608 = vadd.f32 %v1495, %v1607
        %1609 = vmatmul.f32.gmra.mxu0 %v400
        %v1610 = vpop.f32.mrf.mxu0
        %v1611 = vadd.f32 %v1498, %v1610
        %1612 = vmatmul.f32.gmra.mxu0 %v402
        %v1613 = vpop.f32.mrf.mxu0
        %v1614 = vadd.f32 %v1501, %v1613
        %1615 = vmatmul.f32.gmra.mxu0 %v403
        %v1616 = vpop.f32.mrf.mxu0
        %v1617 = vadd.f32 %v1504, %v1616
        %1618 = vmatmul.f32.gmra.mxu0 %v405
        %v1619 = vpop.f32.mrf.mxu0
        %v1620 = vadd.f32 %v1507, %v1619
        %1621 = vmatmul.f32.gmra.mxu0 %v406
        %v1622 = vpop.f32.mrf.mxu0
        %v1623 = vadd.f32 %v1510, %v1622
        %1624 = vmatmul.f32.gmra.mxu0 %v408
        %v1625 = vpop.f32.mrf.mxu0
        %v1626 = vadd.f32 %v1513, %v1625
        %1627 = vmatmul.f32.gmra.mxu0 %v409
        %v1628 = vpop.f32.mrf.mxu0
        %v1629 = vadd.f32 %v1516, %v1628
        %1630 = vmatmul.f32.gmra.mxu0 %v411
        %v1631 = vpop.f32.mrf.mxu0
        %v1632 = vadd.f32 %v1519, %v1631
        %1633 = vmatmul.f32.gmra.mxu0 %v412
        %v1634 = vpop.f32.mrf.mxu0
        %v1635 = vadd.f32 %v1522, %v1634
        %1636 = vmatmul.f32.gmra.mxu0 %v414
        %v1637 = vpop.f32.mrf.mxu0
        %v1638 = vadd.f32 %v1525, %v1637
        %1639 = vmatmul.f32.gmra.mxu0 %v415
        %v1640 = vpop.f32.mrf.mxu0
        %v1641 = vadd.f32 %v1528, %v1640
        %1642 = vmatmul.f32.gmra.mxu0 %v417
        %v1643 = vpop.f32.mrf.mxu0
        %v1644 = vadd.f32 %v1531, %v1643
        %1645 = vmatmul.f32.gmra.mxu0 %v418
        %v1646 = vpop.f32.mrf.mxu0
        %v1647 = vadd.f32 %v1534, %v1646
        %1648 = vmatmul.f32.gmra.mxu0 %v420
        %v1649 = vpop.f32.mrf.mxu0
        %v1650 = vadd.f32 %v1537, %v1649
        %1651 = vmatmul.f32.gmra.mxu0 %v421
        %v1652 = vpop.f32.mrf.mxu0
        %v1653 = vadd.f32 %v1540, %v1652
        %1654 = vmatmul.f32.gmra.mxu0 %v423
        %v1655 = vpop.f32.mrf.mxu0
        %v1656 = vadd.f32 %v1543, %v1655
        %1657 = vmatmul.f32.gmra.mxu0 %v424
        %v1658 = vpop.f32.mrf.mxu0
        %v1659 = vadd.f32 %v1546, %v1658
        %1660 = vmatmul.f32.gmra.mxu0 %v426
        %v1661 = vpop.f32.mrf.mxu0
        %v1662 = vadd.f32 %v1549, %v1661
        %1663 = vmatmul.f32.gmra.mxu0 %v427
        %v1664 = vpop.f32.mrf.mxu0
        %v1665 = vadd.f32 %v1552, %v1664
        %1666 = vmatmul.f32.gmra.mxu0 %v429
        %v1667 = vpop.f32.mrf.mxu0
        %v1668 = vadd.f32 %v1555, %v1667
        %1669 = vmatmul.f32.gmra.mxu0 %v430
        %v1670 = vpop.f32.mrf.mxu0
        %v1671 = vadd.f32 %v1558, %v1670
        %1672 = vmatmul.f32.gmra.mxu0 %v432
        %v1673 = vpop.f32.mrf.mxu0
        %v1674 = vadd.f32 %v1561, %v1673
        %1675 = vmatmul.f32.gmra.mxu0 %v433
        %v1676 = vpop.f32.mrf.mxu0
        %v1677 = vadd.f32 %v1564, %v1676
        %1678 = vmatmul.f32.gmra.mxu0 %v435
        %v1679 = vpop.f32.mrf.mxu0
        %v1680 = vadd.f32 %v1567, %v1679
        %1681 = vmatmul.f32.gmra.mxu0 %v436
        %v1682 = vpop.f32.mrf.mxu0
        %v1683 = vadd.f32 %v1570, %v1682
        %1684 = vdwg.mxu0
        %1685 = vmatpush.msra.mxu0 %v873
        %1686 = vmatpush.msra.mxu0 %v872
        %1687 = vmatpush.msra.mxu0 %v871
        %1688 = vmatpush.msra.mxu0 %v870
        %1689 = vmatpush.msra.mxu0 %v869
        %1690 = vmatpush.msra.mxu0 %v868
        %1691 = vmatpush.msra.mxu0 %v867
        %1692 = vmatpush.msra.mxu0 %v866
        %1693 = vmatpush.msra.mxu0 %v865
        %1694 = vmatpush.msra.mxu0 %v864
        %1695 = vmatpush.msra.mxu0 %v863
        %1696 = vmatpush.msra.mxu0 %v862
        %1697 = vmatpush.msra.mxu0 %v861
        %1698 = vmatpush.msra.mxu0 %v860
        %1699 = vmatpush.msra.mxu0 %v859
        %1700 = vmatpush.msra.mxu0 %v858
        %1701 = vmatmul.f32.gmra.mxu0 %v499
        %v1702 = vpop.f32.mrf.mxu0
        %v1703 = vadd.f32 %v1590, %v1702
        %1704 = vmatmul.f32.gmra.mxu0 %v501
        %v1705 = vpop.f32.mrf.mxu0
        %v1706 = vadd.f32 %v1593, %v1705
        %1707 = vmatmul.f32.gmra.mxu0 %v504
        %v1708 = vpop.f32.mrf.mxu0
        %v1709 = vadd.f32 %v1596, %v1708
        %1710 = vmatmul.f32.gmra.mxu0 %v506
        %v1711 = vpop.f32.mrf.mxu0
        %v1712 = vadd.f32 %v1599, %v1711
        %1713 = vmatmul.f32.gmra.mxu0 %v509
        %v1714 = vpop.f32.mrf.mxu0
        %v1715 = vadd.f32 %v1602, %v1714
        %1716 = vmatmul.f32.gmra.mxu0 %v511
        %v1717 = vpop.f32.mrf.mxu0
        %v1718 = vadd.f32 %v1605, %v1717
        %1719 = vmatmul.f32.gmra.mxu0 %v514
        %v1720 = vpop.f32.mrf.mxu0
        %v1721 = vadd.f32 %v1608, %v1720
        %1722 = vmatmul.f32.gmra.mxu0 %v516
        %v1723 = vpop.f32.mrf.mxu0
        %v1724 = vadd.f32 %v1611, %v1723
        %1725 = vmatmul.f32.gmra.mxu0 %v519
        %v1726 = vpop.f32.mrf.mxu0
        %v1727 = vadd.f32 %v1614, %v1726
        %1728 = vmatmul.f32.gmra.mxu0 %v521
        %v1729 = vpop.f32.mrf.mxu0
        %v1730 = vadd.f32 %v1617, %v1729
        %1731 = vmatmul.f32.gmra.mxu0 %v524
        %v1732 = vpop.f32.mrf.mxu0
        %v1733 = vadd.f32 %v1620, %v1732
        %1734 = vmatmul.f32.gmra.mxu0 %v526
        %v1735 = vpop.f32.mrf.mxu0
        %v1736 = vadd.f32 %v1623, %v1735
        %1737 = vmatmul.f32.gmra.mxu0 %v529
        %v1738 = vpop.f32.mrf.mxu0
        %v1739 = vadd.f32 %v1626, %v1738
        %1740 = vmatmul.f32.gmra.mxu0 %v531
        %v1741 = vpop.f32.mrf.mxu0
        %v1742 = vadd.f32 %v1629, %v1741
        %1743 = vmatmul.f32.gmra.mxu0 %v534
        %v1744 = vpop.f32.mrf.mxu0
        %v1745 = vadd.f32 %v1632, %v1744
        %1746 = vmatmul.f32.gmra.mxu0 %v536
        %v1747 = vpop.f32.mrf.mxu0
        %v1748 = vadd.f32 %v1635, %v1747
        %1749 = vmatmul.f32.gmra.mxu0 %v539
        %v1750 = vpop.f32.mrf.mxu0
        %v1751 = vadd.f32 %v1638, %v1750
        %1752 = vmatmul.f32.gmra.mxu0 %v541
        %v1753 = vpop.f32.mrf.mxu0
        %v1754 = vadd.f32 %v1641, %v1753
        %1755 = vmatmul.f32.gmra.mxu0 %v544
        %v1756 = vpop.f32.mrf.mxu0
        %v1757 = vadd.f32 %v1644, %v1756
        %1758 = vmatmul.f32.gmra.mxu0 %v546
        %v1759 = vpop.f32.mrf.mxu0
        %v1760 = vadd.f32 %v1647, %v1759
        %1761 = vmatmul.f32.gmra.mxu0 %v549
        %v1762 = vpop.f32.mrf.mxu0
        %v1763 = vadd.f32 %v1650, %v1762
        %1764 = vmatmul.f32.gmra.mxu0 %v551
        %v1765 = vpop.f32.mrf.mxu0
        %v1766 = vadd.f32 %v1653, %v1765
        %1767 = vmatmul.f32.gmra.mxu0 %v554
        %v1768 = vpop.f32.mrf.mxu0
        %v1769 = vadd.f32 %v1656, %v1768
        %1770 = vmatmul.f32.gmra.mxu0 %v556
        %v1771 = vpop.f32.mrf.mxu0
        %v1772 = vadd.f32 %v1659, %v1771
        %1773 = vmatmul.f32.gmra.mxu0 %v559
        %v1774 = vpop.f32.mrf.mxu0
        %v1775 = vadd.f32 %v1662, %v1774
        %1776 = vmatmul.f32.gmra.mxu0 %v561
        %v1777 = vpop.f32.mrf.mxu0
        %v1778 = vadd.f32 %v1665, %v1777
        %1779 = vmatmul.f32.gmra.mxu0 %v564
        %v1780 = vpop.f32.mrf.mxu0
        %v1781 = vadd.f32 %v1668, %v1780
        %1782 = vmatmul.f32.gmra.mxu0 %v566
        %v1783 = vpop.f32.mrf.mxu0
        %v1784 = vadd.f32 %v1671, %v1783
        %1785 = vmatmul.f32.gmra.mxu0 %v717
        %v1786 = vpop.f32.mrf.mxu0
        %v1787 = vadd.f32 %v1674, %v1786
        %1788 = vmatmul.f32.gmra.mxu0 %v719
        %v1789 = vpop.f32.mrf.mxu0
        %v1790 = vadd.f32 %v1677, %v1789
        %1791 = vmatmul.f32.gmra.mxu0 %v734
        %v1792 = vpop.f32.mrf.mxu0
        %v1793 = vadd.f32 %v1680, %v1792
        %1794 = vmatmul.f32.gmra.mxu0 %v736
        %v1795 = vpop.f32.mrf.mxu0
        %v1796 = vadd.f32 %v1683, %v1795
        %1797 = vdwg.mxu0
        %1798 = vmatpush.msra.mxu0 %v889
        %1799 = vmatpush.msra.mxu0 %v888
        %1800 = vmatpush.msra.mxu0 %v887
        %1801 = vmatpush.msra.mxu0 %v886
        %1802 = vmatpush.msra.mxu0 %v885
        %1803 = vmatpush.msra.mxu0 %v884
        %1804 = vmatpush.msra.mxu0 %v883
        %1805 = vmatpush.msra.mxu0 %v882
        %1806 = vmatpush.msra.mxu0 %v881
        %1807 = vmatpush.msra.mxu0 %v880
        %1808 = vmatpush.msra.mxu0 %v879
        %1809 = vmatpush.msra.mxu0 %v878
        %1810 = vmatpush.msra.mxu0 %v877
        %1811 = vmatpush.msra.mxu0 %v876
        %1812 = vmatpush.msra.mxu0 %v875
        %1813 = vmatpush.msra.mxu0 %v874
        %1814 = vmatmul.f32.gmra.mxu0 %v612
        %v1815 = vpop.f32.mrf.mxu0
        %v1816 = vadd.f32 %v1703, %v1815
        %1817 = vmatmul.f32.gmra.mxu0 %v614
        %v1818 = vpop.f32.mrf.mxu0
        %v1819 = vadd.f32 %v1706, %v1818
        %1820 = vmatmul.f32.gmra.mxu0 %v617
        %v1821 = vpop.f32.mrf.mxu0
        %v1822 = vadd.f32 %v1709, %v1821
        %1823 = vmatmul.f32.gmra.mxu0 %v619
        %v1824 = vpop.f32.mrf.mxu0
        %v1825 = vadd.f32 %v1712, %v1824
        %1826 = vmatmul.f32.gmra.mxu0 %v622
        %v1827 = vpop.f32.mrf.mxu0
        %v1828 = vadd.f32 %v1715, %v1827
        %1829 = vmatmul.f32.gmra.mxu0 %v624
        %v1830 = vpop.f32.mrf.mxu0
        %v1831 = vadd.f32 %v1718, %v1830
        %1832 = vmatmul.f32.gmra.mxu0 %v627
        %v1833 = vpop.f32.mrf.mxu0
        %v1834 = vadd.f32 %v1721, %v1833
        %1835 = vmatmul.f32.gmra.mxu0 %v629
        %v1836 = vpop.f32.mrf.mxu0
        %v1837 = vadd.f32 %v1724, %v1836
        %1838 = vmatmul.f32.gmra.mxu0 %v632
        %v1839 = vpop.f32.mrf.mxu0
        %v1840 = vadd.f32 %v1727, %v1839
        %1841 = vmatmul.f32.gmra.mxu0 %v634
        %v1842 = vpop.f32.mrf.mxu0
        %v1843 = vadd.f32 %v1730, %v1842
        %1844 = vmatmul.f32.gmra.mxu0 %v637
        %v1845 = vpop.f32.mrf.mxu0
        %v1846 = vadd.f32 %v1733, %v1845
        %1847 = vmatmul.f32.gmra.mxu0 %v639
        %v1848 = vpop.f32.mrf.mxu0
        %v1849 = vadd.f32 %v1736, %v1848
        %1850 = vmatmul.f32.gmra.mxu0 %v642
        %v1851 = vpop.f32.mrf.mxu0
        %v1852 = vadd.f32 %v1739, %v1851
        %1853 = vmatmul.f32.gmra.mxu0 %v644
        %v1854 = vpop.f32.mrf.mxu0
        %v1855 = vadd.f32 %v1742, %v1854
        %1856 = vmatmul.f32.gmra.mxu0 %v647
        %v1857 = vpop.f32.mrf.mxu0
        %v1858 = vadd.f32 %v1745, %v1857
        %1859 = vmatmul.f32.gmra.mxu0 %v649
        %v1860 = vpop.f32.mrf.mxu0
        %v1861 = vadd.f32 %v1748, %v1860
        %1862 = vmatmul.f32.gmra.mxu0 %v652
        %v1863 = vpop.f32.mrf.mxu0
        %v1864 = vadd.f32 %v1751, %v1863
        %1865 = vmatmul.f32.gmra.mxu0 %v654
        %v1866 = vpop.f32.mrf.mxu0
        %v1867 = vadd.f32 %v1754, %v1866
        %1868 = vmatmul.f32.gmra.mxu0 %v657
        %v1869 = vpop.f32.mrf.mxu0
        %v1870 = vadd.f32 %v1757, %v1869
        %1871 = vmatmul.f32.gmra.mxu0 %v659
        %v1872 = vpop.f32.mrf.mxu0
        %v1873 = vadd.f32 %v1760, %v1872
        %1874 = vmatmul.f32.gmra.mxu0 %v662
        %v1875 = vpop.f32.mrf.mxu0
        %v1876 = vadd.f32 %v1763, %v1875
        %1877 = vmatmul.f32.gmra.mxu0 %v664
        %v1878 = vpop.f32.mrf.mxu0
        %v1879 = vadd.f32 %v1766, %v1878
        %1880 = vmatmul.f32.gmra.mxu0 %v667
        %v1881 = vpop.f32.mrf.mxu0
        %v1882 = vadd.f32 %v1769, %v1881
        %1883 = vmatmul.f32.gmra.mxu0 %v669
        %v1884 = vpop.f32.mrf.mxu0
        %v1885 = vadd.f32 %v1772, %v1884
        %1886 = vmatmul.f32.gmra.mxu0 %v672
        %v1887 = vpop.f32.mrf.mxu0
        %v1888 = vadd.f32 %v1775, %v1887
        %1889 = vmatmul.f32.gmra.mxu0 %v674
        %v1890 = vpop.f32.mrf.mxu0
        %v1891 = vadd.f32 %v1778, %v1890
        %1892 = vmatmul.f32.gmra.mxu0 %v677
        %v1893 = vpop.f32.mrf.mxu0
        %v1894 = vadd.f32 %v1781, %v1893
        %1895 = vmatmul.f32.gmra.mxu0 %v679
        %v1896 = vpop.f32.mrf.mxu0
        %v1897 = vadd.f32 %v1784, %v1896
        %1898 = vmatmul.f32.gmra.mxu0 %v724
        %v1899 = vpop.f32.mrf.mxu0
        %v1900 = vadd.f32 %v1787, %v1899
        %1901 = vmatmul.f32.gmra.mxu0 %v726
        %v1902 = vpop.f32.mrf.mxu0
        %v1903 = vadd.f32 %v1790, %v1902
        %1904 = vmatmul.f32.gmra.mxu0 %v741
        %v1905 = vpop.f32.mrf.mxu0
        %v1906 = vadd.f32 %v1793, %v1905
        %1907 = vmatmul.f32.gmra.mxu0 %v743
        %v1908 = vpop.f32.mrf.mxu0
        %v1909 = vadd.f32 %v1796, %v1908
        %1910 = vdwg.mxu0
        %v1911 = vmul.f32 %v1816, 0.2
        %v1912 = vmul.f32 %v1819, 0.2
        %v1913 = vmul.f32 %v1822, 0.2
        %v1914 = vmul.f32 %v1825, 0.2
        %v1915 = vmul.f32 %v1828, 0.2
        %v1916 = vmul.f32 %v1831, 0.2
        %v1917 = vmul.f32 %v1834, 0.2
        %v1918 = vmul.f32 %v1837, 0.2
        %v1919 = vmul.f32 %v1840, 0.2
        %v1920 = vmul.f32 %v1843, 0.2
        %v1921 = vmul.f32 %v1846, 0.2
        %v1922 = vmul.f32 %v1849, 0.2
        %v1923 = vmul.f32 %v1852, 0.2
        %v1924 = vmul.f32 %v1855, 0.2
        %v1925 = vmul.f32 %v1858, 0.2
        %v1926 = vmul.f32 %v1861, 0.2
        %v1927 = vmul.f32 %v1864, 0.2
        %v1928 = vmul.f32 %v1867, 0.2
        %v1929 = vmul.f32 %v1870, 0.2
        %v1930 = vmul.f32 %v1873, 0.2
        %v1931 = vmul.f32 %v1876, 0.2
        %v1932 = vmul.f32 %v1879, 0.2
        %v1933 = vmul.f32 %v1882, 0.2
        %v1934 = vmul.f32 %v1885, 0.2
        %v1935 = vmul.f32 %v1888, 0.2
        %v1936 = vmul.f32 %v1891, 0.2
        %v1937 = vmul.f32 %v1894, 0.2
        %v1938 = vmul.f32 %v1897, 0.2
        %v1939 = vmul.f32 %v1900, 0.2
        %v1940 = vmul.f32 %v1903, 0.2
        %v1941 = vmul.f32 %v1906, 0.2
        %v1942 = vmul.f32 %v1909, 0.2
        %v1943 = vmax.f32 %v1816, %v1911
        %v1944 = vmax.f32 %v1819, %v1912
        %v1945 = vmax.f32 %v1822, %v1913
        %v1946 = vmax.f32 %v1825, %v1914
        %v1947 = vmax.f32 %v1828, %v1915
        %v1948 = vmax.f32 %v1831, %v1916
        %v1949 = vmax.f32 %v1834, %v1917
        %v1950 = vmax.f32 %v1837, %v1918
        %v1951 = vmax.f32 %v1840, %v1919
        %v1952 = vmax.f32 %v1843, %v1920
        %v1953 = vmax.f32 %v1846, %v1921
        %v1954 = vmax.f32 %v1849, %v1922
        %v1955 = vmax.f32 %v1852, %v1923
        %v1956 = vmax.f32 %v1855, %v1924
        %v1957 = vmax.f32 %v1858, %v1925
        %v1958 = vmax.f32 %v1861, %v1926
        %v1959 = vmax.f32 %v1864, %v1927
        %v1960 = vmax.f32 %v1867, %v1928
        %v1961 = vmax.f32 %v1870, %v1929
        %v1962 = vmax.f32 %v1873, %v1930
        %v1963 = vmax.f32 %v1876, %v1931
        %v1964 = vmax.f32 %v1879, %v1932
        %v1965 = vmax.f32 %v1882, %v1933
        %v1966 = vmax.f32 %v1885, %v1934
        %v1967 = vmax.f32 %v1888, %v1935
        %v1968 = vmax.f32 %v1891, %v1936
        %v1969 = vmax.f32 %v1894, %v1937
        %v1970 = vmax.f32 %v1897, %v1938
        %v1971 = vmax.f32 %v1900, %v1939
        %v1972 = vmax.f32 %v1903, %v1940
        %v1973 = vmax.f32 %v1906, %v1941
        %v1974 = vmax.f32 %v1909, %v1942
        %1975 = vst [vmem:[%s274 + $0x1] sm:$0xff] %v1943
        %1976 = vst [vmem:[%s274 + $0x9] sm:$0xff] %v1944
        %1977 = vst [vmem:[%s274 + $0x19] sm:$0xff] %v1945
        %1978 = vst [vmem:[%s274 + $0x21] sm:$0xff] %v1946
        %1979 = vst [vmem:[%s274 + $0x31] sm:$0xff] %v1947
        %1980 = vst [vmem:[%s274 + $0x39] sm:$0xff] %v1948
        %1981 = vst [vmem:[%s274 + $0x49] sm:$0xff] %v1949
        %1982 = vst [vmem:[%s274 + $0x51] sm:$0xff] %v1950
        %1983 = vst [vmem:[%s274 + $0x61] sm:$0xff] %v1951
        %1984 = vst [vmem:[%s274 + $0x69] sm:$0xff] %v1952
        %1985 = vst [vmem:[%s274 + $0x79] sm:$0xff] %v1953
        %1986 = vst [vmem:[%s274 + $0x81] sm:$0xff] %v1954
        %1987 = vst [vmem:[%s274 + $0x91] sm:$0xff] %v1955
        %1988 = vst [vmem:[%s274 + $0x99] sm:$0xff] %v1956
        %1989 = vst [vmem:[%s274 + $0xa9] sm:$0xff] %v1957
        %1990 = vst [vmem:[%s274 + $0xb1] sm:$0xff] %v1958
        %1991 = vst [vmem:[%s274 + $0xc1] sm:$0xff] %v1959
        %1992 = vst [vmem:[%s274 + $0xc9] sm:$0xff] %v1960
        %1993 = vst [vmem:[%s274 + $0xd9] sm:$0xff] %v1961
        %1994 = vst [vmem:[%s274 + $0xe1] sm:$0xff] %v1962
        %1995 = vst [vmem:[%s274 + $0xf1] sm:$0xff] %v1963
        %1996 = vst [vmem:[%s274 + $0xf9] sm:$0xff] %v1964
        %1997 = vst [vmem:[%s274 + $0x109] sm:$0xff] %v1965
        %1998 = vst [vmem:[%s274 + $0x111] sm:$0xff] %v1966
        %1999 = vst [vmem:[%s274 + $0x121] sm:$0xff] %v1967
        %2000 = vst [vmem:[%s274 + $0x129] sm:$0xff] %v1968
        %2001 = vst [vmem:[%s274 + $0x139] sm:$0xff] %v1969
        %2002 = vst [vmem:[%s274 + $0x141] sm:$0xff] %v1970
        %2003 = vst [vmem:[%s274 + $0x151] sm:$0xff] %v1971
        %2004 = vst [vmem:[%s274 + $0x159] sm:$0xff] %v1972
        %2005 = vst [vmem:[%s274 + $0x169] sm:$0xff] %v1973
        %2006 = vst [vmem:[%s274 + $0x171] sm:$0xff] %v1974
        %2007 = vst [vmem:[#allocation2 + $0x1] sm:$0xff] %v1943
        %2008 = vst [vmem:[#allocation2 + $0x9] sm:$0xff] %v1944
        %2009 = vst [vmem:[%s309 + $0x1] sm:$0xff] %v1973
        %2010 = vst [vmem:[%s309 + $0x9] sm:$0xff] %v1974
        %v2011 = vld [vmem:[#allocation2 + $0x1] sm:$0x1]
        %v2012 = vld [vmem:[#allocation2 + $0x19] sm:$0x1]
        %v2013 = vld [vmem:[#allocation2 + $0x31] sm:$0x1]
        %v2014 = vld [vmem:[#allocation2 + $0x49] sm:$0x1]
        %v2015 = vld [vmem:[#allocation2 + $0x61] sm:$0x1]
        %v2016 = vld [vmem:[#allocation2 + $0x79] sm:$0x1]
        %v2017 = vld [vmem:[#allocation2 + $0x91] sm:$0x1]
        %v2018 = vld [vmem:[#allocation2 + $0xa9] sm:$0x1]
        %v2019 = vld [vmem:[#allocation2 + $0xc1] sm:$0x1]
        %v2020 = vld [vmem:[#allocation2 + $0xd9] sm:$0x1]
        %v2021 = vld [vmem:[#allocation2 + $0xf1] sm:$0x1]
        %v2022 = vld [vmem:[#allocation2 + $0x109] sm:$0x1]
        %v2023 = vld [vmem:[#allocation2 + $0x121] sm:$0x1]
        %v2024 = vld [vmem:[#allocation2 + $0x139] sm:$0x1]
        %v2025 = vld [vmem:[#allocation2 + $0x151] sm:$0x1]
        %v2026 = vld [vmem:[#allocation2 + $0x169] sm:$0x1]
        %v2027 = vld [vmem:[#allocation2 + $0x181] sm:$0x1]
        %v2028 = vld [vmem:[#allocation2 + $0x199] sm:$0x1]
        %2029 = vst [vmem:[#allocation2] sm:$0x1] %v2011
        %2030 = vst [vmem:[#allocation2 + $0x18] sm:$0x1] %v2012
        %2031 = vst [vmem:[#allocation2 + $0x30] sm:$0x1] %v2013
        %2032 = vst [vmem:[#allocation2 + $0x48] sm:$0x1] %v2014
        %2033 = vst [vmem:[#allocation2 + $0x60] sm:$0x1] %v2015
        %2034 = vst [vmem:[#allocation2 + $0x78] sm:$0x1] %v2016
        %2035 = vst [vmem:[#allocation2 + $0x90] sm:$0x1] %v2017
        %2036 = vst [vmem:[#allocation2 + $0xa8] sm:$0x1] %v2018
        %2037 = vst [vmem:[#allocation2 + $0xc0] sm:$0x1] %v2019
        %2038 = vst [vmem:[#allocation2 + $0xd8] sm:$0x1] %v2020
        %2039 = vst [vmem:[#allocation2 + $0xf0] sm:$0x1] %v2021
        %2040 = vst [vmem:[#allocation2 + $0x108] sm:$0x1] %v2022
        %2041 = vst [vmem:[#allocation2 + $0x120] sm:$0x1] %v2023
        %2042 = vst [vmem:[#allocation2 + $0x138] sm:$0x1] %v2024
        %2043 = vst [vmem:[#allocation2 + $0x150] sm:$0x1] %v2025
        %2044 = vst [vmem:[#allocation2 + $0x168] sm:$0x1] %v2026
        %2045 = vst [vmem:[#allocation2 + $0x180] sm:$0x1] %v2027
        %2046 = vst [vmem:[#allocation2 + $0x198] sm:$0x1] %v2028
        %v2047 = vld [vmem:[#allocation2 + $0x10] sm:$0x1]
        %v2048 = vld [vmem:[#allocation2 + $0x28] sm:$0x1]
        %v2049 = vld [vmem:[#allocation2 + $0x40] sm:$0x1]
        %v2050 = vld [vmem:[#allocation2 + $0x58] sm:$0x1]
        %v2051 = vld [vmem:[#allocation2 + $0x70] sm:$0x1]
        %v2052 = vld [vmem:[#allocation2 + $0x88] sm:$0x1]
        %v2053 = vld [vmem:[#allocation2 + $0xa0] sm:$0x1]
        %v2054 = vld [vmem:[#allocation2 + $0xb8] sm:$0x1]
        %v2055 = vld [vmem:[#allocation2 + $0xd0] sm:$0x1]
        %v2056 = vld [vmem:[#allocation2 + $0xe8] sm:$0x1]
        %v2057 = vld [vmem:[#allocation2 + $0x100] sm:$0x1]
        %v2058 = vld [vmem:[#allocation2 + $0x118] sm:$0x1]
        %v2059 = vld [vmem:[#allocation2 + $0x130] sm:$0x1]
        %v2060 = vld [vmem:[#allocation2 + $0x148] sm:$0x1]
        %v2061 = vld [vmem:[#allocation2 + $0x160] sm:$0x1]
        %v2062 = vld [vmem:[#allocation2 + $0x178] sm:$0x1]
        %v2063 = vld [vmem:[#allocation2 + $0x190] sm:$0x1]
        %v2064 = vld [vmem:[#allocation2 + $0x1a8] sm:$0x1]
        %2065 = vst [vmem:[#allocation2 + $0x11] sm:$0x1] %v2047
        %2066 = vst [vmem:[#allocation2 + $0x29] sm:$0x1] %v2048
        %2067 = vst [vmem:[#allocation2 + $0x41] sm:$0x1] %v2049
        %2068 = vst [vmem:[#allocation2 + $0x59] sm:$0x1] %v2050
        %2069 = vst [vmem:[#allocation2 + $0x71] sm:$0x1] %v2051
        %2070 = vst [vmem:[#allocation2 + $0x89] sm:$0x1] %v2052
        %2071 = vst [vmem:[#allocation2 + $0xa1] sm:$0x1] %v2053
        %2072 = vst [vmem:[#allocation2 + $0xb9] sm:$0x1] %v2054
        %2073 = vst [vmem:[#allocation2 + $0xd1] sm:$0x1] %v2055
        %2074 = vst [vmem:[#allocation2 + $0xe9] sm:$0x1] %v2056
        %2075 = vst [vmem:[#allocation2 + $0x101] sm:$0x1] %v2057
        %2076 = vst [vmem:[#allocation2 + $0x119] sm:$0x1] %v2058
        %2077 = vst [vmem:[#allocation2 + $0x131] sm:$0x1] %v2059
        %2078 = vst [vmem:[#allocation2 + $0x149] sm:$0x1] %v2060
        %2079 = vst [vmem:[#allocation2 + $0x161] sm:$0x1] %v2061
        %2080 = vst [vmem:[#allocation2 + $0x179] sm:$0x1] %v2062
        %2081 = vst [vmem:[#allocation2 + $0x191] sm:$0x1] %v2063
        %2082 = vst [vmem:[#allocation2 + $0x1a9] sm:$0x1] %v2064
        %v2083 = vld [vmem:[#allocation2] sm:$0xff]
        %v2084 = vld [vmem:[#allocation2 + $0x8] sm:$0xff]
        %v2085 = vld [vmem:[#allocation2 + $0x10] sm:$0x3]
        %v2086 = vld [vmem:[#allocation2 + $0x18] sm:$0xff]
        %v2087 = vld [vmem:[#allocation2 + $0x20] sm:$0xff]
        %v2088 = vld [vmem:[#allocation2 + $0x28] sm:$0x3]
        %v2089 = vld [vmem:[#allocation2 + $0x30] sm:$0xff]
        %v2090 = vld [vmem:[#allocation2 + $0x38] sm:$0xff]
        %v2091 = vld [vmem:[#allocation2 + $0x40] sm:$0x3]
        %v2092 = vld [vmem:[#allocation2 + $0x48] sm:$0xff]
        %v2093 = vld [vmem:[#allocation2 + $0x50] sm:$0xff]
        %v2094 = vld [vmem:[#allocation2 + $0x58] sm:$0x3]
        %v2095 = vld [vmem:[#allocation2 + $0x60] sm:$0xff]
        %v2096 = vld [vmem:[#allocation2 + $0x68] sm:$0xff]
        %v2097 = vld [vmem:[#allocation2 + $0x70] sm:$0x3]
        %v2098 = vld [vmem:[#allocation2 + $0x78] sm:$0xff]
        %v2099 = vld [vmem:[#allocation2 + $0x80] sm:$0xff]
        %v2100 = vld [vmem:[#allocation2 + $0x88] sm:$0x3]
        %v2101 = vld [vmem:[#allocation2 + $0x90] sm:$0xff]
        %v2102 = vld [vmem:[#allocation2 + $0x98] sm:$0xff]
        %v2103 = vld [vmem:[#allocation2 + $0xa0] sm:$0x3]
        %v2104 = vld [vmem:[#allocation2 + $0xa8] sm:$0xff]
        %v2105 = vld [vmem:[#allocation2 + $0xb0] sm:$0xff]
        %v2106 = vld [vmem:[#allocation2 + $0xb8] sm:$0x3]
        %v2107 = vld [vmem:[#allocation2 + $0xc0] sm:$0xff]
        %v2108 = vld [vmem:[#allocation2 + $0xc8] sm:$0xff]
        %v2109 = vld [vmem:[#allocation2 + $0xd0] sm:$0x3]
        %v2110 = vld [vmem:[#allocation2 + $0xd8] sm:$0xff]
        %v2111 = vld [vmem:[#allocation2 + $0xe0] sm:$0xff]
        %v2112 = vld [vmem:[#allocation2 + $0xe8] sm:$0x3]
        %v2113 = vld [vmem:[#allocation2 + $0xf0] sm:$0xff]
        %v2114 = vld [vmem:[#allocation2 + $0xf8] sm:$0xff]
        %v2115 = vld [vmem:[#allocation2 + $0x100] sm:$0x3]
        %v2116 = vld [vmem:[#allocation2 + $0x108] sm:$0xff]
        %v2117 = vld [vmem:[#allocation2 + $0x110] sm:$0xff]
        %v2118 = vld [vmem:[#allocation2 + $0x118] sm:$0x3]
        %v2119 = vld [vmem:[#allocation2 + $0x120] sm:$0xff]
        %v2120 = vld [vmem:[#allocation2 + $0x128] sm:$0xff]
        %v2121 = vld [vmem:[#allocation2 + $0x130] sm:$0x3]
        %v2122 = vld [vmem:[#allocation2 + $0x138] sm:$0xff]
        %v2123 = vld [vmem:[#allocation2 + $0x140] sm:$0xff]
        %v2124 = vld [vmem:[#allocation2 + $0x148] sm:$0x3]
        %v2125 = vld [vmem:[#allocation2 + $0x150] sm:$0xff]
        %v2126 = vld [vmem:[#allocation2 + $0x158] sm:$0xff]
        %v2127 = vld [vmem:[#allocation2 + $0x160] sm:$0x3]
        %v2128 = vld [vmem:[#allocation2 + $0x168] sm:$0xff]
        %v2129 = vld [vmem:[#allocation2 + $0x170] sm:$0xff]
        %v2130 = vld [vmem:[#allocation2 + $0x178] sm:$0x3]
        %v2131 = vld [vmem:[#allocation2 + $0x180] sm:$0xff]
        %v2132 = vld [vmem:[#allocation2 + $0x188] sm:$0xff]
        %v2133 = vld [vmem:[#allocation2 + $0x190] sm:$0x3]
        %v2134 = vld [vmem:[#allocation2 + $0x198] sm:$0xff]
        %v2135 = vld [vmem:[#allocation2 + $0x1a0] sm:$0xff]
        %v2136 = vld [vmem:[#allocation2 + $0x1a8] sm:$0x3]
        %v2185 = vrot.slane %v2083, 1
        %v2186 = vrot.slane %v2084, 1
        %v2187 = vsel %vm486, %v2185, %v2186
        %v2188 = vrot.slane %v2085, 1
        %v2189 = vsel %vm486, %v2186, %v2188
        %v2190 = vrot.slane %v2086, 1
        %v2191 = vrot.slane %v2087, 1
        %v2192 = vsel %vm486, %v2190, %v2191
        %v2193 = vrot.slane %v2088, 1
        %v2194 = vsel %vm486, %v2191, %v2193
        %v2195 = vrot.slane %v2089, 1
        %v2196 = vrot.slane %v2090, 1
        %v2197 = vsel %vm486, %v2195, %v2196
        %v2198 = vrot.slane %v2091, 1
        %v2199 = vsel %vm486, %v2196, %v2198
        %v2200 = vrot.slane %v2092, 1
        %v2201 = vrot.slane %v2093, 1
        %v2202 = vsel %vm486, %v2200, %v2201
        %v2203 = vrot.slane %v2094, 1
        %v2204 = vsel %vm486, %v2201, %v2203
        %v2205 = vrot.slane %v2095, 1
        %v2206 = vrot.slane %v2096, 1
        %v2207 = vsel %vm486, %v2205, %v2206
        %v2208 = vrot.slane %v2097, 1
        %v2209 = vsel %vm486, %v2206, %v2208
        %v2210 = vrot.slane %v2098, 1
        %v2211 = vrot.slane %v2099, 1
        %v2212 = vsel %vm486, %v2210, %v2211
        %v2213 = vrot.slane %v2100, 1
        %v2214 = vsel %vm486, %v2211, %v2213
        %v2215 = vrot.slane %v2101, 1
        %v2216 = vrot.slane %v2102, 1
        %v2217 = vsel %vm486, %v2215, %v2216
        %v2218 = vrot.slane %v2103, 1
        %v2219 = vsel %vm486, %v2216, %v2218
        %v2220 = vrot.slane %v2104, 1
        %v2221 = vrot.slane %v2105, 1
        %v2222 = vsel %vm486, %v2220, %v2221
        %v2223 = vrot.slane %v2106, 1
        %v2224 = vsel %vm486, %v2221, %v2223
        %v2225 = vrot.slane %v2107, 1
        %v2226 = vrot.slane %v2108, 1
        %v2227 = vsel %vm486, %v2225, %v2226
        %v2228 = vrot.slane %v2109, 1
        %v2229 = vsel %vm486, %v2226, %v2228
        %v2230 = vrot.slane %v2110, 1
        %v2231 = vrot.slane %v2111, 1
        %v2232 = vsel %vm486, %v2230, %v2231
        %v2233 = vrot.slane %v2112, 1
        %v2234 = vsel %vm486, %v2231, %v2233
        %v2235 = vrot.slane %v2113, 1
        %v2236 = vrot.slane %v2114, 1
        %v2237 = vsel %vm486, %v2235, %v2236
        %v2238 = vrot.slane %v2115, 1
        %v2239 = vsel %vm486, %v2236, %v2238
        %v2240 = vrot.slane %v2116, 1
        %v2241 = vrot.slane %v2117, 1
        %v2242 = vsel %vm486, %v2240, %v2241
        %v2243 = vrot.slane %v2118, 1
        %v2244 = vsel %vm486, %v2241, %v2243
        %v2245 = vrot.slane %v2119, 1
        %v2246 = vrot.slane %v2120, 1
        %v2247 = vsel %vm486, %v2245, %v2246
        %v2248 = vrot.slane %v2121, 1
        %v2249 = vsel %vm486, %v2246, %v2248
        %v2250 = vrot.slane %v2122, 1
        %v2251 = vrot.slane %v2123, 1
        %v2252 = vsel %vm486, %v2250, %v2251
        %v2253 = vrot.slane %v2124, 1
        %v2254 = vsel %vm486, %v2251, %v2253
        %v2255 = vrot.slane %v2125, 1
        %v2256 = vrot.slane %v2126, 1
        %v2257 = vsel %vm486, %v2255, %v2256
        %v2258 = vrot.slane %v2127, 1
        %v2259 = vsel %vm486, %v2256, %v2258
        %v2260 = vrot.slane %v2128, 1
        %v2261 = vrot.slane %v2129, 1
        %v2262 = vsel %vm486, %v2260, %v2261
        %v2263 = vrot.slane %v2130, 1
        %v2264 = vsel %vm486, %v2261, %v2263
        %v2297 = vrot.slane %v2083, 2
        %v2298 = vrot.slane %v2084, 2
        %v2299 = vsel %vm599, %v2297, %v2298
        %v2300 = vrot.slane %v2085, 2
        %v2301 = vsel %vm599, %v2298, %v2300
        %v2302 = vrot.slane %v2086, 2
        %v2303 = vrot.slane %v2087, 2
        %v2304 = vsel %vm599, %v2302, %v2303
        %v2305 = vrot.slane %v2088, 2
        %v2306 = vsel %vm599, %v2303, %v2305
        %v2307 = vrot.slane %v2089, 2
        %v2308 = vrot.slane %v2090, 2
        %v2309 = vsel %vm599, %v2307, %v2308
        %v2310 = vrot.slane %v2091, 2
        %v2311 = vsel %vm599, %v2308, %v2310
        %v2312 = vrot.slane %v2092, 2
        %v2313 = vrot.slane %v2093, 2
        %v2314 = vsel %vm599, %v2312, %v2313
        %v2315 = vrot.slane %v2094, 2
        %v2316 = vsel %vm599, %v2313, %v2315
        %v2317 = vrot.slane %v2095, 2
        %v2318 = vrot.slane %v2096, 2
        %v2319 = vsel %vm599, %v2317, %v2318
        %v2320 = vrot.slane %v2097, 2
        %v2321 = vsel %vm599, %v2318, %v2320
        %v2322 = vrot.slane %v2098, 2
        %v2323 = vrot.slane %v2099, 2
        %v2324 = vsel %vm599, %v2322, %v2323
        %v2325 = vrot.slane %v2100, 2
        %v2326 = vsel %vm599, %v2323, %v2325
        %v2327 = vrot.slane %v2101, 2
        %v2328 = vrot.slane %v2102, 2
        %v2329 = vsel %vm599, %v2327, %v2328
        %v2330 = vrot.slane %v2103, 2
        %v2331 = vsel %vm599, %v2328, %v2330
        %v2332 = vrot.slane %v2104, 2
        %v2333 = vrot.slane %v2105, 2
        %v2334 = vsel %vm599, %v2332, %v2333
        %v2335 = vrot.slane %v2106, 2
        %v2336 = vsel %vm599, %v2333, %v2335
        %v2337 = vrot.slane %v2107, 2
        %v2338 = vrot.slane %v2108, 2
        %v2339 = vsel %vm599, %v2337, %v2338
        %v2340 = vrot.slane %v2109, 2
        %v2341 = vsel %vm599, %v2338, %v2340
        %v2342 = vrot.slane %v2110, 2
        %v2343 = vrot.slane %v2111, 2
        %v2344 = vsel %vm599, %v2342, %v2343
        %v2345 = vrot.slane %v2112, 2
        %v2346 = vsel %vm599, %v2343, %v2345
        %v2347 = vrot.slane %v2113, 2
        %v2348 = vrot.slane %v2114, 2
        %v2349 = vsel %vm599, %v2347, %v2348
        %v2350 = vrot.slane %v2115, 2
        %v2351 = vsel %vm599, %v2348, %v2350
        %v2352 = vrot.slane %v2116, 2
        %v2353 = vrot.slane %v2117, 2
        %v2354 = vsel %vm599, %v2352, %v2353
        %v2355 = vrot.slane %v2118, 2
        %v2356 = vsel %vm599, %v2353, %v2355
        %v2357 = vrot.slane %v2119, 2
        %v2358 = vrot.slane %v2120, 2
        %v2359 = vsel %vm599, %v2357, %v2358
        %v2360 = vrot.slane %v2121, 2
        %v2361 = vsel %vm599, %v2358, %v2360
        %v2362 = vrot.slane %v2122, 2
        %v2363 = vrot.slane %v2123, 2
        %v2364 = vsel %vm599, %v2362, %v2363
        %v2365 = vrot.slane %v2124, 2
        %v2366 = vsel %vm599, %v2363, %v2365
        %v2367 = vrot.slane %v2125, 2
        %v2368 = vrot.slane %v2126, 2
        %v2369 = vsel %vm599, %v2367, %v2368
        %v2370 = vrot.slane %v2127, 2
        %v2371 = vsel %vm599, %v2368, %v2370
        %v2372 = vrot.slane %v2128, 2
        %v2373 = vrot.slane %v2129, 2
        %v2374 = vsel %vm599, %v2372, %v2373
        %v2375 = vrot.slane %v2130, 2
        %v2376 = vsel %vm599, %v2373, %v2375
        %v2412 = vrot.slane %v2131, 1
        %v2413 = vrot.slane %v2132, 1
        %v2414 = vsel %vm486, %v2412, %v2413
        %v2415 = vrot.slane %v2133, 1
        %v2416 = vsel %vm486, %v2413, %v2415
        %v2419 = vrot.slane %v2131, 2
        %v2420 = vrot.slane %v2132, 2
        %v2421 = vsel %vm599, %v2419, %v2420
        %v2422 = vrot.slane %v2133, 2
        %v2423 = vsel %vm599, %v2420, %v2422
        %v2429 = vrot.slane %v2134, 1
        %v2430 = vrot.slane %v2135, 1
        %v2431 = vsel %vm486, %v2429, %v2430
        %v2432 = vrot.slane %v2136, 1
        %v2433 = vsel %vm486, %v2430, %v2432
        %v2436 = vrot.slane %v2134, 2
        %v2437 = vrot.slane %v2135, 2
        %v2438 = vsel %vm599, %v2436, %v2437
        %v2439 = vrot.slane %v2136, 2
        %v2440 = vsel %vm599, %v2437, %v2439
        %v2443 = vld [vmem:[#allocation3] sm:$0xff]
        %v2444 = vld [vmem:[#allocation3 + $0x8] sm:$0xff]
        %v2445 = vld [vmem:[#allocation3 + $0x10] sm:$0xff]
        %v2446 = vld [vmem:[#allocation3 + $0x18] sm:$0xff]
        %v2447 = vld [vmem:[#allocation3 + $0x20] sm:$0xff]
        %v2448 = vld [vmem:[#allocation3 + $0x28] sm:$0xff]
        %v2449 = vld [vmem:[#allocation3 + $0x30] sm:$0xff]
        %v2450 = vld [vmem:[#allocation3 + $0x38] sm:$0xff]
        %v2451 = vld [vmem:[#allocation3 + $0x40] sm:$0xff]
        %v2452 = vld [vmem:[#allocation3 + $0x48] sm:$0xff]
        %v2453 = vld [vmem:[#allocation3 + $0x50] sm:$0xff]
        %v2454 = vld [vmem:[#allocation3 + $0x58] sm:$0xff]
        %v2455 = vld [vmem:[#allocation3 + $0x60] sm:$0xff]
        %v2456 = vld [vmem:[#allocation3 + $0x68] sm:$0xff]
        %v2457 = vld [vmem:[#allocation3 + $0x70] sm:$0xff]
        %v2458 = vld [vmem:[#allocation3 + $0x78] sm:$0xff]
        %v2459 = vld [vmem:[#allocation3 + $0x80] sm:$0xff]
        %v2460 = vld [vmem:[#allocation3 + $0x88] sm:$0xff]
        %v2461 = vld [vmem:[#allocation3 + $0x90] sm:$0xff]
        %v2462 = vld [vmem:[#allocation3 + $0x98] sm:$0xff]
        %v2463 = vld [vmem:[#allocation3 + $0xa0] sm:$0xff]
        %v2464 = vld [vmem:[#allocation3 + $0xa8] sm:$0xff]
        %v2465 = vld [vmem:[#allocation3 + $0xb0] sm:$0xff]
        %v2466 = vld [vmem:[#allocation3 + $0xb8] sm:$0xff]
        %v2467 = vld [vmem:[#allocation3 + $0xc0] sm:$0xff]
        %v2468 = vld [vmem:[#allocation3 + $0xc8] sm:$0xff]
        %v2469 = vld [vmem:[#allocation3 + $0xd0] sm:$0xff]
        %v2470 = vld [vmem:[#allocation3 + $0xd8] sm:$0xff]
        %v2471 = vld [vmem:[#allocation3 + $0xe0] sm:$0xff]
        %v2472 = vld [vmem:[#allocation3 + $0xe8] sm:$0xff]
        %v2473 = vld [vmem:[#allocation3 + $0xf0] sm:$0xff]
        %v2474 = vld [vmem:[#allocation3 + $0xf8] sm:$0xff]
        %v2475 = vld [vmem:[#allocation3 + $0x100] sm:$0xff]
        %v2476 = vld [vmem:[#allocation3 + $0x108] sm:$0xff]
        %v2477 = vld [vmem:[#allocation3 + $0x110] sm:$0xff]
        %v2478 = vld [vmem:[#allocation3 + $0x118] sm:$0xff]
        %v2479 = vld [vmem:[#allocation3 + $0x120] sm:$0xff]
        %v2480 = vld [vmem:[#allocation3 + $0x128] sm:$0xff]
        %v2481 = vld [vmem:[#allocation3 + $0x130] sm:$0xff]
        %v2482 = vld [vmem:[#allocation3 + $0x138] sm:$0xff]
        %v2483 = vld [vmem:[#allocation3 + $0x140] sm:$0xff]
        %v2484 = vld [vmem:[#allocation3 + $0x148] sm:$0xff]
        %v2485 = vld [vmem:[#allocation3 + $0x150] sm:$0xff]
        %v2486 = vld [vmem:[#allocation3 + $0x158] sm:$0xff]
        %v2487 = vld [vmem:[#allocation3 + $0x160] sm:$0xff]
        %v2488 = vld [vmem:[#allocation3 + $0x168] sm:$0xff]
        %v2489 = vld [vmem:[#allocation3 + $0x170] sm:$0xff]
        %v2490 = vld [vmem:[#allocation3 + $0x178] sm:$0xff]
        %v2491 = vld [vmem:[#allocation3 + $0x180] sm:$0xff]
        %v2492 = vld [vmem:[#allocation3 + $0x188] sm:$0xff]
        %v2493 = vld [vmem:[#allocation3 + $0x190] sm:$0xff]
        %v2494 = vld [vmem:[#allocation3 + $0x198] sm:$0xff]
        %v2495 = vld [vmem:[#allocation3 + $0x1a0] sm:$0xff]
        %v2496 = vld [vmem:[#allocation3 + $0x1a8] sm:$0xff]
        %v2497 = vld [vmem:[#allocation3 + $0x1b0] sm:$0xff]
        %v2498 = vld [vmem:[#allocation3 + $0x1b8] sm:$0xff]
        %v2499 = vld [vmem:[#allocation3 + $0x1c0] sm:$0xff]
        %v2500 = vld [vmem:[#allocation3 + $0x1c8] sm:$0xff]
        %v2501 = vld [vmem:[#allocation3 + $0x1d0] sm:$0xff]
        %v2502 = vld [vmem:[#allocation3 + $0x1d8] sm:$0xff]
        %v2503 = vld [vmem:[#allocation3 + $0x1e0] sm:$0xff]
        %v2504 = vld [vmem:[#allocation3 + $0x1e8] sm:$0xff]
        %v2505 = vld [vmem:[#allocation3 + $0x1f0] sm:$0xff]
        %v2506 = vld [vmem:[#allocation3 + $0x1f8] sm:$0xff]
        %v2507 = vld [vmem:[#allocation3 + $0x200] sm:$0xff]
        %v2508 = vld [vmem:[#allocation3 + $0x208] sm:$0xff]
        %v2509 = vld [vmem:[#allocation3 + $0x210] sm:$0xff]
        %v2510 = vld [vmem:[#allocation3 + $0x218] sm:$0xff]
        %v2511 = vld [vmem:[#allocation3 + $0x220] sm:$0xff]
        %v2512 = vld [vmem:[#allocation3 + $0x228] sm:$0xff]
        %v2513 = vld [vmem:[#allocation3 + $0x230] sm:$0xff]
        %v2514 = vld [vmem:[#allocation3 + $0x238] sm:$0xff]
        %v2515 = vld [vmem:[#allocation3 + $0x240] sm:$0xff]
        %v2516 = vld [vmem:[#allocation3 + $0x248] sm:$0xff]
        %v2517 = vld [vmem:[#allocation3 + $0x250] sm:$0xff]
        %v2518 = vld [vmem:[#allocation3 + $0x258] sm:$0xff]
        %v2519 = vld [vmem:[#allocation3 + $0x260] sm:$0xff]
        %v2520 = vld [vmem:[#allocation3 + $0x268] sm:$0xff]
        %v2521 = vld [vmem:[#allocation3 + $0x270] sm:$0xff]
        %v2522 = vld [vmem:[#allocation3 + $0x278] sm:$0xff]
        %v2523 = vld [vmem:[#allocation3 + $0x280] sm:$0xff]
        %v2524 = vld [vmem:[#allocation3 + $0x288] sm:$0xff]
        %v2525 = vld [vmem:[#allocation3 + $0x290] sm:$0xff]
        %v2526 = vld [vmem:[#allocation3 + $0x298] sm:$0xff]
        %v2527 = vld [vmem:[#allocation3 + $0x2a0] sm:$0xff]
        %v2528 = vld [vmem:[#allocation3 + $0x2a8] sm:$0xff]
        %v2529 = vld [vmem:[#allocation3 + $0x2b0] sm:$0xff]
        %v2530 = vld [vmem:[#allocation3 + $0x2b8] sm:$0xff]
        %v2531 = vld [vmem:[#allocation3 + $0x2c0] sm:$0xff]
        %v2532 = vld [vmem:[#allocation3 + $0x2c8] sm:$0xff]
        %v2533 = vld [vmem:[#allocation3 + $0x2d0] sm:$0xff]
        %v2534 = vld [vmem:[#allocation3 + $0x2d8] sm:$0xff]
        %v2535 = vld [vmem:[#allocation3 + $0x2e0] sm:$0xff]
        %v2536 = vld [vmem:[#allocation3 + $0x2e8] sm:$0xff]
        %v2537 = vld [vmem:[#allocation3 + $0x2f0] sm:$0xff]
        %v2538 = vld [vmem:[#allocation3 + $0x2f8] sm:$0xff]
        %v2539 = vld [vmem:[#allocation3 + $0x300] sm:$0xff]
        %v2540 = vld [vmem:[#allocation3 + $0x308] sm:$0xff]
        %v2541 = vld [vmem:[#allocation3 + $0x310] sm:$0xff]
        %v2542 = vld [vmem:[#allocation3 + $0x318] sm:$0xff]
        %v2543 = vld [vmem:[#allocation3 + $0x320] sm:$0xff]
        %v2544 = vld [vmem:[#allocation3 + $0x328] sm:$0xff]
        %v2545 = vld [vmem:[#allocation3 + $0x330] sm:$0xff]
        %v2546 = vld [vmem:[#allocation3 + $0x338] sm:$0xff]
        %v2547 = vld [vmem:[#allocation3 + $0x340] sm:$0xff]
        %v2548 = vld [vmem:[#allocation3 + $0x348] sm:$0xff]
        %v2549 = vld [vmem:[#allocation3 + $0x350] sm:$0xff]
        %v2550 = vld [vmem:[#allocation3 + $0x358] sm:$0xff]
        %v2551 = vld [vmem:[#allocation3 + $0x360] sm:$0xff]
        %v2552 = vld [vmem:[#allocation3 + $0x368] sm:$0xff]
        %v2553 = vld [vmem:[#allocation3 + $0x370] sm:$0xff]
        %v2554 = vld [vmem:[#allocation3 + $0x378] sm:$0xff]
        %v2555 = vld [vmem:[#allocation3 + $0x380] sm:$0xff]
        %v2556 = vld [vmem:[#allocation3 + $0x388] sm:$0xff]
        %v2557 = vld [vmem:[#allocation3 + $0x390] sm:$0xff]
        %v2558 = vld [vmem:[#allocation3 + $0x398] sm:$0xff]
        %v2559 = vld [vmem:[#allocation3 + $0x3a0] sm:$0xff]
        %v2560 = vld [vmem:[#allocation3 + $0x3a8] sm:$0xff]
        %v2561 = vld [vmem:[#allocation3 + $0x3b0] sm:$0xff]
        %v2562 = vld [vmem:[#allocation3 + $0x3b8] sm:$0xff]
        %v2563 = vld [vmem:[#allocation3 + $0x3c0] sm:$0xff]
        %v2564 = vld [vmem:[#allocation3 + $0x3c8] sm:$0xff]
        %v2565 = vld [vmem:[#allocation3 + $0x3d0] sm:$0xff]
        %v2566 = vld [vmem:[#allocation3 + $0x3d8] sm:$0xff]
        %v2567 = vld [vmem:[#allocation3 + $0x3e0] sm:$0xff]
        %v2568 = vld [vmem:[#allocation3 + $0x3e8] sm:$0xff]
        %v2569 = vld [vmem:[#allocation3 + $0x3f0] sm:$0xff]
        %v2570 = vld [vmem:[#allocation3 + $0x3f8] sm:$0xff]
        %v2571 = vld [vmem:[#allocation3 + $0x400] sm:$0xff]
        %v2572 = vld [vmem:[#allocation3 + $0x408] sm:$0xff]
        %v2573 = vld [vmem:[#allocation3 + $0x410] sm:$0xff]
        %v2574 = vld [vmem:[#allocation3 + $0x418] sm:$0xff]
        %v2575 = vld [vmem:[#allocation3 + $0x420] sm:$0xff]
        %v2576 = vld [vmem:[#allocation3 + $0x428] sm:$0xff]
        %v2577 = vld [vmem:[#allocation3 + $0x430] sm:$0xff]
        %v2578 = vld [vmem:[#allocation3 + $0x438] sm:$0xff]
        %v2579 = vld [vmem:[#allocation3 + $0x440] sm:$0xff]
        %v2580 = vld [vmem:[#allocation3 + $0x448] sm:$0xff]
        %v2581 = vld [vmem:[#allocation3 + $0x450] sm:$0xff]
        %v2582 = vld [vmem:[#allocation3 + $0x458] sm:$0xff]
        %v2583 = vld [vmem:[#allocation3 + $0x460] sm:$0xff]
        %v2584 = vld [vmem:[#allocation3 + $0x468] sm:$0xff]
        %v2585 = vld [vmem:[#allocation3 + $0x470] sm:$0xff]
        %v2586 = vld [vmem:[#allocation3 + $0x478] sm:$0xff]
        %v2587 = vld [vmem:[%s4] sm:$0x1]
        %v2589 = vperm.slane %v2587, 0
        %2591 = vmatpush.msra.mxu0 %v2458
        %2592 = vmatpush.msra.mxu0 %v2457
        %2593 = vmatpush.msra.mxu0 %v2456
        %2594 = vmatpush.msra.mxu0 %v2455
        %2595 = vmatpush.msra.mxu0 %v2454
        %2596 = vmatpush.msra.mxu0 %v2453
        %2597 = vmatpush.msra.mxu0 %v2452
        %2598 = vmatpush.msra.mxu0 %v2451
        %2599 = vmatpush.msra.mxu0 %v2450
        %2600 = vmatpush.msra.mxu0 %v2449
        %2601 = vmatpush.msra.mxu0 %v2448
        %2602 = vmatpush.msra.mxu0 %v2447
        %2603 = vmatpush.msra.mxu0 %v2446
        %2604 = vmatpush.msra.mxu0 %v2445
        %2605 = vmatpush.msra.mxu0 %v2444
        %2606 = vmatpush.msra.mxu0 %v2443
        %2607 = vmatmul.f32.gmra.mxu0 %v2083
        %v2608 = vpop.f32.mrf.mxu0
        %v2609 = vadd.f32 %v2589, %v2608
        %2610 = vmatmul.f32.gmra.mxu0 %v2084
        %v2611 = vpop.f32.mrf.mxu0
        %v2612 = vadd.f32 %v2589, %v2611
        %2613 = vmatmul.f32.gmra.mxu0 %v2086
        %v2614 = vpop.f32.mrf.mxu0
        %v2615 = vadd.f32 %v2589, %v2614
        %2616 = vmatmul.f32.gmra.mxu0 %v2087
        %v2617 = vpop.f32.mrf.mxu0
        %v2618 = vadd.f32 %v2589, %v2617
        %2619 = vmatmul.f32.gmra.mxu0 %v2089
        %v2620 = vpop.f32.mrf.mxu0
        %v2621 = vadd.f32 %v2589, %v2620
        %2622 = vmatmul.f32.gmra.mxu0 %v2090
        %v2623 = vpop.f32.mrf.mxu0
        %v2624 = vadd.f32 %v2589, %v2623
        %2625 = vmatmul.f32.gmra.mxu0 %v2092
        %v2626 = vpop.f32.mrf.mxu0
        %v2627 = vadd.f32 %v2589, %v2626
        %2628 = vmatmul.f32.gmra.mxu0 %v2093
        %v2629 = vpop.f32.mrf.mxu0
        %v2630 = vadd.f32 %v2589, %v2629
        %2631 = vmatmul.f32.gmra.mxu0 %v2095
        %v2632 = vpop.f32.mrf.mxu0
        %v2633 = vadd.f32 %v2589, %v2632
        %2634 = vmatmul.f32.gmra.mxu0 %v2096
        %v2635 = vpop.f32.mrf.mxu0
        %v2636 = vadd.f32 %v2589, %v2635
        %2637 = vmatmul.f32.gmra.mxu0 %v2098
        %v2638 = vpop.f32.mrf.mxu0
        %v2639 = vadd.f32 %v2589, %v2638
        %2640 = vmatmul.f32.gmra.mxu0 %v2099
        %v2641 = vpop.f32.mrf.mxu0
        %v2642 = vadd.f32 %v2589, %v2641
        %2643 = vmatmul.f32.gmra.mxu0 %v2101
        %v2644 = vpop.f32.mrf.mxu0
        %v2645 = vadd.f32 %v2589, %v2644
        %2646 = vmatmul.f32.gmra.mxu0 %v2102
        %v2647 = vpop.f32.mrf.mxu0
        %v2648 = vadd.f32 %v2589, %v2647
        %2649 = vmatmul.f32.gmra.mxu0 %v2104
        %v2650 = vpop.f32.mrf.mxu0
        %v2651 = vadd.f32 %v2589, %v2650
        %2652 = vmatmul.f32.gmra.mxu0 %v2105
        %v2653 = vpop.f32.mrf.mxu0
        %v2654 = vadd.f32 %v2589, %v2653
        %2655 = vmatmul.f32.gmra.mxu0 %v2107
        %v2656 = vpop.f32.mrf.mxu0
        %v2657 = vadd.f32 %v2589, %v2656
        %2658 = vmatmul.f32.gmra.mxu0 %v2108
        %v2659 = vpop.f32.mrf.mxu0
        %v2660 = vadd.f32 %v2589, %v2659
        %2661 = vmatmul.f32.gmra.mxu0 %v2110
        %v2662 = vpop.f32.mrf.mxu0
        %v2663 = vadd.f32 %v2589, %v2662
        %2664 = vmatmul.f32.gmra.mxu0 %v2111
        %v2665 = vpop.f32.mrf.mxu0
        %v2666 = vadd.f32 %v2589, %v2665
        %2667 = vmatmul.f32.gmra.mxu0 %v2113
        %v2668 = vpop.f32.mrf.mxu0
        %v2669 = vadd.f32 %v2589, %v2668
        %2670 = vmatmul.f32.gmra.mxu0 %v2114
        %v2671 = vpop.f32.mrf.mxu0
        %v2672 = vadd.f32 %v2589, %v2671
        %2673 = vmatmul.f32.gmra.mxu0 %v2116
        %v2674 = vpop.f32.mrf.mxu0
        %v2675 = vadd.f32 %v2589, %v2674
        %2676 = vmatmul.f32.gmra.mxu0 %v2117
        %v2677 = vpop.f32.mrf.mxu0
        %v2678 = vadd.f32 %v2589, %v2677
        %2679 = vmatmul.f32.gmra.mxu0 %v2119
        %v2680 = vpop.f32.mrf.mxu0
        %v2681 = vadd.f32 %v2589, %v2680
        %2682 = vmatmul.f32.gmra.mxu0 %v2120
        %v2683 = vpop.f32.mrf.mxu0
        %v2684 = vadd.f32 %v2589, %v2683
        %2685 = vmatmul.f32.gmra.mxu0 %v2122
        %v2686 = vpop.f32.mrf.mxu0
        %v2687 = vadd.f32 %v2589, %v2686
        %2688 = vmatmul.f32.gmra.mxu0 %v2123
        %v2689 = vpop.f32.mrf.mxu0
        %v2690 = vadd.f32 %v2589, %v2689
        %2691 = vmatmul.f32.gmra.mxu0 %v2125
        %v2692 = vpop.f32.mrf.mxu0
        %v2693 = vadd.f32 %v2589, %v2692
        %2694 = vmatmul.f32.gmra.mxu0 %v2126
        %v2695 = vpop.f32.mrf.mxu0
        %v2696 = vadd.f32 %v2589, %v2695
        %2697 = vmatmul.f32.gmra.mxu0 %v2128
        %v2698 = vpop.f32.mrf.mxu0
        %v2699 = vadd.f32 %v2589, %v2698
        %2700 = vmatmul.f32.gmra.mxu0 %v2129
        %v2701 = vpop.f32.mrf.mxu0
        %v2702 = vadd.f32 %v2589, %v2701
        %2703 = vdwg.mxu0
        %2704 = vmatpush.msra.mxu0 %v2474
        %2705 = vmatpush.msra.mxu0 %v2473
        %2706 = vmatpush.msra.mxu0 %v2472
        %2707 = vmatpush.msra.mxu0 %v2471
        %2708 = vmatpush.msra.mxu0 %v2470
        %2709 = vmatpush.msra.mxu0 %v2469
        %2710 = vmatpush.msra.mxu0 %v2468
        %2711 = vmatpush.msra.mxu0 %v2467
        %2712 = vmatpush.msra.mxu0 %v2466
        %2713 = vmatpush.msra.mxu0 %v2465
        %2714 = vmatpush.msra.mxu0 %v2464
        %2715 = vmatpush.msra.mxu0 %v2463
        %2716 = vmatpush.msra.mxu0 %v2462
        %2717 = vmatpush.msra.mxu0 %v2461
        %2718 = vmatpush.msra.mxu0 %v2460
        %2719 = vmatpush.msra.mxu0 %v2459
        %2720 = vmatmul.f32.gmra.mxu0 %v2187
        %v2721 = vpop.f32.mrf.mxu0
        %v2722 = vadd.f32 %v2609, %v2721
        %2723 = vmatmul.f32.gmra.mxu0 %v2189
        %v2724 = vpop.f32.mrf.mxu0
        %v2725 = vadd.f32 %v2612, %v2724
        %2726 = vmatmul.f32.gmra.mxu0 %v2192
        %v2727 = vpop.f32.mrf.mxu0
        %v2728 = vadd.f32 %v2615, %v2727
        %2729 = vmatmul.f32.gmra.mxu0 %v2194
        %v2730 = vpop.f32.mrf.mxu0
        %v2731 = vadd.f32 %v2618, %v2730
        %2732 = vmatmul.f32.gmra.mxu0 %v2197
        %v2733 = vpop.f32.mrf.mxu0
        %v2734 = vadd.f32 %v2621, %v2733
        %2735 = vmatmul.f32.gmra.mxu0 %v2199
        %v2736 = vpop.f32.mrf.mxu0
        %v2737 = vadd.f32 %v2624, %v2736
        %2738 = vmatmul.f32.gmra.mxu0 %v2202
        %v2739 = vpop.f32.mrf.mxu0
        %v2740 = vadd.f32 %v2627, %v2739
        %2741 = vmatmul.f32.gmra.mxu0 %v2204
        %v2742 = vpop.f32.mrf.mxu0
        %v2743 = vadd.f32 %v2630, %v2742
        %2744 = vmatmul.f32.gmra.mxu0 %v2207
        %v2745 = vpop.f32.mrf.mxu0
        %v2746 = vadd.f32 %v2633, %v2745
        %2747 = vmatmul.f32.gmra.mxu0 %v2209
        %v2748 = vpop.f32.mrf.mxu0
        %v2749 = vadd.f32 %v2636, %v2748
        %2750 = vmatmul.f32.gmra.mxu0 %v2212
        %v2751 = vpop.f32.mrf.mxu0
        %v2752 = vadd.f32 %v2639, %v2751
        %2753 = vmatmul.f32.gmra.mxu0 %v2214
        %v2754 = vpop.f32.mrf.mxu0
        %v2755 = vadd.f32 %v2642, %v2754
        %2756 = vmatmul.f32.gmra.mxu0 %v2217
        %v2757 = vpop.f32.mrf.mxu0
        %v2758 = vadd.f32 %v2645, %v2757
        %2759 = vmatmul.f32.gmra.mxu0 %v2219
        %v2760 = vpop.f32.mrf.mxu0
        %v2761 = vadd.f32 %v2648, %v2760
        %2762 = vmatmul.f32.gmra.mxu0 %v2222
        %v2763 = vpop.f32.mrf.mxu0
        %v2764 = vadd.f32 %v2651, %v2763
        %2765 = vmatmul.f32.gmra.mxu0 %v2224
        %v2766 = vpop.f32.mrf.mxu0
        %v2767 = vadd.f32 %v2654, %v2766
        %2768 = vmatmul.f32.gmra.mxu0 %v2227
        %v2769 = vpop.f32.mrf.mxu0
        %v2770 = vadd.f32 %v2657, %v2769
        %2771 = vmatmul.f32.gmra.mxu0 %v2229
        %v2772 = vpop.f32.mrf.mxu0
        %v2773 = vadd.f32 %v2660, %v2772
        %2774 = vmatmul.f32.gmra.mxu0 %v2232
        %v2775 = vpop.f32.mrf.mxu0
        %v2776 = vadd.f32 %v2663, %v2775
        %2777 = vmatmul.f32.gmra.mxu0 %v2234
        %v2778 = vpop.f32.mrf.mxu0
        %v2779 = vadd.f32 %v2666, %v2778
        %2780 = vmatmul.f32.gmra.mxu0 %v2237
        %v2781 = vpop.f32.mrf.mxu0
        %v2782 = vadd.f32 %v2669, %v2781
        %2783 = vmatmul.f32.gmra.mxu0 %v2239
        %v2784 = vpop.f32.mrf.mxu0
        %v2785 = vadd.f32 %v2672, %v2784
        %2786 = vmatmul.f32.gmra.mxu0 %v2242
        %v2787 = vpop.f32.mrf.mxu0
        %v2788 = vadd.f32 %v2675, %v2787
        %2789 = vmatmul.f32.gmra.mxu0 %v2244
        %v2790 = vpop.f32.mrf.mxu0
        %v2791 = vadd.f32 %v2678, %v2790
        %2792 = vmatmul.f32.gmra.mxu0 %v2247
        %v2793 = vpop.f32.mrf.mxu0
        %v2794 = vadd.f32 %v2681, %v2793
        %2795 = vmatmul.f32.gmra.mxu0 %v2249
        %v2796 = vpop.f32.mrf.mxu0
        %v2797 = vadd.f32 %v2684, %v2796
        %2798 = vmatmul.f32.gmra.mxu0 %v2252
        %v2799 = vpop.f32.mrf.mxu0
        %v2800 = vadd.f32 %v2687, %v2799
        %2801 = vmatmul.f32.gmra.mxu0 %v2254
        %v2802 = vpop.f32.mrf.mxu0
        %v2803 = vadd.f32 %v2690, %v2802
        %2804 = vmatmul.f32.gmra.mxu0 %v2257
        %v2805 = vpop.f32.mrf.mxu0
        %v2806 = vadd.f32 %v2693, %v2805
        %2807 = vmatmul.f32.gmra.mxu0 %v2259
        %v2808 = vpop.f32.mrf.mxu0
        %v2809 = vadd.f32 %v2696, %v2808
        %2810 = vmatmul.f32.gmra.mxu0 %v2262
        %v2811 = vpop.f32.mrf.mxu0
        %v2812 = vadd.f32 %v2699, %v2811
        %2813 = vmatmul.f32.gmra.mxu0 %v2264
        %v2814 = vpop.f32.mrf.mxu0
        %v2815 = vadd.f32 %v2702, %v2814
        %2816 = vdwg.mxu0
        %2817 = vmatpush.msra.mxu0 %v2490
        %2818 = vmatpush.msra.mxu0 %v2489
        %2819 = vmatpush.msra.mxu0 %v2488
        %2820 = vmatpush.msra.mxu0 %v2487
        %2821 = vmatpush.msra.mxu0 %v2486
        %2822 = vmatpush.msra.mxu0 %v2485
        %2823 = vmatpush.msra.mxu0 %v2484
        %2824 = vmatpush.msra.mxu0 %v2483
        %2825 = vmatpush.msra.mxu0 %v2482
        %2826 = vmatpush.msra.mxu0 %v2481
        %2827 = vmatpush.msra.mxu0 %v2480
        %2828 = vmatpush.msra.mxu0 %v2479
        %2829 = vmatpush.msra.mxu0 %v2478
        %2830 = vmatpush.msra.mxu0 %v2477
        %2831 = vmatpush.msra.mxu0 %v2476
        %2832 = vmatpush.msra.mxu0 %v2475
        %2833 = vmatmul.f32.gmra.mxu0 %v2299
        %v2834 = vpop.f32.mrf.mxu0
        %v2835 = vadd.f32 %v2722, %v2834
        %2836 = vmatmul.f32.gmra.mxu0 %v2301
        %v2837 = vpop.f32.mrf.mxu0
        %v2838 = vadd.f32 %v2725, %v2837
        %2839 = vmatmul.f32.gmra.mxu0 %v2304
        %v2840 = vpop.f32.mrf.mxu0
        %v2841 = vadd.f32 %v2728, %v2840
        %2842 = vmatmul.f32.gmra.mxu0 %v2306
        %v2843 = vpop.f32.mrf.mxu0
        %v2844 = vadd.f32 %v2731, %v2843
        %2845 = vmatmul.f32.gmra.mxu0 %v2309
        %v2846 = vpop.f32.mrf.mxu0
        %v2847 = vadd.f32 %v2734, %v2846
        %2848 = vmatmul.f32.gmra.mxu0 %v2311
        %v2849 = vpop.f32.mrf.mxu0
        %v2850 = vadd.f32 %v2737, %v2849
        %2851 = vmatmul.f32.gmra.mxu0 %v2314
        %v2852 = vpop.f32.mrf.mxu0
        %v2853 = vadd.f32 %v2740, %v2852
        %2854 = vmatmul.f32.gmra.mxu0 %v2316
        %v2855 = vpop.f32.mrf.mxu0
        %v2856 = vadd.f32 %v2743, %v2855
        %2857 = vmatmul.f32.gmra.mxu0 %v2319
        %v2858 = vpop.f32.mrf.mxu0
        %v2859 = vadd.f32 %v2746, %v2858
        %2860 = vmatmul.f32.gmra.mxu0 %v2321
        %v2861 = vpop.f32.mrf.mxu0
        %v2862 = vadd.f32 %v2749, %v2861
        %2863 = vmatmul.f32.gmra.mxu0 %v2324
        %v2864 = vpop.f32.mrf.mxu0
        %v2865 = vadd.f32 %v2752, %v2864
        %2866 = vmatmul.f32.gmra.mxu0 %v2326
        %v2867 = vpop.f32.mrf.mxu0
        %v2868 = vadd.f32 %v2755, %v2867
        %2869 = vmatmul.f32.gmra.mxu0 %v2329
        %v2870 = vpop.f32.mrf.mxu0
        %v2871 = vadd.f32 %v2758, %v2870
        %2872 = vmatmul.f32.gmra.mxu0 %v2331
        %v2873 = vpop.f32.mrf.mxu0
        %v2874 = vadd.f32 %v2761, %v2873
        %2875 = vmatmul.f32.gmra.mxu0 %v2334
        %v2876 = vpop.f32.mrf.mxu0
        %v2877 = vadd.f32 %v2764, %v2876
        %2878 = vmatmul.f32.gmra.mxu0 %v2336
        %v2879 = vpop.f32.mrf.mxu0
        %v2880 = vadd.f32 %v2767, %v2879
        %2881 = vmatmul.f32.gmra.mxu0 %v2339
        %v2882 = vpop.f32.mrf.mxu0
        %v2883 = vadd.f32 %v2770, %v2882
        %2884 = vmatmul.f32.gmra.mxu0 %v2341
        %v2885 = vpop.f32.mrf.mxu0
        %v2886 = vadd.f32 %v2773, %v2885
        %2887 = vmatmul.f32.gmra.mxu0 %v2344
        %v2888 = vpop.f32.mrf.mxu0
        %v2889 = vadd.f32 %v2776, %v2888
        %2890 = vmatmul.f32.gmra.mxu0 %v2346
        %v2891 = vpop.f32.mrf.mxu0
        %v2892 = vadd.f32 %v2779, %v2891
        %2893 = vmatmul.f32.gmra.mxu0 %v2349
        %v2894 = vpop.f32.mrf.mxu0
        %v2895 = vadd.f32 %v2782, %v2894
        %2896 = vmatmul.f32.gmra.mxu0 %v2351
        %v2897 = vpop.f32.mrf.mxu0
        %v2898 = vadd.f32 %v2785, %v2897
        %2899 = vmatmul.f32.gmra.mxu0 %v2354
        %v2900 = vpop.f32.mrf.mxu0
        %v2901 = vadd.f32 %v2788, %v2900
        %2902 = vmatmul.f32.gmra.mxu0 %v2356
        %v2903 = vpop.f32.mrf.mxu0
        %v2904 = vadd.f32 %v2791, %v2903
        %2905 = vmatmul.f32.gmra.mxu0 %v2359
        %v2906 = vpop.f32.mrf.mxu0
        %v2907 = vadd.f32 %v2794, %v2906
        %2908 = vmatmul.f32.gmra.mxu0 %v2361
        %v2909 = vpop.f32.mrf.mxu0
        %v2910 = vadd.f32 %v2797, %v2909
        %2911 = vmatmul.f32.gmra.mxu0 %v2364
        %v2912 = vpop.f32.mrf.mxu0
        %v2913 = vadd.f32 %v2800, %v2912
        %2914 = vmatmul.f32.gmra.mxu0 %v2366
        %v2915 = vpop.f32.mrf.mxu0
        %v2916 = vadd.f32 %v2803, %v2915
        %2917 = vmatmul.f32.gmra.mxu0 %v2369
        %v2918 = vpop.f32.mrf.mxu0
        %v2919 = vadd.f32 %v2806, %v2918
        %2920 = vmatmul.f32.gmra.mxu0 %v2371
        %v2921 = vpop.f32.mrf.mxu0
        %v2922 = vadd.f32 %v2809, %v2921
        %2923 = vmatmul.f32.gmra.mxu0 %v2374
        %v2924 = vpop.f32.mrf.mxu0
        %v2925 = vadd.f32 %v2812, %v2924
        %2926 = vmatmul.f32.gmra.mxu0 %v2376
        %v2927 = vpop.f32.mrf.mxu0
        %v2928 = vadd.f32 %v2815, %v2927
        %2929 = vdwg.mxu0
        %2930 = vmatpush.msra.mxu0 %v2506
        %2931 = vmatpush.msra.mxu0 %v2505
        %2932 = vmatpush.msra.mxu0 %v2504
        %2933 = vmatpush.msra.mxu0 %v2503
        %2934 = vmatpush.msra.mxu0 %v2502
        %2935 = vmatpush.msra.mxu0 %v2501
        %2936 = vmatpush.msra.mxu0 %v2500
        %2937 = vmatpush.msra.mxu0 %v2499
        %2938 = vmatpush.msra.mxu0 %v2498
        %2939 = vmatpush.msra.mxu0 %v2497
        %2940 = vmatpush.msra.mxu0 %v2496
        %2941 = vmatpush.msra.mxu0 %v2495
        %2942 = vmatpush.msra.mxu0 %v2494
        %2943 = vmatpush.msra.mxu0 %v2493
        %2944 = vmatpush.msra.mxu0 %v2492
        %2945 = vmatpush.msra.mxu0 %v2491
        %2946 = vmatmul.f32.gmra.mxu0 %v2086
        %v2947 = vpop.f32.mrf.mxu0
        %v2948 = vadd.f32 %v2835, %v2947
        %2949 = vmatmul.f32.gmra.mxu0 %v2087
        %v2950 = vpop.f32.mrf.mxu0
        %v2951 = vadd.f32 %v2838, %v2950
        %2952 = vmatmul.f32.gmra.mxu0 %v2089
        %v2953 = vpop.f32.mrf.mxu0
        %v2954 = vadd.f32 %v2841, %v2953
        %2955 = vmatmul.f32.gmra.mxu0 %v2090
        %v2956 = vpop.f32.mrf.mxu0
        %v2957 = vadd.f32 %v2844, %v2956
        %2958 = vmatmul.f32.gmra.mxu0 %v2092
        %v2959 = vpop.f32.mrf.mxu0
        %v2960 = vadd.f32 %v2847, %v2959
        %2961 = vmatmul.f32.gmra.mxu0 %v2093
        %v2962 = vpop.f32.mrf.mxu0
        %v2963 = vadd.f32 %v2850, %v2962
        %2964 = vmatmul.f32.gmra.mxu0 %v2095
        %v2965 = vpop.f32.mrf.mxu0
        %v2966 = vadd.f32 %v2853, %v2965
        %2967 = vmatmul.f32.gmra.mxu0 %v2096
        %v2968 = vpop.f32.mrf.mxu0
        %v2969 = vadd.f32 %v2856, %v2968
        %2970 = vmatmul.f32.gmra.mxu0 %v2098
        %v2971 = vpop.f32.mrf.mxu0
        %v2972 = vadd.f32 %v2859, %v2971
        %2973 = vmatmul.f32.gmra.mxu0 %v2099
        %v2974 = vpop.f32.mrf.mxu0
        %v2975 = vadd.f32 %v2862, %v2974
        %2976 = vmatmul.f32.gmra.mxu0 %v2101
        %v2977 = vpop.f32.mrf.mxu0
        %v2978 = vadd.f32 %v2865, %v2977
        %2979 = vmatmul.f32.gmra.mxu0 %v2102
        %v2980 = vpop.f32.mrf.mxu0
        %v2981 = vadd.f32 %v2868, %v2980
        %2982 = vmatmul.f32.gmra.mxu0 %v2104
        %v2983 = vpop.f32.mrf.mxu0
        %v2984 = vadd.f32 %v2871, %v2983
        %2985 = vmatmul.f32.gmra.mxu0 %v2105
        %v2986 = vpop.f32.mrf.mxu0
        %v2987 = vadd.f32 %v2874, %v2986
        %2988 = vmatmul.f32.gmra.mxu0 %v2107
        %v2989 = vpop.f32.mrf.mxu0
        %v2990 = vadd.f32 %v2877, %v2989
        %2991 = vmatmul.f32.gmra.mxu0 %v2108
        %v2992 = vpop.f32.mrf.mxu0
        %v2993 = vadd.f32 %v2880, %v2992
        %2994 = vmatmul.f32.gmra.mxu0 %v2110
        %v2995 = vpop.f32.mrf.mxu0
        %v2996 = vadd.f32 %v2883, %v2995
        %2997 = vmatmul.f32.gmra.mxu0 %v2111
        %v2998 = vpop.f32.mrf.mxu0
        %v2999 = vadd.f32 %v2886, %v2998
        %3000 = vmatmul.f32.gmra.mxu0 %v2113
        %v3001 = vpop.f32.mrf.mxu0
        %v3002 = vadd.f32 %v2889, %v3001
        %3003 = vmatmul.f32.gmra.mxu0 %v2114
        %v3004 = vpop.f32.mrf.mxu0
        %v3005 = vadd.f32 %v2892, %v3004
        %3006 = vmatmul.f32.gmra.mxu0 %v2116
        %v3007 = vpop.f32.mrf.mxu0
        %v3008 = vadd.f32 %v2895, %v3007
        %3009 = vmatmul.f32.gmra.mxu0 %v2117
        %v3010 = vpop.f32.mrf.mxu0
        %v3011 = vadd.f32 %v2898, %v3010
        %3012 = vmatmul.f32.gmra.mxu0 %v2119
        %v3013 = vpop.f32.mrf.mxu0
        %v3014 = vadd.f32 %v2901, %v3013
        %3015 = vmatmul.f32.gmra.mxu0 %v2120
        %v3016 = vpop.f32.mrf.mxu0
        %v3017 = vadd.f32 %v2904, %v3016
        %3018 = vmatmul.f32.gmra.mxu0 %v2122
        %v3019 = vpop.f32.mrf.mxu0
        %v3020 = vadd.f32 %v2907, %v3019
        %3021 = vmatmul.f32.gmra.mxu0 %v2123
        %v3022 = vpop.f32.mrf.mxu0
        %v3023 = vadd.f32 %v2910, %v3022
        %3024 = vmatmul.f32.gmra.mxu0 %v2125
        %v3025 = vpop.f32.mrf.mxu0
        %v3026 = vadd.f32 %v2913, %v3025
        %3027 = vmatmul.f32.gmra.mxu0 %v2126
        %v3028 = vpop.f32.mrf.mxu0
        %v3029 = vadd.f32 %v2916, %v3028
        %3030 = vmatmul.f32.gmra.mxu0 %v2128
        %v3031 = vpop.f32.mrf.mxu0
        %v3032 = vadd.f32 %v2919, %v3031
        %3033 = vmatmul.f32.gmra.mxu0 %v2129
        %v3034 = vpop.f32.mrf.mxu0
        %v3035 = vadd.f32 %v2922, %v3034
        %3036 = vmatmul.f32.gmra.mxu0 %v2131
        %v3037 = vpop.f32.mrf.mxu0
        %v3038 = vadd.f32 %v2925, %v3037
        %3039 = vmatmul.f32.gmra.mxu0 %v2132
        %v3040 = vpop.f32.mrf.mxu0
        %v3041 = vadd.f32 %v2928, %v3040
        %3042 = vdwg.mxu0
        %3043 = vmatpush.msra.mxu0 %v2522
        %3044 = vmatpush.msra.mxu0 %v2521
        %3045 = vmatpush.msra.mxu0 %v2520
        %3046 = vmatpush.msra.mxu0 %v2519
        %3047 = vmatpush.msra.mxu0 %v2518
        %3048 = vmatpush.msra.mxu0 %v2517
        %3049 = vmatpush.msra.mxu0 %v2516
        %3050 = vmatpush.msra.mxu0 %v2515
        %3051 = vmatpush.msra.mxu0 %v2514
        %3052 = vmatpush.msra.mxu0 %v2513
        %3053 = vmatpush.msra.mxu0 %v2512
        %3054 = vmatpush.msra.mxu0 %v2511
        %3055 = vmatpush.msra.mxu0 %v2510
        %3056 = vmatpush.msra.mxu0 %v2509
        %3057 = vmatpush.msra.mxu0 %v2508
        %3058 = vmatpush.msra.mxu0 %v2507
        %3059 = vmatmul.f32.gmra.mxu0 %v2192
        %v3060 = vpop.f32.mrf.mxu0
        %v3061 = vadd.f32 %v2948, %v3060
        %3062 = vmatmul.f32.gmra.mxu0 %v2194
        %v3063 = vpop.f32.mrf.mxu0
        %v3064 = vadd.f32 %v2951, %v3063
        %3065 = vmatmul.f32.gmra.mxu0 %v2197
        %v3066 = vpop.f32.mrf.mxu0
        %v3067 = vadd.f32 %v2954, %v3066
        %3068 = vmatmul.f32.gmra.mxu0 %v2199
        %v3069 = vpop.f32.mrf.mxu0
        %v3070 = vadd.f32 %v2957, %v3069
        %3071 = vmatmul.f32.gmra.mxu0 %v2202
        %v3072 = vpop.f32.mrf.mxu0
        %v3073 = vadd.f32 %v2960, %v3072
        %3074 = vmatmul.f32.gmra.mxu0 %v2204
        %v3075 = vpop.f32.mrf.mxu0
        %v3076 = vadd.f32 %v2963, %v3075
        %3077 = vmatmul.f32.gmra.mxu0 %v2207
        %v3078 = vpop.f32.mrf.mxu0
        %v3079 = vadd.f32 %v2966, %v3078
        %3080 = vmatmul.f32.gmra.mxu0 %v2209
        %v3081 = vpop.f32.mrf.mxu0
        %v3082 = vadd.f32 %v2969, %v3081
        %3083 = vmatmul.f32.gmra.mxu0 %v2212
        %v3084 = vpop.f32.mrf.mxu0
        %v3085 = vadd.f32 %v2972, %v3084
        %3086 = vmatmul.f32.gmra.mxu0 %v2214
        %v3087 = vpop.f32.mrf.mxu0
        %v3088 = vadd.f32 %v2975, %v3087
        %3089 = vmatmul.f32.gmra.mxu0 %v2217
        %v3090 = vpop.f32.mrf.mxu0
        %v3091 = vadd.f32 %v2978, %v3090
        %3092 = vmatmul.f32.gmra.mxu0 %v2219
        %v3093 = vpop.f32.mrf.mxu0
        %v3094 = vadd.f32 %v2981, %v3093
        %3095 = vmatmul.f32.gmra.mxu0 %v2222
        %v3096 = vpop.f32.mrf.mxu0
        %v3097 = vadd.f32 %v2984, %v3096
        %3098 = vmatmul.f32.gmra.mxu0 %v2224
        %v3099 = vpop.f32.mrf.mxu0
        %v3100 = vadd.f32 %v2987, %v3099
        %3101 = vmatmul.f32.gmra.mxu0 %v2227
        %v3102 = vpop.f32.mrf.mxu0
        %v3103 = vadd.f32 %v2990, %v3102
        %3104 = vmatmul.f32.gmra.mxu0 %v2229
        %v3105 = vpop.f32.mrf.mxu0
        %v3106 = vadd.f32 %v2993, %v3105
        %3107 = vmatmul.f32.gmra.mxu0 %v2232
        %v3108 = vpop.f32.mrf.mxu0
        %v3109 = vadd.f32 %v2996, %v3108
        %3110 = vmatmul.f32.gmra.mxu0 %v2234
        %v3111 = vpop.f32.mrf.mxu0
        %v3112 = vadd.f32 %v2999, %v3111
        %3113 = vmatmul.f32.gmra.mxu0 %v2237
        %v3114 = vpop.f32.mrf.mxu0
        %v3115 = vadd.f32 %v3002, %v3114
        %3116 = vmatmul.f32.gmra.mxu0 %v2239
        %v3117 = vpop.f32.mrf.mxu0
        %v3118 = vadd.f32 %v3005, %v3117
        %3119 = vmatmul.f32.gmra.mxu0 %v2242
        %v3120 = vpop.f32.mrf.mxu0
        %v3121 = vadd.f32 %v3008, %v3120
        %3122 = vmatmul.f32.gmra.mxu0 %v2244
        %v3123 = vpop.f32.mrf.mxu0
        %v3124 = vadd.f32 %v3011, %v3123
        %3125 = vmatmul.f32.gmra.mxu0 %v2247
        %v3126 = vpop.f32.mrf.mxu0
        %v3127 = vadd.f32 %v3014, %v3126
        %3128 = vmatmul.f32.gmra.mxu0 %v2249
        %v3129 = vpop.f32.mrf.mxu0
        %v3130 = vadd.f32 %v3017, %v3129
        %3131 = vmatmul.f32.gmra.mxu0 %v2252
        %v3132 = vpop.f32.mrf.mxu0
        %v3133 = vadd.f32 %v3020, %v3132
        %3134 = vmatmul.f32.gmra.mxu0 %v2254
        %v3135 = vpop.f32.mrf.mxu0
        %v3136 = vadd.f32 %v3023, %v3135
        %3137 = vmatmul.f32.gmra.mxu0 %v2257
        %v3138 = vpop.f32.mrf.mxu0
        %v3139 = vadd.f32 %v3026, %v3138
        %3140 = vmatmul.f32.gmra.mxu0 %v2259
        %v3141 = vpop.f32.mrf.mxu0
        %v3142 = vadd.f32 %v3029, %v3141
        %3143 = vmatmul.f32.gmra.mxu0 %v2262
        %v3144 = vpop.f32.mrf.mxu0
        %v3145 = vadd.f32 %v3032, %v3144
        %3146 = vmatmul.f32.gmra.mxu0 %v2264
        %v3147 = vpop.f32.mrf.mxu0
        %v3148 = vadd.f32 %v3035, %v3147
        %3149 = vmatmul.f32.gmra.mxu0 %v2414
        %v3150 = vpop.f32.mrf.mxu0
        %v3151 = vadd.f32 %v3038, %v3150
        %3152 = vmatmul.f32.gmra.mxu0 %v2416
        %v3153 = vpop.f32.mrf.mxu0
        %v3154 = vadd.f32 %v3041, %v3153
        %3155 = vdwg.mxu0
        %3156 = vmatpush.msra.mxu0 %v2538
        %3157 = vmatpush.msra.mxu0 %v2537
        %3158 = vmatpush.msra.mxu0 %v2536
        %3159 = vmatpush.msra.mxu0 %v2535
        %3160 = vmatpush.msra.mxu0 %v2534
        %3161 = vmatpush.msra.mxu0 %v2533
        %3162 = vmatpush.msra.mxu0 %v2532
        %3163 = vmatpush.msra.mxu0 %v2531
        %3164 = vmatpush.msra.mxu0 %v2530
        %3165 = vmatpush.msra.mxu0 %v2529
        %3166 = vmatpush.msra.mxu0 %v2528
        %3167 = vmatpush.msra.mxu0 %v2527
        %3168 = vmatpush.msra.mxu0 %v2526
        %3169 = vmatpush.msra.mxu0 %v2525
        %3170 = vmatpush.msra.mxu0 %v2524
        %3171 = vmatpush.msra.mxu0 %v2523
        %3172 = vmatmul.f32.gmra.mxu0 %v2304
        %v3173 = vpop.f32.mrf.mxu0
        %v3174 = vadd.f32 %v3061, %v3173
        %3175 = vmatmul.f32.gmra.mxu0 %v2306
        %v3176 = vpop.f32.mrf.mxu0
        %v3177 = vadd.f32 %v3064, %v3176
        %3178 = vmatmul.f32.gmra.mxu0 %v2309
        %v3179 = vpop.f32.mrf.mxu0
        %v3180 = vadd.f32 %v3067, %v3179
        %3181 = vmatmul.f32.gmra.mxu0 %v2311
        %v3182 = vpop.f32.mrf.mxu0
        %v3183 = vadd.f32 %v3070, %v3182
        %3184 = vmatmul.f32.gmra.mxu0 %v2314
        %v3185 = vpop.f32.mrf.mxu0
        %v3186 = vadd.f32 %v3073, %v3185
        %3187 = vmatmul.f32.gmra.mxu0 %v2316
        %v3188 = vpop.f32.mrf.mxu0
        %v3189 = vadd.f32 %v3076, %v3188
        %3190 = vmatmul.f32.gmra.mxu0 %v2319
        %v3191 = vpop.f32.mrf.mxu0
        %v3192 = vadd.f32 %v3079, %v3191
        %3193 = vmatmul.f32.gmra.mxu0 %v2321
        %v3194 = vpop.f32.mrf.mxu0
        %v3195 = vadd.f32 %v3082, %v3194
        %3196 = vmatmul.f32.gmra.mxu0 %v2324
        %v3197 = vpop.f32.mrf.mxu0
        %v3198 = vadd.f32 %v3085, %v3197
        %3199 = vmatmul.f32.gmra.mxu0 %v2326
        %v3200 = vpop.f32.mrf.mxu0
        %v3201 = vadd.f32 %v3088, %v3200
        %3202 = vmatmul.f32.gmra.mxu0 %v2329
        %v3203 = vpop.f32.mrf.mxu0
        %v3204 = vadd.f32 %v3091, %v3203
        %3205 = vmatmul.f32.gmra.mxu0 %v2331
        %v3206 = vpop.f32.mrf.mxu0
        %v3207 = vadd.f32 %v3094, %v3206
        %3208 = vmatmul.f32.gmra.mxu0 %v2334
        %v3209 = vpop.f32.mrf.mxu0
        %v3210 = vadd.f32 %v3097, %v3209
        %3211 = vmatmul.f32.gmra.mxu0 %v2336
        %v3212 = vpop.f32.mrf.mxu0
        %v3213 = vadd.f32 %v3100, %v3212
        %3214 = vmatmul.f32.gmra.mxu0 %v2339
        %v3215 = vpop.f32.mrf.mxu0
        %v3216 = vadd.f32 %v3103, %v3215
        %3217 = vmatmul.f32.gmra.mxu0 %v2341
        %v3218 = vpop.f32.mrf.mxu0
        %v3219 = vadd.f32 %v3106, %v3218
        %3220 = vmatmul.f32.gmra.mxu0 %v2344
        %v3221 = vpop.f32.mrf.mxu0
        %v3222 = vadd.f32 %v3109, %v3221
        %3223 = vmatmul.f32.gmra.mxu0 %v2346
        %v3224 = vpop.f32.mrf.mxu0
        %v3225 = vadd.f32 %v3112, %v3224
        %3226 = vmatmul.f32.gmra.mxu0 %v2349
        %v3227 = vpop.f32.mrf.mxu0
        %v3228 = vadd.f32 %v3115, %v3227
        %3229 = vmatmul.f32.gmra.mxu0 %v2351
        %v3230 = vpop.f32.mrf.mxu0
        %v3231 = vadd.f32 %v3118, %v3230
        %3232 = vmatmul.f32.gmra.mxu0 %v2354
        %v3233 = vpop.f32.mrf.mxu0
        %v3234 = vadd.f32 %v3121, %v3233
        %3235 = vmatmul.f32.gmra.mxu0 %v2356
        %v3236 = vpop.f32.mrf.mxu0
        %v3237 = vadd.f32 %v3124, %v3236
        %3238 = vmatmul.f32.gmra.mxu0 %v2359
        %v3239 = vpop.f32.mrf.mxu0
        %v3240 = vadd.f32 %v3127, %v3239
        %3241 = vmatmul.f32.gmra.mxu0 %v2361
        %v3242 = vpop.f32.mrf.mxu0
        %v3243 = vadd.f32 %v3130, %v3242
        %3244 = vmatmul.f32.gmra.mxu0 %v2364
        %v3245 = vpop.f32.mrf.mxu0
        %v3246 = vadd.f32 %v3133, %v3245
        %3247 = vmatmul.f32.gmra.mxu0 %v2366
        %v3248 = vpop.f32.mrf.mxu0
        %v3249 = vadd.f32 %v3136, %v3248
        %3250 = vmatmul.f32.gmra.mxu0 %v2369
        %v3251 = vpop.f32.mrf.mxu0
        %v3252 = vadd.f32 %v3139, %v3251
        %3253 = vmatmul.f32.gmra.mxu0 %v2371
        %v3254 = vpop.f32.mrf.mxu0
        %v3255 = vadd.f32 %v3142, %v3254
        %3256 = vmatmul.f32.gmra.mxu0 %v2374
        %v3257 = vpop.f32.mrf.mxu0
        %v3258 = vadd.f32 %v3145, %v3257
        %3259 = vmatmul.f32.gmra.mxu0 %v2376
        %v3260 = vpop.f32.mrf.mxu0
        %v3261 = vadd.f32 %v3148, %v3260
        %3262 = vmatmul.f32.gmra.mxu0 %v2421
        %v3263 = vpop.f32.mrf.mxu0
        %v3264 = vadd.f32 %v3151, %v3263
        %3265 = vmatmul.f32.gmra.mxu0 %v2423
        %v3266 = vpop.f32.mrf.mxu0
        %v3267 = vadd.f32 %v3154, %v3266
        %3268 = vdwg.mxu0
        %3269 = vmatpush.msra.mxu0 %v2554
        %3270 = vmatpush.msra.mxu0 %v2553
        %3271 = vmatpush.msra.mxu0 %v2552
        %3272 = vmatpush.msra.mxu0 %v2551
        %3273 = vmatpush.msra.mxu0 %v2550
        %3274 = vmatpush.msra.mxu0 %v2549
        %3275 = vmatpush.msra.mxu0 %v2548
        %3276 = vmatpush.msra.mxu0 %v2547
        %3277 = vmatpush.msra.mxu0 %v2546
        %3278 = vmatpush.msra.mxu0 %v2545
        %3279 = vmatpush.msra.mxu0 %v2544
        %3280 = vmatpush.msra.mxu0 %v2543
        %3281 = vmatpush.msra.mxu0 %v2542
        %3282 = vmatpush.msra.mxu0 %v2541
        %3283 = vmatpush.msra.mxu0 %v2540
        %3284 = vmatpush.msra.mxu0 %v2539
        %3285 = vmatmul.f32.gmra.mxu0 %v2089
        %v3286 = vpop.f32.mrf.mxu0
        %v3287 = vadd.f32 %v3174, %v3286
        %3288 = vmatmul.f32.gmra.mxu0 %v2090
        %v3289 = vpop.f32.mrf.mxu0
        %v3290 = vadd.f32 %v3177, %v3289
        %3291 = vmatmul.f32.gmra.mxu0 %v2092
        %v3292 = vpop.f32.mrf.mxu0
        %v3293 = vadd.f32 %v3180, %v3292
        %3294 = vmatmul.f32.gmra.mxu0 %v2093
        %v3295 = vpop.f32.mrf.mxu0
        %v3296 = vadd.f32 %v3183, %v3295
        %3297 = vmatmul.f32.gmra.mxu0 %v2095
        %v3298 = vpop.f32.mrf.mxu0
        %v3299 = vadd.f32 %v3186, %v3298
        %3300 = vmatmul.f32.gmra.mxu0 %v2096
        %v3301 = vpop.f32.mrf.mxu0
        %v3302 = vadd.f32 %v3189, %v3301
        %3303 = vmatmul.f32.gmra.mxu0 %v2098
        %v3304 = vpop.f32.mrf.mxu0
        %v3305 = vadd.f32 %v3192, %v3304
        %3306 = vmatmul.f32.gmra.mxu0 %v2099
        %v3307 = vpop.f32.mrf.mxu0
        %v3308 = vadd.f32 %v3195, %v3307
        %3309 = vmatmul.f32.gmra.mxu0 %v2101
        %v3310 = vpop.f32.mrf.mxu0
        %v3311 = vadd.f32 %v3198, %v3310
        %3312 = vmatmul.f32.gmra.mxu0 %v2102
        %v3313 = vpop.f32.mrf.mxu0
        %v3314 = vadd.f32 %v3201, %v3313
        %3315 = vmatmul.f32.gmra.mxu0 %v2104
        %v3316 = vpop.f32.mrf.mxu0
        %v3317 = vadd.f32 %v3204, %v3316
        %3318 = vmatmul.f32.gmra.mxu0 %v2105
        %v3319 = vpop.f32.mrf.mxu0
        %v3320 = vadd.f32 %v3207, %v3319
        %3321 = vmatmul.f32.gmra.mxu0 %v2107
        %v3322 = vpop.f32.mrf.mxu0
        %v3323 = vadd.f32 %v3210, %v3322
        %3324 = vmatmul.f32.gmra.mxu0 %v2108
        %v3325 = vpop.f32.mrf.mxu0
        %v3326 = vadd.f32 %v3213, %v3325
        %3327 = vmatmul.f32.gmra.mxu0 %v2110
        %v3328 = vpop.f32.mrf.mxu0
        %v3329 = vadd.f32 %v3216, %v3328
        %3330 = vmatmul.f32.gmra.mxu0 %v2111
        %v3331 = vpop.f32.mrf.mxu0
        %v3332 = vadd.f32 %v3219, %v3331
        %3333 = vmatmul.f32.gmra.mxu0 %v2113
        %v3334 = vpop.f32.mrf.mxu0
        %v3335 = vadd.f32 %v3222, %v3334
        %3336 = vmatmul.f32.gmra.mxu0 %v2114
        %v3337 = vpop.f32.mrf.mxu0
        %v3338 = vadd.f32 %v3225, %v3337
        %3339 = vmatmul.f32.gmra.mxu0 %v2116
        %v3340 = vpop.f32.mrf.mxu0
        %v3341 = vadd.f32 %v3228, %v3340
        %3342 = vmatmul.f32.gmra.mxu0 %v2117
        %v3343 = vpop.f32.mrf.mxu0
        %v3344 = vadd.f32 %v3231, %v3343
        %3345 = vmatmul.f32.gmra.mxu0 %v2119
        %v3346 = vpop.f32.mrf.mxu0
        %v3347 = vadd.f32 %v3234, %v3346
        %3348 = vmatmul.f32.gmra.mxu0 %v2120
        %v3349 = vpop.f32.mrf.mxu0
        %v3350 = vadd.f32 %v3237, %v3349
        %3351 = vmatmul.f32.gmra.mxu0 %v2122
        %v3352 = vpop.f32.mrf.mxu0
        %v3353 = vadd.f32 %v3240, %v3352
        %3354 = vmatmul.f32.gmra.mxu0 %v2123
        %v3355 = vpop.f32.mrf.mxu0
        %v3356 = vadd.f32 %v3243, %v3355
        %3357 = vmatmul.f32.gmra.mxu0 %v2125
        %v3358 = vpop.f32.mrf.mxu0
        %v3359 = vadd.f32 %v3246, %v3358
        %3360 = vmatmul.f32.gmra.mxu0 %v2126
        %v3361 = vpop.f32.mrf.mxu0
        %v3362 = vadd.f32 %v3249, %v3361
        %3363 = vmatmul.f32.gmra.mxu0 %v2128
        %v3364 = vpop.f32.mrf.mxu0
        %v3365 = vadd.f32 %v3252, %v3364
        %3366 = vmatmul.f32.gmra.mxu0 %v2129
        %v3367 = vpop.f32.mrf.mxu0
        %v3368 = vadd.f32 %v3255, %v3367
        %3369 = vmatmul.f32.gmra.mxu0 %v2131
        %v3370 = vpop.f32.mrf.mxu0
        %v3371 = vadd.f32 %v3258, %v3370
        %3372 = vmatmul.f32.gmra.mxu0 %v2132
        %v3373 = vpop.f32.mrf.mxu0
        %v3374 = vadd.f32 %v3261, %v3373
        %3375 = vmatmul.f32.gmra.mxu0 %v2134
        %v3376 = vpop.f32.mrf.mxu0
        %v3377 = vadd.f32 %v3264, %v3376
        %3378 = vmatmul.f32.gmra.mxu0 %v2135
        %v3379 = vpop.f32.mrf.mxu0
        %v3380 = vadd.f32 %v3267, %v3379
        %3381 = vdwg.mxu0
        %3382 = vmatpush.msra.mxu0 %v2570
        %3383 = vmatpush.msra.mxu0 %v2569
        %3384 = vmatpush.msra.mxu0 %v2568
        %3385 = vmatpush.msra.mxu0 %v2567
        %3386 = vmatpush.msra.mxu0 %v2566
        %3387 = vmatpush.msra.mxu0 %v2565
        %3388 = vmatpush.msra.mxu0 %v2564
        %3389 = vmatpush.msra.mxu0 %v2563
        %3390 = vmatpush.msra.mxu0 %v2562
        %3391 = vmatpush.msra.mxu0 %v2561
        %3392 = vmatpush.msra.mxu0 %v2560
        %3393 = vmatpush.msra.mxu0 %v2559
        %3394 = vmatpush.msra.mxu0 %v2558
        %3395 = vmatpush.msra.mxu0 %v2557
        %3396 = vmatpush.msra.mxu0 %v2556
        %3397 = vmatpush.msra.mxu0 %v2555
        %3398 = vmatmul.f32.gmra.mxu0 %v2197
        %v3399 = vpop.f32.mrf.mxu0
        %v3400 = vadd.f32 %v3287, %v3399
        %3401 = vmatmul.f32.gmra.mxu0 %v2199
        %v3402 = vpop.f32.mrf.mxu0
        %v3403 = vadd.f32 %v3290, %v3402
        %3404 = vmatmul.f32.gmra.mxu0 %v2202
        %v3405 = vpop.f32.mrf.mxu0
        %v3406 = vadd.f32 %v3293, %v3405
        %3407 = vmatmul.f32.gmra.mxu0 %v2204
        %v3408 = vpop.f32.mrf.mxu0
        %v3409 = vadd.f32 %v3296, %v3408
        %3410 = vmatmul.f32.gmra.mxu0 %v2207
        %v3411 = vpop.f32.mrf.mxu0
        %v3412 = vadd.f32 %v3299, %v3411
        %3413 = vmatmul.f32.gmra.mxu0 %v2209
        %v3414 = vpop.f32.mrf.mxu0
        %v3415 = vadd.f32 %v3302, %v3414
        %3416 = vmatmul.f32.gmra.mxu0 %v2212
        %v3417 = vpop.f32.mrf.mxu0
        %v3418 = vadd.f32 %v3305, %v3417
        %3419 = vmatmul.f32.gmra.mxu0 %v2214
        %v3420 = vpop.f32.mrf.mxu0
        %v3421 = vadd.f32 %v3308, %v3420
        %3422 = vmatmul.f32.gmra.mxu0 %v2217
        %v3423 = vpop.f32.mrf.mxu0
        %v3424 = vadd.f32 %v3311, %v3423
        %3425 = vmatmul.f32.gmra.mxu0 %v2219
        %v3426 = vpop.f32.mrf.mxu0
        %v3427 = vadd.f32 %v3314, %v3426
        %3428 = vmatmul.f32.gmra.mxu0 %v2222
        %v3429 = vpop.f32.mrf.mxu0
        %v3430 = vadd.f32 %v3317, %v3429
        %3431 = vmatmul.f32.gmra.mxu0 %v2224
        %v3432 = vpop.f32.mrf.mxu0
        %v3433 = vadd.f32 %v3320, %v3432
        %3434 = vmatmul.f32.gmra.mxu0 %v2227
        %v3435 = vpop.f32.mrf.mxu0
        %v3436 = vadd.f32 %v3323, %v3435
        %3437 = vmatmul.f32.gmra.mxu0 %v2229
        %v3438 = vpop.f32.mrf.mxu0
        %v3439 = vadd.f32 %v3326, %v3438
        %3440 = vmatmul.f32.gmra.mxu0 %v2232
        %v3441 = vpop.f32.mrf.mxu0
        %v3442 = vadd.f32 %v3329, %v3441
        %3443 = vmatmul.f32.gmra.mxu0 %v2234
        %v3444 = vpop.f32.mrf.mxu0
        %v3445 = vadd.f32 %v3332, %v3444
        %3446 = vmatmul.f32.gmra.mxu0 %v2237
        %v3447 = vpop.f32.mrf.mxu0
        %v3448 = vadd.f32 %v3335, %v3447
        %3449 = vmatmul.f32.gmra.mxu0 %v2239
        %v3450 = vpop.f32.mrf.mxu0
        %v3451 = vadd.f32 %v3338, %v3450
        %3452 = vmatmul.f32.gmra.mxu0 %v2242
        %v3453 = vpop.f32.mrf.mxu0
        %v3454 = vadd.f32 %v3341, %v3453
        %3455 = vmatmul.f32.gmra.mxu0 %v2244
        %v3456 = vpop.f32.mrf.mxu0
        %v3457 = vadd.f32 %v3344, %v3456
        %3458 = vmatmul.f32.gmra.mxu0 %v2247
        %v3459 = vpop.f32.mrf.mxu0
        %v3460 = vadd.f32 %v3347, %v3459
        %3461 = vmatmul.f32.gmra.mxu0 %v2249
        %v3462 = vpop.f32.mrf.mxu0
        %v3463 = vadd.f32 %v3350, %v3462
        %3464 = vmatmul.f32.gmra.mxu0 %v2252
        %v3465 = vpop.f32.mrf.mxu0
        %v3466 = vadd.f32 %v3353, %v3465
        %3467 = vmatmul.f32.gmra.mxu0 %v2254
        %v3468 = vpop.f32.mrf.mxu0
        %v3469 = vadd.f32 %v3356, %v3468
        %3470 = vmatmul.f32.gmra.mxu0 %v2257
        %v3471 = vpop.f32.mrf.mxu0
        %v3472 = vadd.f32 %v3359, %v3471
        %3473 = vmatmul.f32.gmra.mxu0 %v2259
        %v3474 = vpop.f32.mrf.mxu0
        %v3475 = vadd.f32 %v3362, %v3474
        %3476 = vmatmul.f32.gmra.mxu0 %v2262
        %v3477 = vpop.f32.mrf.mxu0
        %v3478 = vadd.f32 %v3365, %v3477
        %3479 = vmatmul.f32.gmra.mxu0 %v2264
        %v3480 = vpop.f32.mrf.mxu0
        %v3481 = vadd.f32 %v3368, %v3480
        %3482 = vmatmul.f32.gmra.mxu0 %v2414
        %v3483 = vpop.f32.mrf.mxu0
        %v3484 = vadd.f32 %v3371, %v3483
        %3485 = vmatmul.f32.gmra.mxu0 %v2416
        %v3486 = vpop.f32.mrf.mxu0
        %v3487 = vadd.f32 %v3374, %v3486
        %3488 = vmatmul.f32.gmra.mxu0 %v2431
        %v3489 = vpop.f32.mrf.mxu0
        %v3490 = vadd.f32 %v3377, %v3489
        %3491 = vmatmul.f32.gmra.mxu0 %v2433
        %v3492 = vpop.f32.mrf.mxu0
        %v3493 = vadd.f32 %v3380, %v3492
        %3494 = vdwg.mxu0
        %3495 = vmatpush.msra.mxu0 %v2586
        %3496 = vmatpush.msra.mxu0 %v2585
        %3497 = vmatpush.msra.mxu0 %v2584
        %3498 = vmatpush.msra.mxu0 %v2583
        %3499 = vmatpush.msra.mxu0 %v2582
        %3500 = vmatpush.msra.mxu0 %v2581
        %3501 = vmatpush.msra.mxu0 %v2580
        %3502 = vmatpush.msra.mxu0 %v2579
        %3503 = vmatpush.msra.mxu0 %v2578
        %3504 = vmatpush.msra.mxu0 %v2577
        %3505 = vmatpush.msra.mxu0 %v2576
        %3506 = vmatpush.msra.mxu0 %v2575
        %3507 = vmatpush.msra.mxu0 %v2574
        %3508 = vmatpush.msra.mxu0 %v2573
        %3509 = vmatpush.msra.mxu0 %v2572
        %3510 = vmatpush.msra.mxu0 %v2571
        %3511 = vmatmul.f32.gmra.mxu0 %v2309
        %v3512 = vpop.f32.mrf.mxu0
        %v3513 = vadd.f32 %v3400, %v3512
        %3514 = vmatmul.f32.gmra.mxu0 %v2311
        %v3515 = vpop.f32.mrf.mxu0
        %v3516 = vadd.f32 %v3403, %v3515
        %3517 = vmatmul.f32.gmra.mxu0 %v2314
        %v3518 = vpop.f32.mrf.mxu0
        %v3519 = vadd.f32 %v3406, %v3518
        %3520 = vmatmul.f32.gmra.mxu0 %v2316
        %v3521 = vpop.f32.mrf.mxu0
        %v3522 = vadd.f32 %v3409, %v3521
        %3523 = vmatmul.f32.gmra.mxu0 %v2319
        %v3524 = vpop.f32.mrf.mxu0
        %v3525 = vadd.f32 %v3412, %v3524
        %3526 = vmatmul.f32.gmra.mxu0 %v2321
        %v3527 = vpop.f32.mrf.mxu0
        %v3528 = vadd.f32 %v3415, %v3527
        %3529 = vmatmul.f32.gmra.mxu0 %v2324
        %v3530 = vpop.f32.mrf.mxu0
        %v3531 = vadd.f32 %v3418, %v3530
        %3532 = vmatmul.f32.gmra.mxu0 %v2326
        %v3533 = vpop.f32.mrf.mxu0
        %v3534 = vadd.f32 %v3421, %v3533
        %3535 = vmatmul.f32.gmra.mxu0 %v2329
        %v3536 = vpop.f32.mrf.mxu0
        %v3537 = vadd.f32 %v3424, %v3536
        %3538 = vmatmul.f32.gmra.mxu0 %v2331
        %v3539 = vpop.f32.mrf.mxu0
        %v3540 = vadd.f32 %v3427, %v3539
        %3541 = vmatmul.f32.gmra.mxu0 %v2334
        %v3542 = vpop.f32.mrf.mxu0
        %v3543 = vadd.f32 %v3430, %v3542
        %3544 = vmatmul.f32.gmra.mxu0 %v2336
        %v3545 = vpop.f32.mrf.mxu0
        %v3546 = vadd.f32 %v3433, %v3545
        %3547 = vmatmul.f32.gmra.mxu0 %v2339
        %v3548 = vpop.f32.mrf.mxu0
        %v3549 = vadd.f32 %v3436, %v3548
        %3550 = vmatmul.f32.gmra.mxu0 %v2341
        %v3551 = vpop.f32.mrf.mxu0
        %v3552 = vadd.f32 %v3439, %v3551
        %3553 = vmatmul.f32.gmra.mxu0 %v2344
        %v3554 = vpop.f32.mrf.mxu0
        %v3555 = vadd.f32 %v3442, %v3554
        %3556 = vmatmul.f32.gmra.mxu0 %v2346
        %v3557 = vpop.f32.mrf.mxu0
        %v3558 = vadd.f32 %v3445, %v3557
        %3559 = vmatmul.f32.gmra.mxu0 %v2349
        %v3560 = vpop.f32.mrf.mxu0
        %v3561 = vadd.f32 %v3448, %v3560
        %3562 = vmatmul.f32.gmra.mxu0 %v2351
        %v3563 = vpop.f32.mrf.mxu0
        %v3564 = vadd.f32 %v3451, %v3563
        %3565 = vmatmul.f32.gmra.mxu0 %v2354
        %v3566 = vpop.f32.mrf.mxu0
        %v3567 = vadd.f32 %v3454, %v3566
        %3568 = vmatmul.f32.gmra.mxu0 %v2356
        %v3569 = vpop.f32.mrf.mxu0
        %v3570 = vadd.f32 %v3457, %v3569
        %3571 = vmatmul.f32.gmra.mxu0 %v2359
        %v3572 = vpop.f32.mrf.mxu0
        %v3573 = vadd.f32 %v3460, %v3572
        %3574 = vmatmul.f32.gmra.mxu0 %v2361
        %v3575 = vpop.f32.mrf.mxu0
        %v3576 = vadd.f32 %v3463, %v3575
        %3577 = vmatmul.f32.gmra.mxu0 %v2364
        %v3578 = vpop.f32.mrf.mxu0
        %v3579 = vadd.f32 %v3466, %v3578
        %3580 = vmatmul.f32.gmra.mxu0 %v2366
        %v3581 = vpop.f32.mrf.mxu0
        %v3582 = vadd.f32 %v3469, %v3581
        %3583 = vmatmul.f32.gmra.mxu0 %v2369
        %v3584 = vpop.f32.mrf.mxu0
        %v3585 = vadd.f32 %v3472, %v3584
        %3586 = vmatmul.f32.gmra.mxu0 %v2371
        %v3587 = vpop.f32.mrf.mxu0
        %v3588 = vadd.f32 %v3475, %v3587
        %3589 = vmatmul.f32.gmra.mxu0 %v2374
        %v3590 = vpop.f32.mrf.mxu0
        %v3591 = vadd.f32 %v3478, %v3590
        %3592 = vmatmul.f32.gmra.mxu0 %v2376
        %v3593 = vpop.f32.mrf.mxu0
        %v3594 = vadd.f32 %v3481, %v3593
        %3595 = vmatmul.f32.gmra.mxu0 %v2421
        %v3596 = vpop.f32.mrf.mxu0
        %v3597 = vadd.f32 %v3484, %v3596
        %3598 = vmatmul.f32.gmra.mxu0 %v2423
        %v3599 = vpop.f32.mrf.mxu0
        %v3600 = vadd.f32 %v3487, %v3599
        %3601 = vmatmul.f32.gmra.mxu0 %v2438
        %v3602 = vpop.f32.mrf.mxu0
        %v3603 = vadd.f32 %v3490, %v3602
        %3604 = vmatmul.f32.gmra.mxu0 %v2440
        %v3605 = vpop.f32.mrf.mxu0
        %v3606 = vadd.f32 %v3493, %v3605
        %3607 = vdwg.mxu0
        %v3608 = vmul.f32 %v3513, 0.2
        %v3609 = vmul.f32 %v3516, 0.2
        %v3610 = vmul.f32 %v3519, 0.2
        %v3611 = vmul.f32 %v3522, 0.2
        %v3612 = vmul.f32 %v3525, 0.2
        %v3613 = vmul.f32 %v3528, 0.2
        %v3614 = vmul.f32 %v3531, 0.2
        %v3615 = vmul.f32 %v3534, 0.2
        %v3616 = vmul.f32 %v3537, 0.2
        %v3617 = vmul.f32 %v3540, 0.2
        %v3618 = vmul.f32 %v3543, 0.2
        %v3619 = vmul.f32 %v3546, 0.2
        %v3620 = vmul.f32 %v3549, 0.2
        %v3621 = vmul.f32 %v3552, 0.2
        %v3622 = vmul.f32 %v3555, 0.2
        %v3623 = vmul.f32 %v3558, 0.2
        %v3624 = vmul.f32 %v3561, 0.2
        %v3625 = vmul.f32 %v3564, 0.2
        %v3626 = vmul.f32 %v3567, 0.2
        %v3627 = vmul.f32 %v3570, 0.2
        %v3628 = vmul.f32 %v3573, 0.2
        %v3629 = vmul.f32 %v3576, 0.2
        %v3630 = vmul.f32 %v3579, 0.2
        %v3631 = vmul.f32 %v3582, 0.2
        %v3632 = vmul.f32 %v3585, 0.2
        %v3633 = vmul.f32 %v3588, 0.2
        %v3634 = vmul.f32 %v3591, 0.2
        %v3635 = vmul.f32 %v3594, 0.2
        %v3636 = vmul.f32 %v3597, 0.2
        %v3637 = vmul.f32 %v3600, 0.2
        %v3638 = vmul.f32 %v3603, 0.2
        %v3639 = vmul.f32 %v3606, 0.2
        %v3640 = vmax.f32 %v3513, %v3608
        %v3641 = vmax.f32 %v3516, %v3609
        %v3642 = vmax.f32 %v3519, %v3610
        %v3643 = vmax.f32 %v3522, %v3611
        %v3644 = vmax.f32 %v3525, %v3612
        %v3645 = vmax.f32 %v3528, %v3613
        %v3646 = vmax.f32 %v3531, %v3614
        %v3647 = vmax.f32 %v3534, %v3615
        %v3648 = vmax.f32 %v3537, %v3616
        %v3649 = vmax.f32 %v3540, %v3617
        %v3650 = vmax.f32 %v3543, %v3618
        %v3651 = vmax.f32 %v3546, %v3619
        %v3652 = vmax.f32 %v3549, %v3620
        %v3653 = vmax.f32 %v3552, %v3621
        %v3654 = vmax.f32 %v3555, %v3622
        %v3655 = vmax.f32 %v3558, %v3623
        %v3656 = vmax.f32 %v3561, %v3624
        %v3657 = vmax.f32 %v3564, %v3625
        %v3658 = vmax.f32 %v3567, %v3626
        %v3659 = vmax.f32 %v3570, %v3627
        %v3660 = vmax.f32 %v3573, %v3628
        %v3661 = vmax.f32 %v3576, %v3629
        %v3662 = vmax.f32 %v3579, %v3630
        %v3663 = vmax.f32 %v3582, %v3631
        %v3664 = vmax.f32 %v3585, %v3632
        %v3665 = vmax.f32 %v3588, %v3633
        %v3666 = vmax.f32 %v3591, %v3634
        %v3667 = vmax.f32 %v3594, %v3635
        %v3668 = vmax.f32 %v3597, %v3636
        %v3669 = vmax.f32 %v3600, %v3637
        %v3670 = vmax.f32 %v3603, %v3638
        %v3671 = vmax.f32 %v3606, %v3639
        %3672 = vst [vmem:[%s241] sm:$0xff] %v3640
        %3673 = vst [vmem:[%s241 + $0x8] sm:$0xff] %v3641
        %3674 = vst [vmem:[%s241 + $0x10] sm:$0xff] %v3642
        %3675 = vst [vmem:[%s241 + $0x18] sm:$0xff] %v3643
        %3676 = vst [vmem:[%s241 + $0x20] sm:$0xff] %v3644
        %3677 = vst [vmem:[%s241 + $0x28] sm:$0xff] %v3645
        %3678 = vst [vmem:[%s241 + $0x30] sm:$0xff] %v3646
        %3679 = vst [vmem:[%s241 + $0x38] sm:$0xff] %v3647
        %3680 = vst [vmem:[%s241 + $0x40] sm:$0xff] %v3648
        %3681 = vst [vmem:[%s241 + $0x48] sm:$0xff] %v3649
        %3682 = vst [vmem:[%s241 + $0x50] sm:$0xff] %v3650
        %3683 = vst [vmem:[%s241 + $0x58] sm:$0xff] %v3651
        %3684 = vst [vmem:[%s241 + $0x60] sm:$0xff] %v3652
        %3685 = vst [vmem:[%s241 + $0x68] sm:$0xff] %v3653
        %3686 = vst [vmem:[%s241 + $0x70] sm:$0xff] %v3654
        %3687 = vst [vmem:[%s241 + $0x78] sm:$0xff] %v3655
        %3688 = vst [vmem:[%s241 + $0x80] sm:$0xff] %v3656
        %3689 = vst [vmem:[%s241 + $0x88] sm:$0xff] %v3657
        %3690 = vst [vmem:[%s241 + $0x90] sm:$0xff] %v3658
        %3691 = vst [vmem:[%s241 + $0x98] sm:$0xff] %v3659
        %3692 = vst [vmem:[%s241 + $0xa0] sm:$0xff] %v3660
        %3693 = vst [vmem:[%s241 + $0xa8] sm:$0xff] %v3661
        %3694 = vst [vmem:[%s241 + $0xb0] sm:$0xff] %v3662
        %3695 = vst [vmem:[%s241 + $0xb8] sm:$0xff] %v3663
        %3696 = vst [vmem:[%s241 + $0xc0] sm:$0xff] %v3664
        %3697 = vst [vmem:[%s241 + $0xc8] sm:$0xff] %v3665
        %3698 = vst [vmem:[%s241 + $0xd0] sm:$0xff] %v3666
        %3699 = vst [vmem:[%s241 + $0xd8] sm:$0xff] %v3667
        %3700 = vst [vmem:[%s241 + $0xe0] sm:$0xff] %v3668
        %3701 = vst [vmem:[%s241 + $0xe8] sm:$0xff] %v3669
        %3702 = vst [vmem:[%s241 + $0xf0] sm:$0xff] %v3670
        %3703 = vst [vmem:[%s241 + $0xf8] sm:$0xff] %v3671
        %p3704 = scmp.lt.s32.totalorder %s17, 1
        %s3705 = scalar_select %p3704, %s17, 1
        %s3706 = smul.addr %s3705, 32
        %s3707 = smul.addr %s3706, 8
        %s3708 = scalar_lea.vmem %s5, %s3707
        // Predicated region
        $region45: #{unet_conv_block.1} parent=39 // pred_check
          %p3709 = pneg %p145
        $region46: #{unet_conv_block.1} parent=39 // pred_check_branch
          %3711 = sbr.rel (%p3709) target = $region48
        $region47: #{unet_conv_block.1} parent=39 // pred_region
          _
        $region48: #{unet_conv_block.1} parent=39 // pred_fallthru
          _
      $region40: #{unet_conv_block.1} parent=5 // pred_fallthru
        _
      %p3712 = scmp.le.s32.totalorder 2, %s12
      // Predicated region
      $region49: #{unet_conv_block.1} parent=5 // pred_check
        %p3713 = pneg %p3712
      $region50: #{unet_conv_block.1} parent=5 // pred_check_branch
        %3715 = sbr.rel (%p3713) target = $region52
      $region51: #{unet_conv_block.1} parent=5 // pred_region
        %s3716 = ssub.s32 %s12, 2
        // Predicated region
        $region53: #{unet_conv_block.1} parent=51 // pred_check
          %p3717 = pneg %p151
        $region54: #{unet_conv_block.1} parent=51 // pred_check_branch
          %3719 = sbr.rel (%p3717) target = $region56
        $region55: #{unet_conv_block.1} parent=51 // pred_region
          %p3720 = scmp.lt.s32.totalorder %s18, 1
          %s3721 = scalar_select %p3720, %s18, 1
          %s3722 = smul.addr %s3721, 32
          %s3723 = smul.addr %s3722, 8
          %s3724 = scalar_lea.vmem %s5, %s3723
        $region56: #{unet_conv_block.1} parent=51 // pred_fallthru
          _
      $region52: #{unet_conv_block.1} parent=5 // pred_fallthru
        _
    $region6: #{unet_conv_block.1} parent=1 // loop_footer
      %s16 = sadd.s32 1, %s12
    $region7: #{unet_conv_block.1} parent=1 // loop_footer_branch
      %11 = sbr.rel target = $region3
    $region8: #{unet_conv_block.1} parent=1 // loop_exit
      _
    %3725 = vsyncpa [#allocation4], 1
    %s3726 = scalar_lea.sflag [#allocation4], 1
    %3727 = vsyncpa %s3726, 1

</llo_original>
